<compile_context>
chip_gen: v7x
topology: tpu7x:2x2x1
jax: 0.10.0
libtpu: 0.0.40
codegen_flags: <defaults>
</compile_context>

<pallas_src>
import jax
import jax.numpy as jnp
from jax.experimental import pallas as pl
from jax.experimental.pallas import tpu as pltpu


def _vib_head_kernel(x_ref, w1_ref, b1_ref, w2_ref, b2_ref, eps_ref,
                     w3_ref, b3_ref,
                     feat_ref, out_ref, iden_ref, mu_ref, std_ref,
                     acc_ref):
    """Grid = (batch_tiles, k_tiles); the flattened 512*4*4 dim is the reduction."""
    kk = pl.program_id(1)

    @pl.when(kk == 0)
    def _init():
        acc_ref[...] = jnp.zeros_like(acc_ref)

    # One K-slice of Flatten + BN2 + Linear(8192 -> 512) + BN1.  Both BatchNorms
    # are folded into W1 / b1 host-side; W1 is stored bf16 to halve HBM traffic.
    acc_ref[...] += jnp.dot(x_ref[...].astype(w1_ref.dtype), w1_ref[...],
                            preferred_element_type=jnp.float32)        # (TB, 512)

    @pl.when(kk == pl.num_programs(1) - 1)
    def _finalize():
        kdim = mu_ref.shape[-1]
        ncls_pad = out_ref.shape[-1]

        # Folded Linear bias (includes BN2 shift and BN1 scale/shift).
        feat = acc_ref[...] + b1_ref[...]
        feat_ref[...] = feat.astype(feat_ref.dtype)

        # st_layer: Linear(512 -> 2k)
        statis = jnp.dot(feat, w2_ref[...],
                         preferred_element_type=jnp.float32) + b2_ref[...]
        mu = statis[:, :kdim]
        z = statis[:, kdim:] - 5.0
        # softplus(z) = max(z, 0) + log(1 + exp(-|z|))   (numerically stable)
        std = jnp.maximum(z, 0.0) + jnp.log(1.0 + jnp.exp(-jnp.abs(z)))
        mu_ref[...] = mu.astype(mu_ref.dtype)
        std_ref[...] = std.astype(std_ref.dtype)

        # Reparameterization + classifier + softmax (padded classes sit at -1e30).
        res = mu + std * eps_ref[...]
        logits = jnp.dot(res, w3_ref[...],
                         preferred_element_type=jnp.float32) + b3_ref[...]
        m = jnp.max(logits, axis=-1, keepdims=True)
        e = jnp.exp(logits - m)
        inv = pl.reciprocal(jnp.sum(e, axis=-1, keepdims=True), approx=True)
        out_ref[...] = (e * inv).astype(out_ref.dtype)

        # argmax over classes (first maximal index, like torch.max)
        col = jax.lax.broadcasted_iota(jnp.int32, logits.shape, 1)
        iden = jnp.min(jnp.where(logits >= m, col, ncls_pad), axis=-1, keepdims=True)
        iden_ref[...] = iden.astype(iden_ref.dtype)


def ir50_vib_head(fmap, params, eps, *, tb=None, tk=2048, w1_dtype=jnp.bfloat16):
    """IR50_vib head (eval mode).

    fmap: (bs, 512, 4, 4) backbone feature map.
    eps : (bs, k) reparameterization noise (torch draws it with .normal_()).
    Linear weights are supplied in (in_features, out_features) layout.
    Returns (feat, out, iden, mu, std) like the PyTorch module.

    tb: batch tile. Default min(bs, 128) streams W1 as few times as possible
        (once for bs <= 128) - optimal on single-TC chips (v5e/v6e).
        On v7x (2 TensorCores) pass tb = bs // 2 (or anything giving >= 2 batch
        tiles) so the "parallel" batch axis can shard across both cores.
    """
    bs, c, h, w = fmap.shape
    kflat = c * h * w
    d = params["w1"].shape[1]
    kdim = d // 2
    ncls = params["w3"].shape[1]
    assert params["w1"].shape == (kflat, d)
    assert params["w2"].shape == (d, 2 * kdim)
    assert params["w3"].shape == (kdim, ncls)
    assert eps.shape == (bs, kdim)

    if tb is None:
        tb = min(bs, 128)
    tb = min(tb, bs)
    bs_pad = ((bs + tb - 1) // tb) * tb          # pad batch to a tile multiple
    tk = min(tk, kflat)
    assert kflat % tk == 0

    bn_eps = 1e-5
    # Eval-mode BatchNorm2d / BatchNorm1d as scale/shift vectors
    # (flatten order is channel-major, matching torch's .view(bs, -1)).
    s2c = params["bn2_gamma"] / jnp.sqrt(params["bn2_var"] + bn_eps)
    t2c = params["bn2_beta"] - params["bn2_mean"] * s2c
    s2 = jnp.repeat(s2c, h * w)                                      # (kflat,)
    t2 = jnp.repeat(t2c, h * w)
    s1 = params["bn1_gamma"] / jnp.sqrt(params["bn1_var"] + bn_eps)  # (d,)
    t1 = params["bn1_beta"] - params["bn1_mean"] * s1

    # Fold BN2 (input side) and BN1 (output side) into the big Linear:
    #   feat = ((x*s2 + t2) @ W1 + b1) * s1 + t1
    #        = x @ (diag(s2) @ W1 @ diag(s1)) + ((t2 @ W1 + b1) * s1 + t1)
    w1f = (s2[:, None] * params["w1"].astype(jnp.float32) * s1[None, :]).astype(w1_dtype)
    b1f = ((t2 @ params["w1"] + params["b1"]) * s1 + t1).reshape(1, d).astype(jnp.float32)

    w2 = params["w2"].astype(jnp.float32)
    b2 = params["b2"].reshape(1, 2 * kdim).astype(jnp.float32)

    # Pad the classifier to a lane-dense multiple of 128 classes.
    ncls_pad = ((ncls + 127) // 128) * 128
    w3p = jnp.zeros((kdim, ncls_pad), jnp.float32).at[:, :ncls].set(
        params["w3"].astype(jnp.float32))
    b3p = jnp.full((1, ncls_pad), -1e30, jnp.float32).at[0, :ncls].set(
        params["b3"].astype(jnp.float32))

    x = fmap.reshape(bs, kflat).astype(jnp.float32)
    eps_in = eps.astype(jnp.float32)
    if bs_pad != bs:
        x = jnp.pad(x, ((0, bs_pad - bs), (0, 0)))
        eps_in = jnp.pad(eps_in, ((0, bs_pad - bs), (0, 0)))

    grid = (bs_pad // tb, kflat // tk)

    in_specs = [
        pl.BlockSpec((tb, tk), lambda i, k: (i, k)),          # x tile
        pl.BlockSpec((tk, d), lambda i, k: (k, 0)),           # W1 K-slice (streamed, bf16)
        pl.BlockSpec((1, d), lambda i, k: (0, 0)),            # folded bias
        pl.BlockSpec((d, 2 * kdim), lambda i, k: (0, 0)),     # W2 (resident)
        pl.BlockSpec((1, 2 * kdim), lambda i, k: (0, 0)),     # b2
        pl.BlockSpec((tb, kdim), lambda i, k: (i, 0)),        # eps tile
        pl.BlockSpec((kdim, ncls_pad), lambda i, k: (0, 0)),  # W3 padded (resident)
        pl.BlockSpec((1, ncls_pad), lambda i, k: (0, 0)),     # b3 padded
    ]
    out_specs = (
        pl.BlockSpec((tb, d), lambda i, k: (i, 0)),           # feat
        pl.BlockSpec((tb, ncls_pad), lambda i, k: (i, 0)),    # out (softmax, padded)
        pl.BlockSpec((tb, 1), lambda i, k: (i, 0)),           # iden
        pl.BlockSpec((tb, kdim), lambda i, k: (i, 0)),        # mu
        pl.BlockSpec((tb, kdim), lambda i, k: (i, 0)),        # std
    )
    out_shape = (
        jax.ShapeDtypeStruct((bs_pad, d), jnp.float32),
        jax.ShapeDtypeStruct((bs_pad, ncls_pad), jnp.float32),
        jax.ShapeDtypeStruct((bs_pad, 1), jnp.int32),
        jax.ShapeDtypeStruct((bs_pad, kdim), jnp.float32),
        jax.ShapeDtypeStruct((bs_pad, kdim), jnp.float32),
    )

    feat, out, iden, mu, std = pl.pallas_call(
        _vib_head_kernel,
        out_shape=out_shape,
        grid_spec=pltpu.PrefetchScalarGridSpec(
            num_scalar_prefetch=0,
            grid=grid,
            in_specs=in_specs,
            out_specs=out_specs,
            scratch_shapes=[pltpu.VMEM((tb, d), jnp.float32)],
        ),
        compiler_params=pltpu.CompilerParams(
            dimension_semantics=("parallel", "arbitrary"),
            vmem_limit_bytes=48 * 1024 * 1024),
    )(x, w1f, b1f, w2, b2, eps_in, w3p, b3p)

    # Strip class/batch padding.
    return (feat[:bs], out[:bs, :ncls], iden[:bs], mu[:bs], std[:bs])


if __name__ == "__main__":
    bs, c, h, w = 16, 512, 4, 4          # backbone output for a 64x64 input
    d = 512
    kdim = d // 2
    num_classes = 1000
    kflat = c * h * w

    key = jax.random.PRNGKey(0)
    ks = jax.random.split(key, 16)
    fmap = jax.random.normal(ks[0], (bs, c, h, w), jnp.float32)
    eps = jax.random.normal(ks[1], (bs, kdim), jnp.float32)   # reparam noise

    params = dict(
        bn2_gamma=1.0 + 0.1 * jax.random.normal(ks[2], (c,), jnp.float32),
        bn2_beta=0.1 * jax.random.normal(ks[3], (c,), jnp.float32),
        bn2_mean=0.1 * jax.random.normal(ks[4], (c,), jnp.float32),
        bn2_var=jax.random.uniform(ks[5], (c,), jnp.float32, 0.5, 1.5),
        w1=0.02 * jax.random.normal(ks[6], (kflat, d), jnp.float32),
        b1=0.02 * jax.random.normal(ks[7], (d,), jnp.float32),
        bn1_gamma=1.0 + 0.1 * jax.random.normal(ks[8], (d,), jnp.float32),
        bn1_beta=0.1 * jax.random.normal(ks[9], (d,), jnp.float32),
        bn1_mean=0.1 * jax.random.normal(ks[10], (d,), jnp.float32),
        bn1_var=jax.random.uniform(ks[11], (d,), jnp.float32, 0.5, 1.5),
        w2=0.05 * jax.random.normal(ks[12], (d, 2 * kdim), jnp.float32),
        b2=0.05 * jax.random.normal(ks[13], (2 * kdim,), jnp.float32),
        w3=0.08 * jax.random.normal(ks[14], (kdim, num_classes), jnp.float32),
        b3=0.02 * jax.random.normal(ks[15], (num_classes,), jnp.float32),
    )

    feat_k, out_k, iden_k, mu_k, std_k = jax.block_until_ready(
        ir50_vib_head(fmap, params, eps))

    # ---- pure-JAX reference (same eval-mode semantics; uses the same folded,
    #      bf16-quantized W1 as the kernel so the comparison is apples-to-apples) ----
    with jax.default_matmul_precision("highest"):
        bn_eps = 1e-5
        s2c = params["bn2_gamma"] / jnp.sqrt(params["bn2_var"] + bn_eps)
        t2c = params["bn2_beta"] - params["bn2_mean"] * s2c
        s1v = params["bn1_gamma"] / jnp.sqrt(params["bn1_var"] + bn_eps)
        t1v = params["bn1_beta"] - params["bn1_mean"] * s1v
        x2 = fmap.reshape(bs, kflat)
        s2f = jnp.repeat(s2c, h * w)
        t2f = jnp.repeat(t2c, h * w)
        w1f_r = (s2f[:, None] * params["w1"] * s1v[None, :]).astype(jnp.bfloat16)
        b1f_r = (t2f @ params["w1"] + params["b1"]) * s1v + t1v
        feat_r = jnp.dot(x2.astype(jnp.bfloat16), w1f_r,
                         preferred_element_type=jnp.float32) + b1f_r[None, :]
        statis = feat_r @ params["w2"] + params["b2"]
        mu_r = statis[:, :kdim]
        std_r = jax.nn.softplus(statis[:, kdim:] - 5.0)
        res = mu_r + std_r * eps
        logits = res @ params["w3"] + params["b3"]
        out_r = jax.nn.softmax(logits, axis=-1)
        iden_r = jnp.argmax(logits, axis=-1)[:, None].astype(jnp.int32)

    assert feat_k.shape == (bs, d) and out_k.shape == (bs, num_classes)
    assert iden_k.shape == (bs, 1)
    assert mu_k.shape == (bs, kdim) and std_k.shape == (bs, kdim)
    assert jnp.allclose(feat_k, feat_r, atol=5e-3, rtol=5e-3)
    assert jnp.allclose(mu_k, mu_r, atol=5e-3, rtol=5e-3)
    assert jnp.allclose(std_k, std_r, atol=5e-3, rtol=5e-3)
    assert jnp.allclose(out_k, out_r, atol=5e-3, rtol=5e-3)
    assert jnp.array_equal(iden_k, iden_r)
    print("KERNEL_OK")
</pallas_src>

<mosaic_0001>
module attributes {stable_mosaic.version = 11 : i64} {
  func.func @_vib_head_kernel(%arg0: i32, %arg1: i32, %arg2: memref<16x2048xf32, #tpu.memory_space<vmem>>, %arg3: memref<2048x512xbf16, #tpu.memory_space<vmem>>, %arg4: memref<1x512xf32, #tpu.memory_space<vmem>>, %arg5: memref<512x512xf32, #tpu.memory_space<vmem>>, %arg6: memref<1x512xf32, #tpu.memory_space<vmem>>, %arg7: memref<16x256xf32, #tpu.memory_space<vmem>>, %arg8: memref<256x1024xf32, #tpu.memory_space<vmem>>, %arg9: memref<1x1024xf32, #tpu.memory_space<vmem>>, %arg10: memref<16x512xf32, #tpu.memory_space<vmem>>, %arg11: memref<16x1024xf32, #tpu.memory_space<vmem>>, %arg12: memref<16x1xi32, #tpu.memory_space<vmem>>, %arg13: memref<16x256xf32, #tpu.memory_space<vmem>>, %arg14: memref<16x256xf32, #tpu.memory_space<vmem>>, %arg15: memref<16x512xf32, #tpu.memory_space<vmem>>) attributes {dimension_semantics = [#tpu.dimension_semantics<parallel>, #tpu.dimension_semantics<arbitrary>], iteration_bounds = array<i64: 1, 4>, scalar_prefetch = 0 : i64, scratch_operands = 1 : i64, tpu.core_type = #tpu.core_type<tc>, window_params = [{transform_indices = @transform_0, window_bounds = array<i64: 16, 2048>}, {transform_indices = @transform_1, window_bounds = array<i64: 2048, 512>}, {pipeline_mode = #tpu.pipeline_mode<synchronous>, transform_indices = @transform_2, window_bounds = array<i64: 1, 512>}, {pipeline_mode = #tpu.pipeline_mode<synchronous>, transform_indices = @transform_3, window_bounds = array<i64: 512, 512>}, {pipeline_mode = #tpu.pipeline_mode<synchronous>, transform_indices = @transform_4, window_bounds = array<i64: 1, 512>}, {transform_indices = @transform_5, window_bounds = array<i64: 16, 256>}, {pipeline_mode = #tpu.pipeline_mode<synchronous>, transform_indices = @transform_6, window_bounds = array<i64: 256, 1024>}, {pipeline_mode = #tpu.pipeline_mode<synchronous>, transform_indices = @transform_7, window_bounds = array<i64: 1, 1024>}, {transform_indices = @transform_8, window_bounds = array<i64: 16, 512>}, {transform_indices = @transform_9, window_bounds = array<i64: 16, 1024>}, {transform_indices = @transform_10, window_bounds = array<i64: 16, 1>}, {transform_indices = @transform_11, window_bounds = array<i64: 16, 256>}, {transform_indices = @transform_12, window_bounds = array<i64: 16, 256>}]} {
    %c0_i32 = arith.constant 0 : i32
    %0 = arith.cmpi eq, %arg1, %c0_i32 : i32
    %1 = arith.extui %0 : i1 to i32
    %c0_i32_0 = arith.constant 0 : i32
    %2 = arith.cmpi ne, %1, %c0_i32_0 : i32
    scf.if %2 {
      %cst_9 = arith.constant 0.000000e+00 : f32
      %13 = vector.broadcast %cst_9 : f32 to vector<16x512xf32>
      %c0_10 = arith.constant 0 : index
      %c0_11 = arith.constant 0 : index
      %14 = vector.load %arg15[%c0_10, %c0_11] : memref<16x512xf32, #tpu.memory_space<vmem>>, vector<16x512xf32>
      tpu.vector_store %arg15[%c0_10, %c0_11], %13 {strides = array<i32>} : memref<16x512xf32, #tpu.memory_space<vmem>>, vector<16x512xf32>,
    } else {
    }
    %c0 = arith.constant 0 : index
    %c0_1 = arith.constant 0 : index
    %3 = vector.load %arg15[%c0, %c0_1] : memref<16x512xf32, #tpu.memory_space<vmem>>, vector<16x512xf32>
    %c0_2 = arith.constant 0 : index
    %c0_3 = arith.constant 0 : index
    %4 = vector.load %arg2[%c0_2, %c0_3] : memref<16x2048xf32, #tpu.memory_space<vmem>>, vector<16x2048xf32>
    %5 = arith.truncf %4 : vector<16x2048xf32> to vector<16x2048xbf16>
    %c0_4 = arith.constant 0 : index
    %c0_5 = arith.constant 0 : index
    %6 = vector.load %arg3[%c0_4, %c0_5] : memref<2048x512xbf16, #tpu.memory_space<vmem>>, vector<2048x512xbf16>
    %cst = arith.constant dense<0.000000e+00> : vector<16x512xf32>
    %7 = tpu.matmul %5, %6, %cst {dimension_numbers = #tpu.dot_dimension_numbers<[1], [0], [0], [1], [0, 0, 1, 1], [], []>} : vector<16x2048xbf16>, vector<2048x512xbf16>, vector<16x512xf32> -> vector<16x512xf32>
    %8 = arith.addf %3, %7 : vector<16x512xf32>
    %c0_6 = arith.constant 0 : index
    %c0_7 = arith.constant 0 : index
    %9 = vector.load %arg15[%c0_6, %c0_7] : memref<16x512xf32, #tpu.memory_space<vmem>>, vector<16x512xf32>
    tpu.vector_store %arg15[%c0_6, %c0_7], %8 {strides = array<i32>} : memref<16x512xf32, #tpu.memory_space<vmem>>, vector<16x512xf32>,
    %c3_i32 = arith.constant 3 : i32
    %10 = arith.cmpi eq, %arg1, %c3_i32 : i32
    %11 = arith.extui %10 : i1 to i32
    %c0_i32_8 = arith.constant 0 : i32
    %12 = arith.cmpi ne, %11, %c0_i32_8 : i32
    scf.if %12 {
      %c0_9 = arith.constant 0 : index
      %c0_10 = arith.constant 0 : index
      %13 = vector.load %arg15[%c0_9, %c0_10] : memref<16x512xf32, #tpu.memory_space<vmem>>, vector<16x512xf32>
      %c0_11 = arith.constant 0 : index
      %c0_12 = arith.constant 0 : index
      %14 = vector.load %arg4[%c0_11, %c0_12] : memref<1x512xf32, #tpu.memory_space<vmem>>, vector<1x512xf32>
      %15 = vector.broadcast %14 : vector<1x512xf32> to vector<16x512xf32>
      %16 = arith.addf %13, %15 : vector<16x512xf32>
      %c0_13 = arith.constant 0 : index
      %c0_14 = arith.constant 0 : index
      %17 = vector.load %arg10[%c0_13, %c0_14] : memref<16x512xf32, #tpu.memory_space<vmem>>, vector<16x512xf32>
      tpu.vector_store %arg10[%c0_13, %c0_14], %16 {strides = array<i32>} : memref<16x512xf32, #tpu.memory_space<vmem>>, vector<16x512xf32>,
      %c0_15 = arith.constant 0 : index
      %c0_16 = arith.constant 0 : index
      %18 = vector.load %arg5[%c0_15, %c0_16] : memref<512x512xf32, #tpu.memory_space<vmem>>, vector<512x512xf32>
      %cst_17 = arith.constant dense<0.000000e+00> : vector<16x512xf32>
      %19 = tpu.matmul %16, %18, %cst_17 {dimension_numbers = #tpu.dot_dimension_numbers<[1], [0], [0], [1], [0, 0, 1, 1], [], []>} : vector<16x512xf32>, vector<512x512xf32>, vector<16x512xf32> -> vector<16x512xf32>
      %c0_18 = arith.constant 0 : index
      %c0_19 = arith.constant 0 : index
      %20 = vector.load %arg6[%c0_18, %c0_19] : memref<1x512xf32, #tpu.memory_space<vmem>>, vector<1x512xf32>
      %21 = vector.broadcast %20 : vector<1x512xf32> to vector<16x512xf32>
      %22 = arith.addf %19, %21 : vector<16x512xf32>
      %23 = vector.extract_strided_slice %22 {offsets = [0, 0], sizes = [16, 256], strides = [1, 1]} : vector<16x512xf32> to vector<16x256xf32>
      %24 = vector.extract_strided_slice %22 {offsets = [0, 256], sizes = [16, 256], strides = [1, 1]} : vector<16x512xf32> to vector<16x256xf32>
      %cst_20 = arith.constant 5.000000e+00 : f32
      %25 = vector.broadcast %cst_20 : f32 to vector<16x256xf32>
      %26 = arith.subf %24, %25 : vector<16x256xf32>
      %cst_21 = arith.constant 0.000000e+00 : f32
      %27 = vector.broadcast %cst_21 : f32 to vector<16x256xf32>
      %28 = arith.maximumf %26, %27 : vector<16x256xf32>
      %29 = math.absf %26 : vector<16x256xf32>
      %cst_22 = arith.constant 0.000000e+00 : f32
      %30 = vector.broadcast %cst_22 : f32 to vector<16x256xf32>
      %31 = arith.subf %30, %29 : vector<16x256xf32>
      %32 = math.exp %31 : vector<16x256xf32>
      %cst_23 = arith.constant 1.000000e+00 : f32
      %33 = vector.broadcast %cst_23 : f32 to vector<16x256xf32>
      %34 = arith.addf %33, %32 : vector<16x256xf32>
      %35 = math.log %34 : vector<16x256xf32>
      %36 = arith.addf %28, %35 : vector<16x256xf32>
      %c0_24 = arith.constant 0 : index
      %c0_25 = arith.constant 0 : index
      %37 = vector.load %arg13[%c0_24, %c0_25] : memref<16x256xf32, #tpu.memory_space<vmem>>, vector<16x256xf32>
      tpu.vector_store %arg13[%c0_24, %c0_25], %23 {strides = array<i32>} : memref<16x256xf32, #tpu.memory_space<vmem>>, vector<16x256xf32>,
      %c0_26 = arith.constant 0 : index
      %c0_27 = arith.constant 0 : index
      %38 = vector.load %arg14[%c0_26, %c0_27] : memref<16x256xf32, #tpu.memory_space<vmem>>, vector<16x256xf32>
      tpu.vector_store %arg14[%c0_26, %c0_27], %36 {strides = array<i32>} : memref<16x256xf32, #tpu.memory_space<vmem>>, vector<16x256xf32>,
      %c0_28 = arith.constant 0 : index
      %c0_29 = arith.constant 0 : index
      %39 = vector.load %arg7[%c0_28, %c0_29] : memref<16x256xf32, #tpu.memory_space<vmem>>, vector<16x256xf32>
      %40 = arith.mulf %36, %39 : vector<16x256xf32>
      %41 = arith.addf %23, %40 : vector<16x256xf32>
      %c0_30 = arith.constant 0 : index
      %c0_31 = arith.constant 0 : index
      %42 = vector.load %arg8[%c0_30, %c0_31] : memref<256x1024xf32, #tpu.memory_space<vmem>>, vector<256x1024xf32>
      %cst_32 = arith.constant dense<0.000000e+00> : vector<16x1024xf32>
      %43 = tpu.matmul %41, %42, %cst_32 {dimension_numbers = #tpu.dot_dimension_numbers<[1], [0], [0], [1], [0, 0, 1, 1], [], []>} : vector<16x256xf32>, vector<256x1024xf32>, vector<16x1024xf32> -> vector<16x1024xf32>
      %c0_33 = arith.constant 0 : index
      %c0_34 = arith.constant 0 : index
      %44 = vector.load %arg9[%c0_33, %c0_34] : memref<1x1024xf32, #tpu.memory_space<vmem>>, vector<1x1024xf32>
      %45 = vector.broadcast %44 : vector<1x1024xf32> to vector<16x1024xf32>
      %46 = arith.addf %43, %45 : vector<16x1024xf32>
      %cst_35 = arith.constant dense<0xFF800000> : vector<16xf32>
      %47 = vector.multi_reduction <maximumf>, %46, %cst_35 [1] : vector<16x1024xf32> to vector<16xf32>
      %48 = vector.shape_cast %47 : vector<16xf32> to vector<16x1xf32>
      %49 = vector.broadcast %48 : vector<16x1xf32> to vector<16x1024xf32>
      %50 = arith.subf %46, %49 : vector<16x1024xf32>
      %51 = math.exp %50 : vector<16x1024xf32>
      %cst_36 = arith.constant dense<0.000000e+00> : vector<16xf32>
      %52 = vector.multi_reduction <add>, %51, %cst_36 [1] : vector<16x1024xf32> to vector<16xf32>
      %53 = vector.shape_cast %52 : vector<16xf32> to vector<16x1xf32>
      %54 = tpu.reciprocal %53 {approx = true} : vector<16x1xf32> -> vector<16x1xf32>
      %55 = vector.broadcast %54 : vector<16x1xf32> to vector<16x1024xf32>
      %56 = arith.mulf %51, %55 : vector<16x1024xf32>
      %c0_37 = arith.constant 0 : index
      %c0_38 = arith.constant 0 : index
      %57 = vector.load %arg11[%c0_37, %c0_38] : memref<16x1024xf32, #tpu.memory_space<vmem>>, vector<16x1024xf32>
      tpu.vector_store %arg11[%c0_37, %c0_38], %56 {strides = array<i32>} : memref<16x1024xf32, #tpu.memory_space<vmem>>, vector<16x1024xf32>,
      %58 = tpu.iota {dimensions = array<i32: 1>} : vector<16x1024xi32>
      %59 = vector.broadcast %48 : vector<16x1xf32> to vector<16x1024xf32>
      %60 = arith.cmpf oge, %46, %59 : vector<16x1024xf32>
      %c1024_i32 = arith.constant 1024 : i32
      %61 = vector.broadcast %c1024_i32 : i32 to vector<16x1024xi32>
      %62 = arith.select %60, %58, %61 : vector<16x1024xi1>, vector<16x1024xi32>
      %cst_39 = arith.constant dense<2147483647> : vector<16xi32>
      %63 = vector.multi_reduction <minsi>, %62, %cst_39 [1] : vector<16x1024xi32> to vector<16xi32>
      %64 = vector.shape_cast %63 : vector<16xi32> to vector<16x1xi32>
      %c0_40 = arith.constant 0 : index
      %c0_41 = arith.constant 0 : index
      %65 = vector.load %arg12[%c0_40, %c0_41] : memref<16x1xi32, #tpu.memory_space<vmem>>, vector<16x1xi32>
      tpu.vector_store %arg12[%c0_40, %c0_41], %64 {strides = array<i32>} : memref<16x1xi32, #tpu.memory_space<vmem>>, vector<16x1xi32>,
    } else {
    }
    return
  }
  func.func @transform_0(%arg0: i32, %arg1: i32) -> (i32, i32) {
    %c0_i32 = arith.constant 0 : i32
    return %arg0, %arg1 : i32, i32
  }
  func.func @transform_1(%arg0: i32, %arg1: i32) -> (i32, i32) {
    %c0_i32 = arith.constant 0 : i32
    %c0_i32_0 = arith.constant 0 : i32
    return %arg1, %c0_i32 : i32, i32
  }
  func.func @transform_2(%arg0: i32, %arg1: i32) -> (i32, i32) {
    %c0_i32 = arith.constant 0 : i32
    %c0_i32_0 = arith.constant 0 : i32
    %c0_i32_1 = arith.constant 0 : i32
    return %c0_i32, %c0_i32_0 : i32, i32
  }
  func.func @transform_3(%arg0: i32, %arg1: i32) -> (i32, i32) {
    %c0_i32 = arith.constant 0 : i32
    %c0_i32_0 = arith.constant 0 : i32
    %c0_i32_1 = arith.constant 0 : i32
    return %c0_i32, %c0_i32_0 : i32, i32
  }
  func.func @transform_4(%arg0: i32, %arg1: i32) -> (i32, i32) {
    %c0_i32 = arith.constant 0 : i32
    %c0_i32_0 = arith.constant 0 : i32
    %c0_i32_1 = arith.constant 0 : i32
    return %c0_i32, %c0_i32_0 : i32, i32
  }
  func.func @transform_5(%arg0: i32, %arg1: i32) -> (i32, i32) {
    %c0_i32 = arith.constant 0 : i32
    %c0_i32_0 = arith.constant 0 : i32
    return %arg0, %c0_i32 : i32, i32
  }
  func.func @transform_6(%arg0: i32, %arg1: i32) -> (i32, i32) {
    %c0_i32 = arith.constant 0 : i32
    %c0_i32_0 = arith.constant 0 : i32
    %c0_i32_1 = arith.constant 0 : i32
    return %c0_i32, %c0_i32_0 : i32, i32
  }
  func.func @transform_7(%arg0: i32, %arg1: i32) -> (i32, i32) {
    %c0_i32 = arith.constant 0 : i32
    %c0_i32_0 = arith.constant 0 : i32
    %c0_i32_1 = arith.constant 0 : i32
    return %c0_i32, %c0_i32_0 : i32, i32
  }
  func.func @transform_8(%arg0: i32, %arg1: i32) -> (i32, i32) {
    %c0_i32 = arith.constant 0 : i32
    %c0_i32_0 = arith.constant 0 : i32
    return %arg0, %c0_i32 : i32, i32
  }
  func.func @transform_9(%arg0: i32, %arg1: i32) -> (i32, i32) {
    %c0_i32 = arith.constant 0 : i32
    %c0_i32_0 = arith.constant 0 : i32
    return %arg0, %c0_i32 : i32, i32
  }
  func.func @transform_10(%arg0: i32, %arg1: i32) -> (i32, i32) {
    %c0_i32 = arith.constant 0 : i32
    %c0_i32_0 = arith.constant 0 : i32
    return %arg0, %c0_i32 : i32, i32
  }
  func.func @transform_11(%arg0: i32, %arg1: i32) -> (i32, i32) {
    %c0_i32 = arith.constant 0 : i32
    %c0_i32_0 = arith.constant 0 : i32
    return %arg0, %c0_i32 : i32, i32
  }
  func.func @transform_12(%arg0: i32, %arg1: i32) -> (i32, i32) {
    %c0_i32 = arith.constant 0 : i32
    %c0_i32_0 = arith.constant 0 : i32
    return %arg0, %c0_i32 : i32, i32
  }
}

</mosaic_0001>

<llo_original>
// kernel: tpu_custom_call.1
$region0: #{tpu_custom_call.1}
  #allocation0 [shape = 'u32[]', space=smem, size = 0x4, offset = 0x4, fixed_abs, tag = 'smem constant byte address 0x4 - core index']
  #allocation1 [shape = 'u32[144,128]{1,0:T(1,128)}', space=vmem, size = 0x12000, scoped, tag = 'internal scratch']
  #allocation2 [shape = 'f32[16,512]{1,0:T(8,128)}', space=vmem, size = 0x8000, scoped, tag = 'scratch operand']
  %s0 = inlined_call_operand.hbm [shape: f32[16,8192], index: 0, kind: input, shape index: {}]
  %s1 = inlined_call_operand.hbm [shape: bf16[8192,512], index: 1, kind: input, shape index: {}]
  %s2 = inlined_call_operand.hbm [shape: f32[1,512], index: 2, kind: input, shape index: {}]
  %s3 = inlined_call_operand.hbm [shape: f32[512,512], index: 3, kind: input, shape index: {}]
  %s4 = inlined_call_operand.hbm [shape: f32[1,512], index: 4, kind: input, shape index: {}]
  %s5 = inlined_call_operand.hbm [shape: f32[16,256], index: 5, kind: input, shape index: {}]
  %s6 = inlined_call_operand.hbm [shape: f32[256,1024], index: 6, kind: input, shape index: {}]
  %s7 = inlined_call_operand.hbm [shape: f32[1,1024], index: 7, kind: input, shape index: {}]
  %s8 = inlined_call_operand.hbm [shape: f32[16,512], index: 8, kind: output, shape index: {0}]
  %s9 = inlined_call_operand.hbm [shape: f32[16,1024], index: 9, kind: output, shape index: {1}]
  %s10 = inlined_call_operand.vmem [shape: s32[16,1], index: 10, kind: output, shape index: {2}]
  %s11 = inlined_call_operand.hbm [shape: f32[16,256], index: 11, kind: output, shape index: {3}]
  %s12 = inlined_call_operand.hbm [shape: f32[16,256], index: 12, kind: output, shape index: {4}]
  %13 = xla_tuple %s8, %s9, %s10, %s11, %s12
  %s14 = sld [smem:[#allocation0]]
  $region137: #{tpu_custom_call.1} parent=0
    _
  %s16 = ssub.s32 1, %s14
  %s17 = scalar_select 0, %s16, %s14
  $region1: #{tpu_custom_call.1} parent=0
    #allocation3 [shape = 'u8[262144]{0}', space=vmem, size = 0x40000, scoped, tag = 'input window, operand 0']
    #allocation4 [shape = 's32[2]{0}', space=sflag, size = 0x8, scoped, tag = 'scoped memory for tpu_custom_call.1']
    #allocation5 [shape = 's32[2]{0}', space=sflag, size = 0x8, scoped, tag = 'scoped memory for tpu_custom_call.1']
    #allocation6 [shape = 'u8[4194304]{0}', space=vmem, size = 0x400000, scoped, tag = 'input window, operand 1']
    #allocation7 [shape = 's32[2]{0}', space=sflag, size = 0x8, scoped, tag = 'scoped memory for tpu_custom_call.1']
    #allocation8 [shape = 'u8[2048]{0}', space=vmem, size = 0x800, scoped, tag = 'input window, operand 2, single buffered']
    #allocation9 [shape = 'u8[1048576]{0}', space=vmem, size = 0x100000, scoped, tag = 'input window, operand 3, single buffered']
    #allocation10 [shape = 's32[1]{0}', space=sflag, size = 0x4, scoped, tag = 'scoped memory for tpu_custom_call.1']
    #allocation11 [shape = 'u8[2048]{0}', space=vmem, size = 0x800, scoped, tag = 'input window, operand 4, single buffered']
    #allocation12 [shape = 'u8[16384]{0}', space=vmem, size = 0x4000, scoped, tag = 'input window, operand 5, single buffered']
    #allocation13 [shape = 's32[1]{0}', space=sflag, size = 0x4, scoped, tag = 'scoped memory for tpu_custom_call.1']
    #allocation14 [shape = 'u8[1048576]{0}', space=vmem, size = 0x100000, scoped, tag = 'input window, operand 6, single buffered']
    #allocation15 [shape = 'u8[4096]{0}', space=vmem, size = 0x1000, scoped, tag = 'input window, operand 7, single buffered']
    #allocation16 [shape = 's32[1]{0}', space=sflag, size = 0x4, scoped, tag = 'scoped memory for tpu_custom_call.1']
    #allocation17 [shape = 'u8[32768]{0}', space=vmem, size = 0x8000, scoped, tag = 'output window, operand 0, single buffered']
    #allocation18 [shape = 'u8[65536]{0}', space=vmem, size = 0x10000, scoped, tag = 'output window, operand 1, single buffered']
    #allocation19 [shape = 's32[1]{0}', space=sflag, size = 0x4, scoped, tag = 'scoped memory for tpu_custom_call.1']
    #allocation20 [shape = 'u8[16384]{0}', space=vmem, size = 0x4000, scoped, tag = 'output window, operand 3, single buffered']
    #allocation21 [shape = 'u8[16384]{0}', space=vmem, size = 0x4000, scoped, tag = 'output window, operand 4, single buffered']
    #allocation22 [shape = 's32[1]{0}', space=sflag, size = 0x4, scoped, tag = 'scoped memory for tpu_custom_call.1']
    %18 = vsyncpa [#allocation4], 0
    %s19 = scalar_lea.sflag [#allocation4], 1
    %20 = vsyncpa %s19, 0
    %21 = vsyncpa [#allocation7], 0
    %s22 = scalar_lea.sflag [#allocation7], 1
    %23 = vsyncpa %s22, 0
    %24 = vsyncpa [#allocation10], 0
    %25 = vsyncpa [#allocation13], 0
    %26 = vsyncpa [#allocation16], 0
    %27 = vsyncpa [#allocation5], 0
    %28 = vsyncpa [#allocation19], 0
    %29 = vsyncpa [#allocation22], 0
    loop: start=0, step=1, limit=6
    $region2: #{tpu_custom_call.1} parent=1 // loop_pre_header
      _
    $region3: #{tpu_custom_call.1} parent=1 // loop_header
      %s31 = sphi 0, %s35
      %p32 = scmp.ge.s32.totalorder %s31, 6
      %s38 = sphi 0, %s50
      %s39 = sphi 0, %s46
      %s40 = sphi 0, %s38
      %s41 = sphi 0, %s39
      %s42 = sphi 0, %s40
      %s43 = sphi 0, %s41
      %s55 = sphi 0, %s57
      %s58 = sphi 0, %s55
      %s59 = sphi 0, %s58
      %s75 = sphi 0, %s59
      %s81 = sphi 0, %s83
      %s84 = sphi 0, %s81
      %s85 = sphi 0, %s84
      %s101 = sphi 0, %s85
      %s105 = sphi 0, %s105
      %s107 = sphi 0, %s105
      %s108 = sphi 0, %s107
      %s122 = sphi 0, %s108
      %s126 = sphi 0, %s126
      %s128 = sphi 0, %s126
      %s129 = sphi 0, %s128
      %s143 = sphi 0, %s129
      %s147 = sphi 0, %s147
      %s149 = sphi 0, %s147
      %s150 = sphi 0, %s149
      %s164 = sphi 0, %s150
      %s170 = sphi 0, %s172
      %s173 = sphi 0, %s170
      %s174 = sphi 0, %s173
      %s190 = sphi 0, %s174
      %s194 = sphi 0, %s194
      %s196 = sphi 0, %s194
      %s197 = sphi 0, %s196
      %s211 = sphi 0, %s197
      %s215 = sphi 0, %s215
      %s217 = sphi 0, %s215
      %s218 = sphi 0, %s217
      %s232 = sphi 0, %s218
      %s238 = sphi 0, %s240
      %s241 = sphi 0, %s238
      %s242 = sphi 0, %s241
      %s258 = sphi 0, %s242
      %s264 = sphi 0, %s266
      %s267 = sphi 0, %s264
      %s268 = sphi 0, %s267
      %s284 = sphi 0, %s268
      %s290 = sphi 0, %s292
      %s293 = sphi 0, %s290
      %s294 = sphi 0, %s293
      %s310 = sphi 0, %s294
      %s316 = sphi 0, %s318
      %s319 = sphi 0, %s316
      %s320 = sphi 0, %s319
      %s336 = sphi 0, %s320
      %s342 = sphi 0, %s344
      %s345 = sphi 0, %s342
      %s346 = sphi 0, %s345
      %s362 = sphi 0, %s346
    $region4: #{tpu_custom_call.1} parent=1 // loop_header_branch
      %34 = sbr.rel (%p32) target = $region8
    $region5: #{tpu_custom_call.1} parent=1 // loop_body
      %s36 = ssub.s32 %s31, 1
      %s37 = ssub.s32 %s31, 2
      %s44 = sadd.s32 1, %s39
      %p45 = scmp.ge.s32.totalorder %s44, 4
      %s46 = scalar_select %p45, 0, %s44
      %s47 = sadd.s32 1, %s38
      %s48 = scalar_select %p45, %s47, %s38
      %p49 = scmp.ge.s32.totalorder %s48, 1
      %s50 = scalar_select %p49, 0, %s48
      %s51 = ssub.s32 %s38, %s50
      %s52 = ssub.s32 %s39, %s46
      %s53 = sor.u32 %s51, %s52
      %p54 = scmp.eq.s32.totalorder %s53, 0
      %s56 = sadd.s32 %s55, 1
      %s57 = scalar_select %p54, %s55, %s56
      %p60 = pneg %p54
      %p61 = scmp.eq.s32.totalorder %s31, 3
      %p62 = por %p60, %p61
      %p63 = scmp.ne.s32.totalorder %s55, %s58
      %p64 = scmp.eq.s32.totalorder %s31, 0
      %p65 = por %p63, %p64
      %p66 = scmp.ne.s32.totalorder %s55, %s58
      %p67 = scmp.eq.s32.totalorder %s36, 3
      %p68 = por %p66, %p67
      %p69 = scmp.ne.s32.totalorder %s58, %s59
      %p70 = scmp.eq.s32.totalorder %s36, 0
      %p71 = por %p69, %p70
      %p72 = scmp.ne.s32.totalorder %s58, %s59
      %p73 = scmp.eq.s32.totalorder %s37, 3
      %p74 = por %p72, %p73
      %p76 = scmp.ne.s32.totalorder %s59, %s75
      %p77 = scmp.eq.s32.totalorder %s37, 0
      %p78 = por %p76, %p77
      %s79 = ssub.s32 %s39, %s46
      %p80 = scmp.eq.s32.totalorder %s79, 0
      %s82 = sadd.s32 %s81, 1
      %s83 = scalar_select %p80, %s81, %s82
      %p86 = pneg %p80
      %p87 = scmp.eq.s32.totalorder %s31, 3
      %p88 = por %p86, %p87
      %p89 = scmp.ne.s32.totalorder %s81, %s84
      %p90 = scmp.eq.s32.totalorder %s31, 0
      %p91 = por %p89, %p90
      %p92 = scmp.ne.s32.totalorder %s81, %s84
      %p93 = scmp.eq.s32.totalorder %s36, 3
      %p94 = por %p92, %p93
      %p95 = scmp.ne.s32.totalorder %s84, %s85
      %p96 = scmp.eq.s32.totalorder %s36, 0
      %p97 = por %p95, %p96
      %p98 = scmp.ne.s32.totalorder %s84, %s85
      %p99 = scmp.eq.s32.totalorder %s37, 3
      %p100 = por %p98, %p99
      %p102 = scmp.ne.s32.totalorder %s85, %s101
      %p103 = scmp.eq.s32.totalorder %s37, 0
      %p104 = por %p102, %p103
      %s106 = sadd.s32 %s105, 1
      %p109 = scmp.eq.s32.totalorder %s31, 3
      %p110 = scmp.ne.s32.totalorder %s105, %s107
      %p111 = scmp.eq.s32.totalorder %s31, 0
      %p112 = por %p110, %p111
      %p113 = scmp.ne.s32.totalorder %s105, %s107
      %p114 = scmp.eq.s32.totalorder %s36, 3
      %p115 = por %p113, %p114
      %p116 = scmp.ne.s32.totalorder %s107, %s108
      %p117 = scmp.eq.s32.totalorder %s36, 0
      %p118 = por %p116, %p117
      %p119 = scmp.ne.s32.totalorder %s107, %s108
      %p120 = scmp.eq.s32.totalorder %s37, 3
      %p121 = por %p119, %p120
      %p123 = scmp.ne.s32.totalorder %s108, %s122
      %p124 = scmp.eq.s32.totalorder %s37, 0
      %p125 = por %p123, %p124
      %s127 = sadd.s32 %s126, 1
      %p130 = scmp.eq.s32.totalorder %s31, 3
      %p131 = scmp.ne.s32.totalorder %s126, %s128
      %p132 = scmp.eq.s32.totalorder %s31, 0
      %p133 = por %p131, %p132
      %p134 = scmp.ne.s32.totalorder %s126, %s128
      %p135 = scmp.eq.s32.totalorder %s36, 3
      %p136 = por %p134, %p135
      %p137 = scmp.ne.s32.totalorder %s128, %s129
      %p138 = scmp.eq.s32.totalorder %s36, 0
      %p139 = por %p137, %p138
      %p140 = scmp.ne.s32.totalorder %s128, %s129
      %p141 = scmp.eq.s32.totalorder %s37, 3
      %p142 = por %p140, %p141
      %p144 = scmp.ne.s32.totalorder %s129, %s143
      %p145 = scmp.eq.s32.totalorder %s37, 0
      %p146 = por %p144, %p145
      %s148 = sadd.s32 %s147, 1
      %p151 = scmp.eq.s32.totalorder %s31, 3
      %p152 = scmp.ne.s32.totalorder %s147, %s149
      %p153 = scmp.eq.s32.totalorder %s31, 0
      %p154 = por %p152, %p153
      %p155 = scmp.ne.s32.totalorder %s147, %s149
      %p156 = scmp.eq.s32.totalorder %s36, 3
      %p157 = por %p155, %p156
      %p158 = scmp.ne.s32.totalorder %s149, %s150
      %p159 = scmp.eq.s32.totalorder %s36, 0
      %p160 = por %p158, %p159
      %p161 = scmp.ne.s32.totalorder %s149, %s150
      %p162 = scmp.eq.s32.totalorder %s37, 3
      %p163 = por %p161, %p162
      %p165 = scmp.ne.s32.totalorder %s150, %s164
      %p166 = scmp.eq.s32.totalorder %s37, 0
      %p167 = por %p165, %p166
      %s168 = ssub.s32 %s38, %s50
      %p169 = scmp.eq.s32.totalorder %s168, 0
      %s171 = sadd.s32 %s170, 1
      %s172 = scalar_select %p169, %s170, %s171
      %p175 = pneg %p169
      %p176 = scmp.eq.s32.totalorder %s31, 3
      %p177 = por %p175, %p176
      %p178 = scmp.ne.s32.totalorder %s170, %s173
      %p179 = scmp.eq.s32.totalorder %s31, 0
      %p180 = por %p178, %p179
      %p181 = scmp.ne.s32.totalorder %s170, %s173
      %p182 = scmp.eq.s32.totalorder %s36, 3
      %p183 = por %p181, %p182
      %p184 = scmp.ne.s32.totalorder %s173, %s174
      %p185 = scmp.eq.s32.totalorder %s36, 0
      %p186 = por %p184, %p185
      %p187 = scmp.ne.s32.totalorder %s173, %s174
      %p188 = scmp.eq.s32.totalorder %s37, 3
      %p189 = por %p187, %p188
      %p191 = scmp.ne.s32.totalorder %s174, %s190
      %p192 = scmp.eq.s32.totalorder %s37, 0
      %p193 = por %p191, %p192
      %s195 = sadd.s32 %s194, 1
      %p198 = scmp.eq.s32.totalorder %s31, 3
      %p199 = scmp.ne.s32.totalorder %s194, %s196
      %p200 = scmp.eq.s32.totalorder %s31, 0
      %p201 = por %p199, %p200
      %p202 = scmp.ne.s32.totalorder %s194, %s196
      %p203 = scmp.eq.s32.totalorder %s36, 3
      %p204 = por %p202, %p203
      %p205 = scmp.ne.s32.totalorder %s196, %s197
      %p206 = scmp.eq.s32.totalorder %s36, 0
      %p207 = por %p205, %p206
      %p208 = scmp.ne.s32.totalorder %s196, %s197
      %p209 = scmp.eq.s32.totalorder %s37, 3
      %p210 = por %p208, %p209
      %p212 = scmp.ne.s32.totalorder %s197, %s211
      %p213 = scmp.eq.s32.totalorder %s37, 0
      %p214 = por %p212, %p213
      %s216 = sadd.s32 %s215, 1
      %p219 = scmp.eq.s32.totalorder %s31, 3
      %p220 = scmp.ne.s32.totalorder %s215, %s217
      %p221 = scmp.eq.s32.totalorder %s31, 0
      %p222 = por %p220, %p221
      %p223 = scmp.ne.s32.totalorder %s215, %s217
      %p224 = scmp.eq.s32.totalorder %s36, 3
      %p225 = por %p223, %p224
      %p226 = scmp.ne.s32.totalorder %s217, %s218
      %p227 = scmp.eq.s32.totalorder %s36, 0
      %p228 = por %p226, %p227
      %p229 = scmp.ne.s32.totalorder %s217, %s218
      %p230 = scmp.eq.s32.totalorder %s37, 3
      %p231 = por %p229, %p230
      %p233 = scmp.ne.s32.totalorder %s218, %s232
      %p234 = scmp.eq.s32.totalorder %s37, 0
      %p235 = por %p233, %p234
      %s236 = ssub.s32 %s38, %s50
      %p237 = scmp.eq.s32.totalorder %s236, 0
      %s239 = sadd.s32 %s238, 1
      %s240 = scalar_select %p237, %s238, %s239
      %p243 = pneg %p237
      %p244 = scmp.eq.s32.totalorder %s31, 3
      %p245 = por %p243, %p244
      %p246 = scmp.ne.s32.totalorder %s238, %s241
      %p247 = scmp.eq.s32.totalorder %s31, 0
      %p248 = por %p246, %p247
      %p249 = scmp.ne.s32.totalorder %s238, %s241
      %p250 = scmp.eq.s32.totalorder %s36, 3
      %p251 = por %p249, %p250
      %p252 = scmp.ne.s32.totalorder %s241, %s242
      %p253 = scmp.eq.s32.totalorder %s36, 0
      %p254 = por %p252, %p253
      %p255 = scmp.ne.s32.totalorder %s241, %s242
      %p256 = scmp.eq.s32.totalorder %s37, 3
      %p257 = por %p255, %p256
      %p259 = scmp.ne.s32.totalorder %s242, %s258
      %p260 = scmp.eq.s32.totalorder %s37, 0
      %p261 = por %p259, %p260
      %s262 = ssub.s32 %s38, %s50
      %p263 = scmp.eq.s32.totalorder %s262, 0
      %s265 = sadd.s32 %s264, 1
      %s266 = scalar_select %p263, %s264, %s265
      %p269 = pneg %p263
      %p270 = scmp.eq.s32.totalorder %s31, 3
      %p271 = por %p269, %p270
      %p272 = scmp.ne.s32.totalorder %s264, %s267
      %p273 = scmp.eq.s32.totalorder %s31, 0
      %p274 = por %p272, %p273
      %p275 = scmp.ne.s32.totalorder %s264, %s267
      %p276 = scmp.eq.s32.totalorder %s36, 3
      %p277 = por %p275, %p276
      %p278 = scmp.ne.s32.totalorder %s267, %s268
      %p279 = scmp.eq.s32.totalorder %s36, 0
      %p280 = por %p278, %p279
      %p281 = scmp.ne.s32.totalorder %s267, %s268
      %p282 = scmp.eq.s32.totalorder %s37, 3
      %p283 = por %p281, %p282
      %p285 = scmp.ne.s32.totalorder %s268, %s284
      %p286 = scmp.eq.s32.totalorder %s37, 0
      %p287 = por %p285, %p286
      %s288 = ssub.s32 %s38, %s50
      %p289 = scmp.eq.s32.totalorder %s288, 0
      %s291 = sadd.s32 %s290, 1
      %s292 = scalar_select %p289, %s290, %s291
      %p295 = pneg %p289
      %p296 = scmp.eq.s32.totalorder %s31, 3
      %p297 = por %p295, %p296
      %p298 = scmp.ne.s32.totalorder %s290, %s293
      %p299 = scmp.eq.s32.totalorder %s31, 0
      %p300 = por %p298, %p299
      %p301 = scmp.ne.s32.totalorder %s290, %s293
      %p302 = scmp.eq.s32.totalorder %s36, 3
      %p303 = por %p301, %p302
      %p304 = scmp.ne.s32.totalorder %s293, %s294
      %p305 = scmp.eq.s32.totalorder %s36, 0
      %p306 = por %p304, %p305
      %p307 = scmp.ne.s32.totalorder %s293, %s294
      %p308 = scmp.eq.s32.totalorder %s37, 3
      %p309 = por %p307, %p308
      %p311 = scmp.ne.s32.totalorder %s294, %s310
      %p312 = scmp.eq.s32.totalorder %s37, 0
      %p313 = por %p311, %p312
      %s314 = ssub.s32 %s38, %s50
      %p315 = scmp.eq.s32.totalorder %s314, 0
      %s317 = sadd.s32 %s316, 1
      %s318 = scalar_select %p315, %s316, %s317
      %p321 = pneg %p315
      %p322 = scmp.eq.s32.totalorder %s31, 3
      %p323 = por %p321, %p322
      %p324 = scmp.ne.s32.totalorder %s316, %s319
      %p325 = scmp.eq.s32.totalorder %s31, 0
      %p326 = por %p324, %p325
      %p327 = scmp.ne.s32.totalorder %s316, %s319
      %p328 = scmp.eq.s32.totalorder %s36, 3
      %p329 = por %p327, %p328
      %p330 = scmp.ne.s32.totalorder %s319, %s320
      %p331 = scmp.eq.s32.totalorder %s36, 0
      %p332 = por %p330, %p331
      %p333 = scmp.ne.s32.totalorder %s319, %s320
      %p334 = scmp.eq.s32.totalorder %s37, 3
      %p335 = por %p333, %p334
      %p337 = scmp.ne.s32.totalorder %s320, %s336
      %p338 = scmp.eq.s32.totalorder %s37, 0
      %p339 = por %p337, %p338
      %s340 = ssub.s32 %s38, %s50
      %p341 = scmp.eq.s32.totalorder %s340, 0
      %s343 = sadd.s32 %s342, 1
      %s344 = scalar_select %p341, %s342, %s343
      %p347 = pneg %p341
      %p348 = scmp.eq.s32.totalorder %s31, 3
      %p349 = por %p347, %p348
      %p350 = scmp.ne.s32.totalorder %s342, %s345
      %p351 = scmp.eq.s32.totalorder %s31, 0
      %p352 = por %p350, %p351
      %p353 = scmp.ne.s32.totalorder %s342, %s345
      %p354 = scmp.eq.s32.totalorder %s36, 3
      %p355 = por %p353, %p354
      %p356 = scmp.ne.s32.totalorder %s345, %s346
      %p357 = scmp.eq.s32.totalorder %s36, 0
      %p358 = por %p356, %p357
      %p359 = scmp.ne.s32.totalorder %s345, %s346
      %p360 = scmp.eq.s32.totalorder %s37, 3
      %p361 = por %p359, %p360
      %p363 = scmp.ne.s32.totalorder %s346, %s362
      %p364 = scmp.eq.s32.totalorder %s37, 0
      %p365 = por %p363, %p364
      %p366 = scmp.le.s32.totalorder 1, %s31
      %p367 = scmp.lt.s32.totalorder %s31, 5
      %p368 = pnand %p366, %p367
      %p369 = pneg %p368
      // Predicated region
      $region9: #{tpu_custom_call.1} parent=5 // pred_check
        _
      $region10: #{tpu_custom_call.1} parent=5 // pred_check_branch
        %371 = sbr.rel (%p368) target = $region12
      $region11: #{tpu_custom_call.1} parent=5 // pred_region
        %s372 = ssub.s32 %s31, 1
        // Predicated region
        $region13: #{tpu_custom_call.1} parent=11 // pred_check
          %p373 = pneg %p118
        $region14: #{tpu_custom_call.1} parent=11 // pred_check_branch
          %375 = sbr.rel (%p373) target = $region16
        $region15: #{tpu_custom_call.1} parent=11 // pred_region
          %s377 = ssub.s32 64, 64
          %378 = vsyncadd [#allocation7], %s377
          %s380 = sshll.u32 [#allocation8], 4
          %s381 = int_to_ptr.vmem [resolvable:$true] %s380
          %383 = dma.hbm_to_vmem [thread:$0]  %s2, 64, %s381, [#allocation7]
        $region16: #{tpu_custom_call.1} parent=11 // pred_fallthru
          _
        // Predicated region
        $region17: #{tpu_custom_call.1} parent=11 // pred_check
          %p384 = pneg %p139
        $region18: #{tpu_custom_call.1} parent=11 // pred_check_branch
          %386 = sbr.rel (%p384) target = $region20
        $region19: #{tpu_custom_call.1} parent=11 // pred_region
          %s388 = ssub.s32 32768, 32768
          %389 = vsyncadd [#allocation10], %s388
          %s390 = sshll.u32 [#allocation9], 4
          %s391 = int_to_ptr.vmem [resolvable:$true] %s390
          %396 = dma.hbm_to_vmem [thread:$0]  %s3, 32768, %s391, [#allocation10], 512, 512, 32
        $region20: #{tpu_custom_call.1} parent=11 // pred_fallthru
          _
        // Predicated region
        $region21: #{tpu_custom_call.1} parent=11 // pred_check
          %p397 = pneg %p160
        $region22: #{tpu_custom_call.1} parent=11 // pred_check_branch
          %399 = sbr.rel (%p397) target = $region24
        $region23: #{tpu_custom_call.1} parent=11 // pred_region
          %s401 = ssub.s32 64, 64
          %402 = vsyncadd [#allocation10], %s401
          %s404 = sshll.u32 [#allocation11], 4
          %s405 = int_to_ptr.vmem [resolvable:$true] %s404
          %407 = dma.hbm_to_vmem [thread:$0]  %s4, 64, %s405, [#allocation10]
        $region24: #{tpu_custom_call.1} parent=11 // pred_fallthru
          _
        // Predicated region
        $region25: #{tpu_custom_call.1} parent=11 // pred_check
          %p408 = pneg %p186
        $region26: #{tpu_custom_call.1} parent=11 // pred_check_branch
          %410 = sbr.rel (%p408) target = $region28
        $region27: #{tpu_custom_call.1} parent=11 // pred_region
          %s411 = smul.u32 2, %s40
          %s413 = ssub.s32 512, 512
          %414 = vsyncadd [#allocation13], %s413
          %s415 = smul.addr %s411, 2
          %s416 = smul.addr %s415, 128
          %s417 = scalar_lea.hbm %s5, %s416
          %s418 = sshll.u32 [#allocation12], 4
          %s419 = int_to_ptr.vmem [resolvable:$true] %s418
          %424 = dma.hbm_to_vmem [thread:$0]  %s417, 512, %s419, [#allocation13], 256, 256, 16
        $region28: #{tpu_custom_call.1} parent=11 // pred_fallthru
          _
        // Predicated region
        $region29: #{tpu_custom_call.1} parent=11 // pred_check
          %p425 = pneg %p207
        $region30: #{tpu_custom_call.1} parent=11 // pred_check_branch
          %427 = sbr.rel (%p425) target = $region32
        $region31: #{tpu_custom_call.1} parent=11 // pred_region
          %s429 = ssub.s32 32768, 32768
          %430 = vsyncadd [#allocation13], %s429
          %s431 = sshll.u32 [#allocation14], 4
          %s432 = int_to_ptr.vmem [resolvable:$true] %s431
          %437 = dma.hbm_to_vmem [thread:$0]  %s6, 32768, %s432, [#allocation13], 1024, 1024, 64
        $region32: #{tpu_custom_call.1} parent=11 // pred_fallthru
          _
        // Predicated region
        $region33: #{tpu_custom_call.1} parent=11 // pred_check
          %p438 = pneg %p228
        $region34: #{tpu_custom_call.1} parent=11 // pred_check_branch
          %440 = sbr.rel (%p438) target = $region36
        $region35: #{tpu_custom_call.1} parent=11 // pred_region
          %s442 = ssub.s32 128, 128
          %443 = vsyncadd [#allocation16], %s442
          %s445 = sshll.u32 [#allocation15], 4
          %s446 = int_to_ptr.vmem [resolvable:$true] %s445
          %448 = dma.hbm_to_vmem [thread:$0]  %s7, 128, %s446, [#allocation16]
        $region36: #{tpu_custom_call.1} parent=11 // pred_fallthru
          _
      $region12: #{tpu_custom_call.1} parent=5 // pred_fallthru
        _
      %p449 = scmp.lt.s32.totalorder %s31, 4
      // Predicated region
      $region37: #{tpu_custom_call.1} parent=5 // pred_check
        %p450 = pneg %p449
      $region38: #{tpu_custom_call.1} parent=5 // pred_check_branch
        %452 = sbr.rel (%p450) target = $region40
      $region39: #{tpu_custom_call.1} parent=5 // pred_region
        // Predicated region
        $region41: #{tpu_custom_call.1} parent=39 // pred_check
          %p453 = pneg %p65
        $region42: #{tpu_custom_call.1} parent=39 // pred_check_branch
          %455 = sbr.rel (%p453) target = $region44
        $region43: #{tpu_custom_call.1} parent=39 // pred_region
          %s456 = sand.u32 %s55, 1
          %s457 = scalar_lea.sflag [#allocation4], %s456
          %s458 = sand.u32 %s55, 1
          %s459 = smul.addr %s458, 256
          %s460 = scalar_lea.vmem [#allocation3], %s459
          %s461 = smul.u32 2, %s38
          %s462 = smul.u32 16, %s39
          %s464 = ssub.s32 4096, 4096
          %465 = vsyncadd %s457, %s464
          %s466 = smul.addr %s461, 64
          %s467 = sadd.s32 %s462, %s466
          %s468 = smul.addr %s467, 128
          %s469 = scalar_lea.hbm %s0, %s468
          %s470 = sshll.u32 %s460, 4
          %s471 = int_to_ptr.vmem [resolvable:$true] %s470
          %476 = dma.hbm_to_vmem [thread:$0]  %s469, 4096, %s471, %s457, 8192, 2048, 128
        $region44: #{tpu_custom_call.1} parent=39 // pred_fallthru
          _
        // Predicated region
        $region45: #{tpu_custom_call.1} parent=39 // pred_check
          %p477 = pneg %p91
        $region46: #{tpu_custom_call.1} parent=39 // pred_check_branch
          %479 = sbr.rel (%p477) target = $region48
        $region47: #{tpu_custom_call.1} parent=39 // pred_region
          %s480 = sand.u32 %s31, 1
          %s481 = scalar_lea.sflag [#allocation7], %s480
          %s482 = sand.u32 %s81, 1
          %s483 = smul.addr %s482, 4096
          %s484 = scalar_lea.vmem [#allocation6], %s483
          %s485 = smul.u32 256, %s39
          %s487 = ssub.s32 65536, 65536
          %488 = vsyncadd %s481, %s487
          %s489 = smul.addr %s485, 4
          %s490 = smul.addr %s489, 64
          %s491 = scalar_lea.hbm %s1, %s490
          %s492 = sshll.u32 %s484, 4
          %s493 = int_to_ptr.vmem [resolvable:$true] %s492
          %498 = dma.hbm_to_vmem [thread:$0]  %s491, 65536, %s493, %s481, 256, 256, 16
        $region48: #{tpu_custom_call.1} parent=39 // pred_fallthru
          _
      $region40: #{tpu_custom_call.1} parent=5 // pred_fallthru
        _
      %p499 = scmp.le.s32.totalorder 1, %s31
      %p500 = scmp.lt.s32.totalorder %s31, 5
      %p501 = pnand %p499, %p500
      %p502 = pneg %p501
      // Predicated region
      $region49: #{tpu_custom_call.1} parent=5 // pred_check
        _
      $region50: #{tpu_custom_call.1} parent=5 // pred_check_branch
        %504 = sbr.rel (%p501) target = $region52
      $region51: #{tpu_custom_call.1} parent=5 // pred_region
        %s505 = ssub.s32 %s31, 1
        %s506 = sand.u32 %s58, 1
        %s507 = scalar_lea.sflag [#allocation4], %s506
        %s508 = sand.u32 %s58, 1
        %s509 = smul.addr %s508, 256
        %s510 = scalar_lea.vmem [#allocation3], %s509
        // Predicated region
        $region53: #{tpu_custom_call.1} parent=51 // pred_check
          %p511 = pneg %p71
        $region54: #{tpu_custom_call.1} parent=51 // pred_check_branch
          %513 = sbr.rel (%p511) target = $region56
        $region55: #{tpu_custom_call.1} parent=51 // pred_region
          %514 = dma.done %s507, 4096
        $region56: #{tpu_custom_call.1} parent=51 // pred_fallthru
          _
        %s515 = sand.u32 %s36, 1
        %s516 = scalar_lea.sflag [#allocation7], %s515
        %s517 = sand.u32 %s84, 1
        %s518 = smul.addr %s517, 4096
        %s519 = scalar_lea.vmem [#allocation6], %s518
        // Predicated region
        $region57: #{tpu_custom_call.1} parent=51 // pred_check
          %p520 = pneg %p97
        $region58: #{tpu_custom_call.1} parent=51 // pred_check_branch
          %522 = sbr.rel (%p520) target = $region60
        $region59: #{tpu_custom_call.1} parent=51 // pred_region
          %523 = dma.done %s516, 65536
        $region60: #{tpu_custom_call.1} parent=51 // pred_fallthru
          _
        // Predicated region
        $region61: #{tpu_custom_call.1} parent=51 // pred_check
          %p524 = pneg %p118
        $region62: #{tpu_custom_call.1} parent=51 // pred_check_branch
          %526 = sbr.rel (%p524) target = $region64
        $region63: #{tpu_custom_call.1} parent=51 // pred_region
          %527 = dma.done [#allocation7], 64
        $region64: #{tpu_custom_call.1} parent=51 // pred_fallthru
          _
        // Predicated region
        $region65: #{tpu_custom_call.1} parent=51 // pred_check
          %p528 = pneg %p139
        $region66: #{tpu_custom_call.1} parent=51 // pred_check_branch
          %530 = sbr.rel (%p528) target = $region68
        $region67: #{tpu_custom_call.1} parent=51 // pred_region
          %531 = dma.done [#allocation10], 32768
        $region68: #{tpu_custom_call.1} parent=51 // pred_fallthru
          _
        // Predicated region
        $region69: #{tpu_custom_call.1} parent=51 // pred_check
          %p532 = pneg %p160
        $region70: #{tpu_custom_call.1} parent=51 // pred_check_branch
          %534 = sbr.rel (%p532) target = $region72
        $region71: #{tpu_custom_call.1} parent=51 // pred_region
          %535 = dma.done [#allocation10], 64
        $region72: #{tpu_custom_call.1} parent=51 // pred_fallthru
          _
        // Predicated region
        $region73: #{tpu_custom_call.1} parent=51 // pred_check
          %p536 = pneg %p186
        $region74: #{tpu_custom_call.1} parent=51 // pred_check_branch
          %538 = sbr.rel (%p536) target = $region76
        $region75: #{tpu_custom_call.1} parent=51 // pred_region
          %539 = dma.done [#allocation13], 512
        $region76: #{tpu_custom_call.1} parent=51 // pred_fallthru
          _
        // Predicated region
        $region77: #{tpu_custom_call.1} parent=51 // pred_check
          %p540 = pneg %p207
        $region78: #{tpu_custom_call.1} parent=51 // pred_check_branch
          %542 = sbr.rel (%p540) target = $region80
        $region79: #{tpu_custom_call.1} parent=51 // pred_region
          %543 = dma.done [#allocation13], 32768
        $region80: #{tpu_custom_call.1} parent=51 // pred_fallthru
          _
        // Predicated region
        $region81: #{tpu_custom_call.1} parent=51 // pred_check
          %p544 = pneg %p228
        $region82: #{tpu_custom_call.1} parent=51 // pred_check_branch
          %546 = sbr.rel (%p544) target = $region84
        $region83: #{tpu_custom_call.1} parent=51 // pred_region
          %547 = dma.done [#allocation16], 128
        $region84: #{tpu_custom_call.1} parent=51 // pred_fallthru
          _
        %s548 = sand.u32 %s58, 1
        %s549 = scalar_lea.sflag [#allocation4], %s548
        %s550 = sand.u32 %s58, 1
        %s551 = smul.addr %s550, 256
        %s552 = scalar_lea.vmem [#allocation3], %s551
        %p553 = pneg %p71
        %p554 = pneg %p68
        %s555 = sand.u32 %s36, 1
        %s556 = scalar_lea.sflag [#allocation7], %s555
        %s557 = sand.u32 %s84, 1
        %s558 = smul.addr %s557, 4096
        %s559 = scalar_lea.vmem [#allocation6], %s558
        %p560 = pneg %p97
        %p561 = pneg %p94
        %p562 = pneg %p118
        %p563 = pneg %p115
        %p564 = pneg %p139
        %p565 = pneg %p136
        %p566 = pneg %p160
        %p567 = pneg %p157
        %p568 = pneg %p186
        %p569 = pneg %p183
        %p570 = pneg %p207
        %p571 = pneg %p204
        %p572 = pneg %p228
        %p573 = pneg %p225
        %p574 = pneg %p254
        %p575 = pneg %p251
        %p576 = pneg %p280
        %p577 = pneg %p277
        %p578 = pneg %p306
        %p579 = pneg %p303
        %s580 = smul.u32 2, %s40
        %p581 = scmp.lt.s32.totalorder %s580, 1
        %s582 = scalar_select %p581, %s580, 1
        %s583 = smul.addr %s582, 8
        %s584 = scalar_lea.vmem %s10, %s583
        %p585 = pneg %p332
        %p586 = pneg %p329
        %p587 = pneg %p358
        %p588 = pneg %p355
        %s589 = smul.u32 2, %s40
        %s590 = smul.u32 16, %s41
        %s591 = smul.u32 256, %s41
        %s592 = smul.u32 2, %s40
        %s593 = smul.u32 2, %s40
        %s594 = smul.u32 2, %s40
        %s595 = smul.u32 2, %s40
        %p596 = scmp.lt.s32.totalorder %s595, 1
        %s597 = scalar_select %p596, %s595, 1
        %s598 = smul.addr %s597, 8
        %s599 = scalar_lea.vmem %s10, %s598
        %s600 = smul.u32 2, %s40
        %s601 = smul.u32 2, %s40
        %s602 = smul.u32 2, %s40
        %p603 = scmp.eq.s32.totalorder %s41, 0
        // Predicated region
        $region85: #{tpu_custom_call.1} parent=51 // pred_check
          %p604 = pneg %p603
        $region86: #{tpu_custom_call.1} parent=51 // pred_check_branch
          %606 = sbr.rel (%p604) target = $region88
        $region87: #{tpu_custom_call.1} parent=51 // pred_region
          %607 = vst [vmem:[#allocation2] sm:$0xff] 0.0
          %608 = vst [vmem:[#allocation2 + $0x8] sm:$0xff] 0.0
          %609 = vst [vmem:[#allocation2 + $0x10] sm:$0xff] 0.0
          %610 = vst [vmem:[#allocation2 + $0x18] sm:$0xff] 0.0
          %611 = vst [vmem:[#allocation2 + $0x20] sm:$0xff] 0.0
          %612 = vst [vmem:[#allocation2 + $0x28] sm:$0xff] 0.0
          %613 = vst [vmem:[#allocation2 + $0x30] sm:$0xff] 0.0
          %614 = vst [vmem:[#allocation2 + $0x38] sm:$0xff] 0.0
        $region88: #{tpu_custom_call.1} parent=51 // pred_fallthru
          _
        %v615 = vld [vmem:[#allocation2] sm:$0xff]
        %v616 = vld [vmem:[#allocation2 + $0x8] sm:$0xff]
        %v617 = vld [vmem:[#allocation2 + $0x10] sm:$0xff]
        %v618 = vld [vmem:[#allocation2 + $0x18] sm:$0xff]
        %v619 = vld [vmem:[#allocation2 + $0x20] sm:$0xff]
        %v620 = vld [vmem:[#allocation2 + $0x28] sm:$0xff]
        %v621 = vld [vmem:[#allocation2 + $0x30] sm:$0xff]
        %v622 = vld [vmem:[#allocation2 + $0x38] sm:$0xff]
        %v623 = vld [vmem:[%s510] sm:$0xff]
        %v624 = vld [vmem:[%s510 + $0x8] sm:$0xff]
        %v625 = vld [vmem:[%s510 + $0x10] sm:$0xff]
        %v626 = vld [vmem:[%s510 + $0x18] sm:$0xff]
        %v627 = vld [vmem:[%s510 + $0x20] sm:$0xff]
        %v628 = vld [vmem:[%s510 + $0x28] sm:$0xff]
        %v629 = vld [vmem:[%s510 + $0x30] sm:$0xff]
        %v630 = vld [vmem:[%s510 + $0x38] sm:$0xff]
        %v631 = vld [vmem:[%s510 + $0x40] sm:$0xff]
        %v632 = vld [vmem:[%s510 + $0x48] sm:$0xff]
        %v633 = vld [vmem:[%s510 + $0x50] sm:$0xff]
        %v634 = vld [vmem:[%s510 + $0x58] sm:$0xff]
        %v635 = vld [vmem:[%s510 + $0x60] sm:$0xff]
        %v636 = vld [vmem:[%s510 + $0x68] sm:$0xff]
        %v637 = vld [vmem:[%s510 + $0x70] sm:$0xff]
        %v638 = vld [vmem:[%s510 + $0x78] sm:$0xff]
        %v639 = vld [vmem:[%s510 + $0x80] sm:$0xff]
        %v640 = vld [vmem:[%s510 + $0x88] sm:$0xff]
        %v641 = vld [vmem:[%s510 + $0x90] sm:$0xff]
        %v642 = vld [vmem:[%s510 + $0x98] sm:$0xff]
        %v643 = vld [vmem:[%s510 + $0xa0] sm:$0xff]
        %v644 = vld [vmem:[%s510 + $0xa8] sm:$0xff]
        %v645 = vld [vmem:[%s510 + $0xb0] sm:$0xff]
        %v646 = vld [vmem:[%s510 + $0xb8] sm:$0xff]
        %v647 = vld [vmem:[%s510 + $0xc0] sm:$0xff]
        %v648 = vld [vmem:[%s510 + $0xc8] sm:$0xff]
        %v649 = vld [vmem:[%s510 + $0xd0] sm:$0xff]
        %v650 = vld [vmem:[%s510 + $0xd8] sm:$0xff]
        %v651 = vld [vmem:[%s510 + $0xe0] sm:$0xff]
        %v652 = vld [vmem:[%s510 + $0xe8] sm:$0xff]
        %v653 = vld [vmem:[%s510 + $0xf0] sm:$0xff]
        %v654 = vld [vmem:[%s510 + $0xf8] sm:$0xff]
        %v655 = vpack.c.bf16 %v639, %v623
        %v656 = vpack.c.bf16 %v640, %v624
        %v657 = vpack.c.bf16 %v641, %v625
        %v658 = vpack.c.bf16 %v642, %v626
        %v659 = vpack.c.bf16 %v643, %v627
        %v660 = vpack.c.bf16 %v644, %v628
        %v661 = vpack.c.bf16 %v645, %v629
        %v662 = vpack.c.bf16 %v646, %v630
        %v663 = vpack.c.bf16 %v647, %v631
        %v664 = vpack.c.bf16 %v648, %v632
        %v665 = vpack.c.bf16 %v649, %v633
        %v666 = vpack.c.bf16 %v650, %v634
        %v667 = vpack.c.bf16 %v651, %v635
        %v668 = vpack.c.bf16 %v652, %v636
        %v669 = vpack.c.bf16 %v653, %v637
        %v670 = vpack.c.bf16 %v654, %v638
        %v671 = vld [vmem:[%s519] sm:$0xff]
        %v672 = vld [vmem:[%s519 + $0x8] sm:$0xff]
        %v673 = vld [vmem:[%s519 + $0x10] sm:$0xff]
        %v674 = vld [vmem:[%s519 + $0x18] sm:$0xff]
        %v675 = vld [vmem:[%s519 + $0x20] sm:$0xff]
        %v676 = vld [vmem:[%s519 + $0x28] sm:$0xff]
        %v677 = vld [vmem:[%s519 + $0x30] sm:$0xff]
        %v678 = vld [vmem:[%s519 + $0x38] sm:$0xff]
        %v679 = vld [vmem:[%s519 + $0x40] sm:$0xff]
        %v680 = vld [vmem:[%s519 + $0x48] sm:$0xff]
        %v681 = vld [vmem:[%s519 + $0x50] sm:$0xff]
        %v682 = vld [vmem:[%s519 + $0x58] sm:$0xff]
        %v683 = vld [vmem:[%s519 + $0x60] sm:$0xff]
        %v684 = vld [vmem:[%s519 + $0x68] sm:$0xff]
        %v685 = vld [vmem:[%s519 + $0x70] sm:$0xff]
        %v686 = vld [vmem:[%s519 + $0x78] sm:$0xff]
        %v687 = vld [vmem:[%s519 + $0x80] sm:$0xff]
        %v688 = vld [vmem:[%s519 + $0x88] sm:$0xff]
        %v689 = vld [vmem:[%s519 + $0x90] sm:$0xff]
        %v690 = vld [vmem:[%s519 + $0x98] sm:$0xff]
        %v691 = vld [vmem:[%s519 + $0xa0] sm:$0xff]
        %v692 = vld [vmem:[%s519 + $0xa8] sm:$0xff]
        %v693 = vld [vmem:[%s519 + $0xb0] sm:$0xff]
        %v694 = vld [vmem:[%s519 + $0xb8] sm:$0xff]
        %v695 = vld [vmem:[%s519 + $0xc0] sm:$0xff]
        %v696 = vld [vmem:[%s519 + $0xc8] sm:$0xff]
        %v697 = vld [vmem:[%s519 + $0xd0] sm:$0xff]
        %v698 = vld [vmem:[%s519 + $0xd8] sm:$0xff]
        %v699 = vld [vmem:[%s519 + $0xe0] sm:$0xff]
        %v700 = vld [vmem:[%s519 + $0xe8] sm:$0xff]
        %v701 = vld [vmem:[%s519 + $0xf0] sm:$0xff]
        %v702 = vld [vmem:[%s519 + $0xf8] sm:$0xff]
        %v703 = vld [vmem:[%s519 + $0x100] sm:$0xff]
        %v704 = vld [vmem:[%s519 + $0x108] sm:$0xff]
        %v705 = vld [vmem:[%s519 + $0x110] sm:$0xff]
        %v706 = vld [vmem:[%s519 + $0x118] sm:$0xff]
        %v707 = vld [vmem:[%s519 + $0x120] sm:$0xff]
        %v708 = vld [vmem:[%s519 + $0x128] sm:$0xff]
        %v709 = vld [vmem:[%s519 + $0x130] sm:$0xff]
        %v710 = vld [vmem:[%s519 + $0x138] sm:$0xff]
        %v711 = vld [vmem:[%s519 + $0x140] sm:$0xff]
        %v712 = vld [vmem:[%s519 + $0x148] sm:$0xff]
        %v713 = vld [vmem:[%s519 + $0x150] sm:$0xff]
        %v714 = vld [vmem:[%s519 + $0x158] sm:$0xff]
        %v715 = vld [vmem:[%s519 + $0x160] sm:$0xff]
        %v716 = vld [vmem:[%s519 + $0x168] sm:$0xff]
        %v717 = vld [vmem:[%s519 + $0x170] sm:$0xff]
        %v718 = vld [vmem:[%s519 + $0x178] sm:$0xff]
        %v719 = vld [vmem:[%s519 + $0x180] sm:$0xff]
        %v720 = vld [vmem:[%s519 + $0x188] sm:$0xff]
        %v721 = vld [vmem:[%s519 + $0x190] sm:$0xff]
        %v722 = vld [vmem:[%s519 + $0x198] sm:$0xff]
        %v723 = vld [vmem:[%s519 + $0x1a0] sm:$0xff]
        %v724 = vld [vmem:[%s519 + $0x1a8] sm:$0xff]
        %v725 = vld [vmem:[%s519 + $0x1b0] sm:$0xff]
        %v726 = vld [vmem:[%s519 + $0x1b8] sm:$0xff]
        %v727 = vld [vmem:[%s519 + $0x1c0] sm:$0xff]
        %v728 = vld [vmem:[%s519 + $0x1c8] sm:$0xff]
        %v729 = vld [vmem:[%s519 + $0x1d0] sm:$0xff]
        %v730 = vld [vmem:[%s519 + $0x1d8] sm:$0xff]
        %v731 = vld [vmem:[%s519 + $0x1e0] sm:$0xff]
        %v732 = vld [vmem:[%s519 + $0x1e8] sm:$0xff]
        %v733 = vld [vmem:[%s519 + $0x1f0] sm:$0xff]
        %v734 = vld [vmem:[%s519 + $0x1f8] sm:$0xff]
        %v735 = vld [vmem:[%s519 + $0x200] sm:$0xff]
        %v736 = vld [vmem:[%s519 + $0x208] sm:$0xff]
        %v737 = vld [vmem:[%s519 + $0x210] sm:$0xff]
        %v738 = vld [vmem:[%s519 + $0x218] sm:$0xff]
        %v739 = vld [vmem:[%s519 + $0x220] sm:$0xff]
        %v740 = vld [vmem:[%s519 + $0x228] sm:$0xff]
        %v741 = vld [vmem:[%s519 + $0x230] sm:$0xff]
        %v742 = vld [vmem:[%s519 + $0x238] sm:$0xff]
        %v743 = vld [vmem:[%s519 + $0x240] sm:$0xff]
        %v744 = vld [vmem:[%s519 + $0x248] sm:$0xff]
        %v745 = vld [vmem:[%s519 + $0x250] sm:$0xff]
        %v746 = vld [vmem:[%s519 + $0x258] sm:$0xff]
        %v747 = vld [vmem:[%s519 + $0x260] sm:$0xff]
        %v748 = vld [vmem:[%s519 + $0x268] sm:$0xff]
        %v749 = vld [vmem:[%s519 + $0x270] sm:$0xff]
        %v750 = vld [vmem:[%s519 + $0x278] sm:$0xff]
        %v751 = vld [vmem:[%s519 + $0x280] sm:$0xff]
        %v752 = vld [vmem:[%s519 + $0x288] sm:$0xff]
        %v753 = vld [vmem:[%s519 + $0x290] sm:$0xff]
        %v754 = vld [vmem:[%s519 + $0x298] sm:$0xff]
        %v755 = vld [vmem:[%s519 + $0x2a0] sm:$0xff]
        %v756 = vld [vmem:[%s519 + $0x2a8] sm:$0xff]
        %v757 = vld [vmem:[%s519 + $0x2b0] sm:$0xff]
        %v758 = vld [vmem:[%s519 + $0x2b8] sm:$0xff]
        %v759 = vld [vmem:[%s519 + $0x2c0] sm:$0xff]
        %v760 = vld [vmem:[%s519 + $0x2c8] sm:$0xff]
        %v761 = vld [vmem:[%s519 + $0x2d0] sm:$0xff]
        %v762 = vld [vmem:[%s519 + $0x2d8] sm:$0xff]
        %v763 = vld [vmem:[%s519 + $0x2e0] sm:$0xff]
        %v764 = vld [vmem:[%s519 + $0x2e8] sm:$0xff]
        %v765 = vld [vmem:[%s519 + $0x2f0] sm:$0xff]
        %v766 = vld [vmem:[%s519 + $0x2f8] sm:$0xff]
        %v767 = vld [vmem:[%s519 + $0x300] sm:$0xff]
        %v768 = vld [vmem:[%s519 + $0x308] sm:$0xff]
        %v769 = vld [vmem:[%s519 + $0x310] sm:$0xff]
        %v770 = vld [vmem:[%s519 + $0x318] sm:$0xff]
        %v771 = vld [vmem:[%s519 + $0x320] sm:$0xff]
        %v772 = vld [vmem:[%s519 + $0x328] sm:$0xff]
        %v773 = vld [vmem:[%s519 + $0x330] sm:$0xff]
        %v774 = vld [vmem:[%s519 + $0x338] sm:$0xff]
        %v775 = vld [vmem:[%s519 + $0x340] sm:$0xff]
        %v776 = vld [vmem:[%s519 + $0x348] sm:$0xff]
        %v777 = vld [vmem:[%s519 + $0x350] sm:$0xff]
        %v778 = vld [vmem:[%s519 + $0x358] sm:$0xff]
        %v779 = vld [vmem:[%s519 + $0x360] sm:$0xff]
        %v780 = vld [vmem:[%s519 + $0x368] sm:$0xff]
        %v781 = vld [vmem:[%s519 + $0x370] sm:$0xff]
        %v782 = vld [vmem:[%s519 + $0x378] sm:$0xff]
        %v783 = vld [vmem:[%s519 + $0x380] sm:$0xff]
        %v784 = vld [vmem:[%s519 + $0x388] sm:$0xff]
        %v785 = vld [vmem:[%s519 + $0x390] sm:$0xff]
        %v786 = vld [vmem:[%s519 + $0x398] sm:$0xff]
        %v787 = vld [vmem:[%s519 + $0x3a0] sm:$0xff]
        %v788 = vld [vmem:[%s519 + $0x3a8] sm:$0xff]
        %v789 = vld [vmem:[%s519 + $0x3b0] sm:$0xff]
        %v790 = vld [vmem:[%s519 + $0x3b8] sm:$0xff]
        %v791 = vld [vmem:[%s519 + $0x3c0] sm:$0xff]
        %v792 = vld [vmem:[%s519 + $0x3c8] sm:$0xff]
        %v793 = vld [vmem:[%s519 + $0x3d0] sm:$0xff]
        %v794 = vld [vmem:[%s519 + $0x3d8] sm:$0xff]
        %v795 = vld [vmem:[%s519 + $0x3e0] sm:$0xff]
        %v796 = vld [vmem:[%s519 + $0x3e8] sm:$0xff]
        %v797 = vld [vmem:[%s519 + $0x3f0] sm:$0xff]
        %v798 = vld [vmem:[%s519 + $0x3f8] sm:$0xff]
        %v799 = vld [vmem:[%s519 + $0x400] sm:$0xff]
        %v800 = vld [vmem:[%s519 + $0x408] sm:$0xff]
        %v801 = vld [vmem:[%s519 + $0x410] sm:$0xff]
        %v802 = vld [vmem:[%s519 + $0x418] sm:$0xff]
        %v803 = vld [vmem:[%s519 + $0x420] sm:$0xff]
        %v804 = vld [vmem:[%s519 + $0x428] sm:$0xff]
        %v805 = vld [vmem:[%s519 + $0x430] sm:$0xff]
        %v806 = vld [vmem:[%s519 + $0x438] sm:$0xff]
        %v807 = vld [vmem:[%s519 + $0x440] sm:$0xff]
        %v808 = vld [vmem:[%s519 + $0x448] sm:$0xff]
        %v809 = vld [vmem:[%s519 + $0x450] sm:$0xff]
        %v810 = vld [vmem:[%s519 + $0x458] sm:$0xff]
        %v811 = vld [vmem:[%s519 + $0x460] sm:$0xff]
        %v812 = vld [vmem:[%s519 + $0x468] sm:$0xff]
        %v813 = vld [vmem:[%s519 + $0x470] sm:$0xff]
        %v814 = vld [vmem:[%s519 + $0x478] sm:$0xff]
        %v815 = vld [vmem:[%s519 + $0x480] sm:$0xff]
        %v816 = vld [vmem:[%s519 + $0x488] sm:$0xff]
        %v817 = vld [vmem:[%s519 + $0x490] sm:$0xff]
        %v818 = vld [vmem:[%s519 + $0x498] sm:$0xff]
        %v819 = vld [vmem:[%s519 + $0x4a0] sm:$0xff]
        %v820 = vld [vmem:[%s519 + $0x4a8] sm:$0xff]
        %v821 = vld [vmem:[%s519 + $0x4b0] sm:$0xff]
        %v822 = vld [vmem:[%s519 + $0x4b8] sm:$0xff]
        %v823 = vld [vmem:[%s519 + $0x4c0] sm:$0xff]
        %v824 = vld [vmem:[%s519 + $0x4c8] sm:$0xff]
        %v825 = vld [vmem:[%s519 + $0x4d0] sm:$0xff]
        %v826 = vld [vmem:[%s519 + $0x4d8] sm:$0xff]
        %v827 = vld [vmem:[%s519 + $0x4e0] sm:$0xff]
        %v828 = vld [vmem:[%s519 + $0x4e8] sm:$0xff]
        %v829 = vld [vmem:[%s519 + $0x4f0] sm:$0xff]
        %v830 = vld [vmem:[%s519 + $0x4f8] sm:$0xff]
        %v831 = vld [vmem:[%s519 + $0x500] sm:$0xff]
        %v832 = vld [vmem:[%s519 + $0x508] sm:$0xff]
        %v833 = vld [vmem:[%s519 + $0x510] sm:$0xff]
        %v834 = vld [vmem:[%s519 + $0x518] sm:$0xff]
        %v835 = vld [vmem:[%s519 + $0x520] sm:$0xff]
        %v836 = vld [vmem:[%s519 + $0x528] sm:$0xff]
        %v837 = vld [vmem:[%s519 + $0x530] sm:$0xff]
        %v838 = vld [vmem:[%s519 + $0x538] sm:$0xff]
        %v839 = vld [vmem:[%s519 + $0x540] sm:$0xff]
        %v840 = vld [vmem:[%s519 + $0x548] sm:$0xff]
        %v841 = vld [vmem:[%s519 + $0x550] sm:$0xff]
        %v842 = vld [vmem:[%s519 + $0x558] sm:$0xff]
        %v843 = vld [vmem:[%s519 + $0x560] sm:$0xff]
        %v844 = vld [vmem:[%s519 + $0x568] sm:$0xff]
        %v845 = vld [vmem:[%s519 + $0x570] sm:$0xff]
        %v846 = vld [vmem:[%s519 + $0x578] sm:$0xff]
        %v847 = vld [vmem:[%s519 + $0x580] sm:$0xff]
        %v848 = vld [vmem:[%s519 + $0x588] sm:$0xff]
        %v849 = vld [vmem:[%s519 + $0x590] sm:$0xff]
        %v850 = vld [vmem:[%s519 + $0x598] sm:$0xff]
        %v851 = vld [vmem:[%s519 + $0x5a0] sm:$0xff]
        %v852 = vld [vmem:[%s519 + $0x5a8] sm:$0xff]
        %v853 = vld [vmem:[%s519 + $0x5b0] sm:$0xff]
        %v854 = vld [vmem:[%s519 + $0x5b8] sm:$0xff]
        %v855 = vld [vmem:[%s519 + $0x5c0] sm:$0xff]
        %v856 = vld [vmem:[%s519 + $0x5c8] sm:$0xff]
        %v857 = vld [vmem:[%s519 + $0x5d0] sm:$0xff]
        %v858 = vld [vmem:[%s519 + $0x5d8] sm:$0xff]
        %v859 = vld [vmem:[%s519 + $0x5e0] sm:$0xff]
        %v860 = vld [vmem:[%s519 + $0x5e8] sm:$0xff]
        %v861 = vld [vmem:[%s519 + $0x5f0] sm:$0xff]
        %v862 = vld [vmem:[%s519 + $0x5f8] sm:$0xff]
        %v863 = vld [vmem:[%s519 + $0x600] sm:$0xff]
        %v864 = vld [vmem:[%s519 + $0x608] sm:$0xff]
        %v865 = vld [vmem:[%s519 + $0x610] sm:$0xff]
        %v866 = vld [vmem:[%s519 + $0x618] sm:$0xff]
        %v867 = vld [vmem:[%s519 + $0x620] sm:$0xff]
        %v868 = vld [vmem:[%s519 + $0x628] sm:$0xff]
        %v869 = vld [vmem:[%s519 + $0x630] sm:$0xff]
        %v870 = vld [vmem:[%s519 + $0x638] sm:$0xff]
        %v871 = vld [vmem:[%s519 + $0x640] sm:$0xff]
        %v872 = vld [vmem:[%s519 + $0x648] sm:$0xff]
        %v873 = vld [vmem:[%s519 + $0x650] sm:$0xff]
        %v874 = vld [vmem:[%s519 + $0x658] sm:$0xff]
        %v875 = vld [vmem:[%s519 + $0x660] sm:$0xff]
        %v876 = vld [vmem:[%s519 + $0x668] sm:$0xff]
        %v877 = vld [vmem:[%s519 + $0x670] sm:$0xff]
        %v878 = vld [vmem:[%s519 + $0x678] sm:$0xff]
        %v879 = vld [vmem:[%s519 + $0x680] sm:$0xff]
        %v880 = vld [vmem:[%s519 + $0x688] sm:$0xff]
        %v881 = vld [vmem:[%s519 + $0x690] sm:$0xff]
        %v882 = vld [vmem:[%s519 + $0x698] sm:$0xff]
        %v883 = vld [vmem:[%s519 + $0x6a0] sm:$0xff]
        %v884 = vld [vmem:[%s519 + $0x6a8] sm:$0xff]
        %v885 = vld [vmem:[%s519 + $0x6b0] sm:$0xff]
        %v886 = vld [vmem:[%s519 + $0x6b8] sm:$0xff]
        %v887 = vld [vmem:[%s519 + $0x6c0] sm:$0xff]
        %v888 = vld [vmem:[%s519 + $0x6c8] sm:$0xff]
        %v889 = vld [vmem:[%s519 + $0x6d0] sm:$0xff]
        %v890 = vld [vmem:[%s519 + $0x6d8] sm:$0xff]
        %v891 = vld [vmem:[%s519 + $0x6e0] sm:$0xff]
        %v892 = vld [vmem:[%s519 + $0x6e8] sm:$0xff]
        %v893 = vld [vmem:[%s519 + $0x6f0] sm:$0xff]
        %v894 = vld [vmem:[%s519 + $0x6f8] sm:$0xff]
        %v895 = vld [vmem:[%s519 + $0x700] sm:$0xff]
        %v896 = vld [vmem:[%s519 + $0x708] sm:$0xff]
        %v897 = vld [vmem:[%s519 + $0x710] sm:$0xff]
        %v898 = vld [vmem:[%s519 + $0x718] sm:$0xff]
        %v899 = vld [vmem:[%s519 + $0x720] sm:$0xff]
        %v900 = vld [vmem:[%s519 + $0x728] sm:$0xff]
        %v901 = vld [vmem:[%s519 + $0x730] sm:$0xff]
        %v902 = vld [vmem:[%s519 + $0x738] sm:$0xff]
        %v903 = vld [vmem:[%s519 + $0x740] sm:$0xff]
        %v904 = vld [vmem:[%s519 + $0x748] sm:$0xff]
        %v905 = vld [vmem:[%s519 + $0x750] sm:$0xff]
        %v906 = vld [vmem:[%s519 + $0x758] sm:$0xff]
        %v907 = vld [vmem:[%s519 + $0x760] sm:$0xff]
        %v908 = vld [vmem:[%s519 + $0x768] sm:$0xff]
        %v909 = vld [vmem:[%s519 + $0x770] sm:$0xff]
        %v910 = vld [vmem:[%s519 + $0x778] sm:$0xff]
        %v911 = vld [vmem:[%s519 + $0x780] sm:$0xff]
        %v912 = vld [vmem:[%s519 + $0x788] sm:$0xff]
        %v913 = vld [vmem:[%s519 + $0x790] sm:$0xff]
        %v914 = vld [vmem:[%s519 + $0x798] sm:$0xff]
        %v915 = vld [vmem:[%s519 + $0x7a0] sm:$0xff]
        %v916 = vld [vmem:[%s519 + $0x7a8] sm:$0xff]
        %v917 = vld [vmem:[%s519 + $0x7b0] sm:$0xff]
        %v918 = vld [vmem:[%s519 + $0x7b8] sm:$0xff]
        %v919 = vld [vmem:[%s519 + $0x7c0] sm:$0xff]
        %v920 = vld [vmem:[%s519 + $0x7c8] sm:$0xff]
        %v921 = vld [vmem:[%s519 + $0x7d0] sm:$0xff]
        %v922 = vld [vmem:[%s519 + $0x7d8] sm:$0xff]
        %v923 = vld [vmem:[%s519 + $0x7e0] sm:$0xff]
        %v924 = vld [vmem:[%s519 + $0x7e8] sm:$0xff]
        %v925 = vld [vmem:[%s519 + $0x7f0] sm:$0xff]
        %v926 = vld [vmem:[%s519 + $0x7f8] sm:$0xff]
        %v927 = vld [vmem:[%s519 + $0x800] sm:$0xff]
        %v928 = vld [vmem:[%s519 + $0x808] sm:$0xff]
        %v929 = vld [vmem:[%s519 + $0x810] sm:$0xff]
        %v930 = vld [vmem:[%s519 + $0x818] sm:$0xff]
        %v931 = vld [vmem:[%s519 + $0x820] sm:$0xff]
        %v932 = vld [vmem:[%s519 + $0x828] sm:$0xff]
        %v933 = vld [vmem:[%s519 + $0x830] sm:$0xff]
        %v934 = vld [vmem:[%s519 + $0x838] sm:$0xff]
        %v935 = vld [vmem:[%s519 + $0x840] sm:$0xff]
        %v936 = vld [vmem:[%s519 + $0x848] sm:$0xff]
        %v937 = vld [vmem:[%s519 + $0x850] sm:$0xff]
        %v938 = vld [vmem:[%s519 + $0x858] sm:$0xff]
        %v939 = vld [vmem:[%s519 + $0x860] sm:$0xff]
        %v940 = vld [vmem:[%s519 + $0x868] sm:$0xff]
        %v941 = vld [vmem:[%s519 + $0x870] sm:$0xff]
        %v942 = vld [vmem:[%s519 + $0x878] sm:$0xff]
        %v943 = vld [vmem:[%s519 + $0x880] sm:$0xff]
        %v944 = vld [vmem:[%s519 + $0x888] sm:$0xff]
        %v945 = vld [vmem:[%s519 + $0x890] sm:$0xff]
        %v946 = vld [vmem:[%s519 + $0x898] sm:$0xff]
        %v947 = vld [vmem:[%s519 + $0x8a0] sm:$0xff]
        %v948 = vld [vmem:[%s519 + $0x8a8] sm:$0xff]
        %v949 = vld [vmem:[%s519 + $0x8b0] sm:$0xff]
        %v950 = vld [vmem:[%s519 + $0x8b8] sm:$0xff]
        %v951 = vld [vmem:[%s519 + $0x8c0] sm:$0xff]
        %v952 = vld [vmem:[%s519 + $0x8c8] sm:$0xff]
        %v953 = vld [vmem:[%s519 + $0x8d0] sm:$0xff]
        %v954 = vld [vmem:[%s519 + $0x8d8] sm:$0xff]
        %v955 = vld [vmem:[%s519 + $0x8e0] sm:$0xff]
        %v956 = vld [vmem:[%s519 + $0x8e8] sm:$0xff]
        %v957 = vld [vmem:[%s519 + $0x8f0] sm:$0xff]
        %v958 = vld [vmem:[%s519 + $0x8f8] sm:$0xff]
        %v959 = vld [vmem:[%s519 + $0x900] sm:$0xff]
        %v960 = vld [vmem:[%s519 + $0x908] sm:$0xff]
        %v961 = vld [vmem:[%s519 + $0x910] sm:$0xff]
        %v962 = vld [vmem:[%s519 + $0x918] sm:$0xff]
        %v963 = vld [vmem:[%s519 + $0x920] sm:$0xff]
        %v964 = vld [vmem:[%s519 + $0x928] sm:$0xff]
        %v965 = vld [vmem:[%s519 + $0x930] sm:$0xff]
        %v966 = vld [vmem:[%s519 + $0x938] sm:$0xff]
        %v967 = vld [vmem:[%s519 + $0x940] sm:$0xff]
        %v968 = vld [vmem:[%s519 + $0x948] sm:$0xff]
        %v969 = vld [vmem:[%s519 + $0x950] sm:$0xff]
        %v970 = vld [vmem:[%s519 + $0x958] sm:$0xff]
        %v971 = vld [vmem:[%s519 + $0x960] sm:$0xff]
        %v972 = vld [vmem:[%s519 + $0x968] sm:$0xff]
        %v973 = vld [vmem:[%s519 + $0x970] sm:$0xff]
        %v974 = vld [vmem:[%s519 + $0x978] sm:$0xff]
        %v975 = vld [vmem:[%s519 + $0x980] sm:$0xff]
        %v976 = vld [vmem:[%s519 + $0x988] sm:$0xff]
        %v977 = vld [vmem:[%s519 + $0x990] sm:$0xff]
        %v978 = vld [vmem:[%s519 + $0x998] sm:$0xff]
        %v979 = vld [vmem:[%s519 + $0x9a0] sm:$0xff]
        %v980 = vld [vmem:[%s519 + $0x9a8] sm:$0xff]
        %v981 = vld [vmem:[%s519 + $0x9b0] sm:$0xff]
        %v982 = vld [vmem:[%s519 + $0x9b8] sm:$0xff]
        %v983 = vld [vmem:[%s519 + $0x9c0] sm:$0xff]
        %v984 = vld [vmem:[%s519 + $0x9c8] sm:$0xff]
        %v985 = vld [vmem:[%s519 + $0x9d0] sm:$0xff]
        %v986 = vld [vmem:[%s519 + $0x9d8] sm:$0xff]
        %v987 = vld [vmem:[%s519 + $0x9e0] sm:$0xff]
        %v988 = vld [vmem:[%s519 + $0x9e8] sm:$0xff]
        %v989 = vld [vmem:[%s519 + $0x9f0] sm:$0xff]
        %v990 = vld [vmem:[%s519 + $0x9f8] sm:$0xff]
        %v991 = vld [vmem:[%s519 + $0xa00] sm:$0xff]
        %v992 = vld [vmem:[%s519 + $0xa08] sm:$0xff]
        %v993 = vld [vmem:[%s519 + $0xa10] sm:$0xff]
        %v994 = vld [vmem:[%s519 + $0xa18] sm:$0xff]
        %v995 = vld [vmem:[%s519 + $0xa20] sm:$0xff]
        %v996 = vld [vmem:[%s519 + $0xa28] sm:$0xff]
        %v997 = vld [vmem:[%s519 + $0xa30] sm:$0xff]
        %v998 = vld [vmem:[%s519 + $0xa38] sm:$0xff]
        %v999 = vld [vmem:[%s519 + $0xa40] sm:$0xff]
        %v1000 = vld [vmem:[%s519 + $0xa48] sm:$0xff]
        %v1001 = vld [vmem:[%s519 + $0xa50] sm:$0xff]
        %v1002 = vld [vmem:[%s519 + $0xa58] sm:$0xff]
        %v1003 = vld [vmem:[%s519 + $0xa60] sm:$0xff]
        %v1004 = vld [vmem:[%s519 + $0xa68] sm:$0xff]
        %v1005 = vld [vmem:[%s519 + $0xa70] sm:$0xff]
        %v1006 = vld [vmem:[%s519 + $0xa78] sm:$0xff]
        %v1007 = vld [vmem:[%s519 + $0xa80] sm:$0xff]
        %v1008 = vld [vmem:[%s519 + $0xa88] sm:$0xff]
        %v1009 = vld [vmem:[%s519 + $0xa90] sm:$0xff]
        %v1010 = vld [vmem:[%s519 + $0xa98] sm:$0xff]
        %v1011 = vld [vmem:[%s519 + $0xaa0] sm:$0xff]
        %v1012 = vld [vmem:[%s519 + $0xaa8] sm:$0xff]
        %v1013 = vld [vmem:[%s519 + $0xab0] sm:$0xff]
        %v1014 = vld [vmem:[%s519 + $0xab8] sm:$0xff]
        %v1015 = vld [vmem:[%s519 + $0xac0] sm:$0xff]
        %v1016 = vld [vmem:[%s519 + $0xac8] sm:$0xff]
        %v1017 = vld [vmem:[%s519 + $0xad0] sm:$0xff]
        %v1018 = vld [vmem:[%s519 + $0xad8] sm:$0xff]
        %v1019 = vld [vmem:[%s519 + $0xae0] sm:$0xff]
        %v1020 = vld [vmem:[%s519 + $0xae8] sm:$0xff]
        %v1021 = vld [vmem:[%s519 + $0xaf0] sm:$0xff]
        %v1022 = vld [vmem:[%s519 + $0xaf8] sm:$0xff]
        %v1023 = vld [vmem:[%s519 + $0xb00] sm:$0xff]
        %v1024 = vld [vmem:[%s519 + $0xb08] sm:$0xff]
        %v1025 = vld [vmem:[%s519 + $0xb10] sm:$0xff]
        %v1026 = vld [vmem:[%s519 + $0xb18] sm:$0xff]
        %v1027 = vld [vmem:[%s519 + $0xb20] sm:$0xff]
        %v1028 = vld [vmem:[%s519 + $0xb28] sm:$0xff]
        %v1029 = vld [vmem:[%s519 + $0xb30] sm:$0xff]
        %v1030 = vld [vmem:[%s519 + $0xb38] sm:$0xff]
        %v1031 = vld [vmem:[%s519 + $0xb40] sm:$0xff]
        %v1032 = vld [vmem:[%s519 + $0xb48] sm:$0xff]
        %v1033 = vld [vmem:[%s519 + $0xb50] sm:$0xff]
        %v1034 = vld [vmem:[%s519 + $0xb58] sm:$0xff]
        %v1035 = vld [vmem:[%s519 + $0xb60] sm:$0xff]
        %v1036 = vld [vmem:[%s519 + $0xb68] sm:$0xff]
        %v1037 = vld [vmem:[%s519 + $0xb70] sm:$0xff]
        %v1038 = vld [vmem:[%s519 + $0xb78] sm:$0xff]
        %v1039 = vld [vmem:[%s519 + $0xb80] sm:$0xff]
        %v1040 = vld [vmem:[%s519 + $0xb88] sm:$0xff]
        %v1041 = vld [vmem:[%s519 + $0xb90] sm:$0xff]
        %v1042 = vld [vmem:[%s519 + $0xb98] sm:$0xff]
        %v1043 = vld [vmem:[%s519 + $0xba0] sm:$0xff]
        %v1044 = vld [vmem:[%s519 + $0xba8] sm:$0xff]
        %v1045 = vld [vmem:[%s519 + $0xbb0] sm:$0xff]
        %v1046 = vld [vmem:[%s519 + $0xbb8] sm:$0xff]
        %v1047 = vld [vmem:[%s519 + $0xbc0] sm:$0xff]
        %v1048 = vld [vmem:[%s519 + $0xbc8] sm:$0xff]
        %v1049 = vld [vmem:[%s519 + $0xbd0] sm:$0xff]
        %v1050 = vld [vmem:[%s519 + $0xbd8] sm:$0xff]
        %v1051 = vld [vmem:[%s519 + $0xbe0] sm:$0xff]
        %v1052 = vld [vmem:[%s519 + $0xbe8] sm:$0xff]
        %v1053 = vld [vmem:[%s519 + $0xbf0] sm:$0xff]
        %v1054 = vld [vmem:[%s519 + $0xbf8] sm:$0xff]
        %v1055 = vld [vmem:[%s519 + $0xc00] sm:$0xff]
        %v1056 = vld [vmem:[%s519 + $0xc08] sm:$0xff]
        %v1057 = vld [vmem:[%s519 + $0xc10] sm:$0xff]
        %v1058 = vld [vmem:[%s519 + $0xc18] sm:$0xff]
        %v1059 = vld [vmem:[%s519 + $0xc20] sm:$0xff]
        %v1060 = vld [vmem:[%s519 + $0xc28] sm:$0xff]
        %v1061 = vld [vmem:[%s519 + $0xc30] sm:$0xff]
        %v1062 = vld [vmem:[%s519 + $0xc38] sm:$0xff]
        %v1063 = vld [vmem:[%s519 + $0xc40] sm:$0xff]
        %v1064 = vld [vmem:[%s519 + $0xc48] sm:$0xff]
        %v1065 = vld [vmem:[%s519 + $0xc50] sm:$0xff]
        %v1066 = vld [vmem:[%s519 + $0xc58] sm:$0xff]
        %v1067 = vld [vmem:[%s519 + $0xc60] sm:$0xff]
        %v1068 = vld [vmem:[%s519 + $0xc68] sm:$0xff]
        %v1069 = vld [vmem:[%s519 + $0xc70] sm:$0xff]
        %v1070 = vld [vmem:[%s519 + $0xc78] sm:$0xff]
        %v1071 = vld [vmem:[%s519 + $0xc80] sm:$0xff]
        %v1072 = vld [vmem:[%s519 + $0xc88] sm:$0xff]
        %v1073 = vld [vmem:[%s519 + $0xc90] sm:$0xff]
        %v1074 = vld [vmem:[%s519 + $0xc98] sm:$0xff]
        %v1075 = vld [vmem:[%s519 + $0xca0] sm:$0xff]
        %v1076 = vld [vmem:[%s519 + $0xca8] sm:$0xff]
        %v1077 = vld [vmem:[%s519 + $0xcb0] sm:$0xff]
        %v1078 = vld [vmem:[%s519 + $0xcb8] sm:$0xff]
        %v1079 = vld [vmem:[%s519 + $0xcc0] sm:$0xff]
        %v1080 = vld [vmem:[%s519 + $0xcc8] sm:$0xff]
        %v1081 = vld [vmem:[%s519 + $0xcd0] sm:$0xff]
        %v1082 = vld [vmem:[%s519 + $0xcd8] sm:$0xff]
        %v1083 = vld [vmem:[%s519 + $0xce0] sm:$0xff]
        %v1084 = vld [vmem:[%s519 + $0xce8] sm:$0xff]
        %v1085 = vld [vmem:[%s519 + $0xcf0] sm:$0xff]
        %v1086 = vld [vmem:[%s519 + $0xcf8] sm:$0xff]
        %v1087 = vld [vmem:[%s519 + $0xd00] sm:$0xff]
        %v1088 = vld [vmem:[%s519 + $0xd08] sm:$0xff]
        %v1089 = vld [vmem:[%s519 + $0xd10] sm:$0xff]
        %v1090 = vld [vmem:[%s519 + $0xd18] sm:$0xff]
        %v1091 = vld [vmem:[%s519 + $0xd20] sm:$0xff]
        %v1092 = vld [vmem:[%s519 + $0xd28] sm:$0xff]
        %v1093 = vld [vmem:[%s519 + $0xd30] sm:$0xff]
        %v1094 = vld [vmem:[%s519 + $0xd38] sm:$0xff]
        %v1095 = vld [vmem:[%s519 + $0xd40] sm:$0xff]
        %v1096 = vld [vmem:[%s519 + $0xd48] sm:$0xff]
        %v1097 = vld [vmem:[%s519 + $0xd50] sm:$0xff]
        %v1098 = vld [vmem:[%s519 + $0xd58] sm:$0xff]
        %v1099 = vld [vmem:[%s519 + $0xd60] sm:$0xff]
        %v1100 = vld [vmem:[%s519 + $0xd68] sm:$0xff]
        %v1101 = vld [vmem:[%s519 + $0xd70] sm:$0xff]
        %v1102 = vld [vmem:[%s519 + $0xd78] sm:$0xff]
        %v1103 = vld [vmem:[%s519 + $0xd80] sm:$0xff]
        %v1104 = vld [vmem:[%s519 + $0xd88] sm:$0xff]
        %v1105 = vld [vmem:[%s519 + $0xd90] sm:$0xff]
        %v1106 = vld [vmem:[%s519 + $0xd98] sm:$0xff]
        %v1107 = vld [vmem:[%s519 + $0xda0] sm:$0xff]
        %v1108 = vld [vmem:[%s519 + $0xda8] sm:$0xff]
        %v1109 = vld [vmem:[%s519 + $0xdb0] sm:$0xff]
        %v1110 = vld [vmem:[%s519 + $0xdb8] sm:$0xff]
        %v1111 = vld [vmem:[%s519 + $0xdc0] sm:$0xff]
        %v1112 = vld [vmem:[%s519 + $0xdc8] sm:$0xff]
        %v1113 = vld [vmem:[%s519 + $0xdd0] sm:$0xff]
        %v1114 = vld [vmem:[%s519 + $0xdd8] sm:$0xff]
        %v1115 = vld [vmem:[%s519 + $0xde0] sm:$0xff]
        %v1116 = vld [vmem:[%s519 + $0xde8] sm:$0xff]
        %v1117 = vld [vmem:[%s519 + $0xdf0] sm:$0xff]
        %v1118 = vld [vmem:[%s519 + $0xdf8] sm:$0xff]
        %v1119 = vld [vmem:[%s519 + $0xe00] sm:$0xff]
        %v1120 = vld [vmem:[%s519 + $0xe08] sm:$0xff]
        %v1121 = vld [vmem:[%s519 + $0xe10] sm:$0xff]
        %v1122 = vld [vmem:[%s519 + $0xe18] sm:$0xff]
        %v1123 = vld [vmem:[%s519 + $0xe20] sm:$0xff]
        %v1124 = vld [vmem:[%s519 + $0xe28] sm:$0xff]
        %v1125 = vld [vmem:[%s519 + $0xe30] sm:$0xff]
        %v1126 = vld [vmem:[%s519 + $0xe38] sm:$0xff]
        %v1127 = vld [vmem:[%s519 + $0xe40] sm:$0xff]
        %v1128 = vld [vmem:[%s519 + $0xe48] sm:$0xff]
        %v1129 = vld [vmem:[%s519 + $0xe50] sm:$0xff]
        %v1130 = vld [vmem:[%s519 + $0xe58] sm:$0xff]
        %v1131 = vld [vmem:[%s519 + $0xe60] sm:$0xff]
        %v1132 = vld [vmem:[%s519 + $0xe68] sm:$0xff]
        %v1133 = vld [vmem:[%s519 + $0xe70] sm:$0xff]
        %v1134 = vld [vmem:[%s519 + $0xe78] sm:$0xff]
        %v1135 = vld [vmem:[%s519 + $0xe80] sm:$0xff]
        %v1136 = vld [vmem:[%s519 + $0xe88] sm:$0xff]
        %v1137 = vld [vmem:[%s519 + $0xe90] sm:$0xff]
        %v1138 = vld [vmem:[%s519 + $0xe98] sm:$0xff]
        %v1139 = vld [vmem:[%s519 + $0xea0] sm:$0xff]
        %v1140 = vld [vmem:[%s519 + $0xea8] sm:$0xff]
        %v1141 = vld [vmem:[%s519 + $0xeb0] sm:$0xff]
        %v1142 = vld [vmem:[%s519 + $0xeb8] sm:$0xff]
        %v1143 = vld [vmem:[%s519 + $0xec0] sm:$0xff]
        %v1144 = vld [vmem:[%s519 + $0xec8] sm:$0xff]
        %v1145 = vld [vmem:[%s519 + $0xed0] sm:$0xff]
        %v1146 = vld [vmem:[%s519 + $0xed8] sm:$0xff]
        %v1147 = vld [vmem:[%s519 + $0xee0] sm:$0xff]
        %v1148 = vld [vmem:[%s519 + $0xee8] sm:$0xff]
        %v1149 = vld [vmem:[%s519 + $0xef0] sm:$0xff]
        %v1150 = vld [vmem:[%s519 + $0xef8] sm:$0xff]
        %v1151 = vld [vmem:[%s519 + $0xf00] sm:$0xff]
        %v1152 = vld [vmem:[%s519 + $0xf08] sm:$0xff]
        %v1153 = vld [vmem:[%s519 + $0xf10] sm:$0xff]
        %v1154 = vld [vmem:[%s519 + $0xf18] sm:$0xff]
        %v1155 = vld [vmem:[%s519 + $0xf20] sm:$0xff]
        %v1156 = vld [vmem:[%s519 + $0xf28] sm:$0xff]
        %v1157 = vld [vmem:[%s519 + $0xf30] sm:$0xff]
        %v1158 = vld [vmem:[%s519 + $0xf38] sm:$0xff]
        %v1159 = vld [vmem:[%s519 + $0xf40] sm:$0xff]
        %v1160 = vld [vmem:[%s519 + $0xf48] sm:$0xff]
        %v1161 = vld [vmem:[%s519 + $0xf50] sm:$0xff]
        %v1162 = vld [vmem:[%s519 + $0xf58] sm:$0xff]
        %v1163 = vld [vmem:[%s519 + $0xf60] sm:$0xff]
        %v1164 = vld [vmem:[%s519 + $0xf68] sm:$0xff]
        %v1165 = vld [vmem:[%s519 + $0xf70] sm:$0xff]
        %v1166 = vld [vmem:[%s519 + $0xf78] sm:$0xff]
        %v1167 = vld [vmem:[%s519 + $0xf80] sm:$0xff]
        %v1168 = vld [vmem:[%s519 + $0xf88] sm:$0xff]
        %v1169 = vld [vmem:[%s519 + $0xf90] sm:$0xff]
        %v1170 = vld [vmem:[%s519 + $0xf98] sm:$0xff]
        %v1171 = vld [vmem:[%s519 + $0xfa0] sm:$0xff]
        %v1172 = vld [vmem:[%s519 + $0xfa8] sm:$0xff]
        %v1173 = vld [vmem:[%s519 + $0xfb0] sm:$0xff]
        %v1174 = vld [vmem:[%s519 + $0xfb8] sm:$0xff]
        %v1175 = vld [vmem:[%s519 + $0xfc0] sm:$0xff]
        %v1176 = vld [vmem:[%s519 + $0xfc8] sm:$0xff]
        %v1177 = vld [vmem:[%s519 + $0xfd0] sm:$0xff]
        %v1178 = vld [vmem:[%s519 + $0xfd8] sm:$0xff]
        %v1179 = vld [vmem:[%s519 + $0xfe0] sm:$0xff]
        %v1180 = vld [vmem:[%s519 + $0xfe8] sm:$0xff]
        %v1181 = vld [vmem:[%s519 + $0xff0] sm:$0xff]
        %v1182 = vld [vmem:[%s519 + $0xff8] sm:$0xff]
        %v1695 = vunpack.c.l.b16 %v671
        %v1696 = vunpack.c.h.b16 %v671
        %v1697 = vunpack.c.l.b16 %v672
        %v1698 = vunpack.c.h.b16 %v672
        %v1699 = vunpack.c.l.b16 %v673
        %v1700 = vunpack.c.h.b16 %v673
        %v1701 = vunpack.c.l.b16 %v674
        %v1702 = vunpack.c.h.b16 %v674
        %v1703 = vunpack.c.l.b16 %v675
        %v1704 = vunpack.c.h.b16 %v675
        %v1705 = vunpack.c.l.b16 %v676
        %v1706 = vunpack.c.h.b16 %v676
        %v1707 = vunpack.c.l.b16 %v677
        %v1708 = vunpack.c.h.b16 %v677
        %v1709 = vunpack.c.l.b16 %v678
        %v1710 = vunpack.c.h.b16 %v678
        %v1711 = vunpack.c.l.b16 %v679
        %v1712 = vunpack.c.h.b16 %v679
        %v1713 = vunpack.c.l.b16 %v680
        %v1714 = vunpack.c.h.b16 %v680
        %v1715 = vunpack.c.l.b16 %v681
        %v1716 = vunpack.c.h.b16 %v681
        %v1717 = vunpack.c.l.b16 %v682
        %v1718 = vunpack.c.h.b16 %v682
        %v1719 = vunpack.c.l.b16 %v683
        %v1720 = vunpack.c.h.b16 %v683
        %v1721 = vunpack.c.l.b16 %v684
        %v1722 = vunpack.c.h.b16 %v684
        %v1723 = vunpack.c.l.b16 %v685
        %v1724 = vunpack.c.h.b16 %v685
        %v1725 = vunpack.c.l.b16 %v686
        %v1726 = vunpack.c.h.b16 %v686
        %v1727 = vunpack.c.l.b16 %v687
        %v1728 = vunpack.c.h.b16 %v687
        %v1729 = vunpack.c.l.b16 %v688
        %v1730 = vunpack.c.h.b16 %v688
        %v1731 = vunpack.c.l.b16 %v689
        %v1732 = vunpack.c.h.b16 %v689
        %v1733 = vunpack.c.l.b16 %v690
        %v1734 = vunpack.c.h.b16 %v690
        %v1735 = vunpack.c.l.b16 %v691
        %v1736 = vunpack.c.h.b16 %v691
        %v1737 = vunpack.c.l.b16 %v692
        %v1738 = vunpack.c.h.b16 %v692
        %v1739 = vunpack.c.l.b16 %v693
        %v1740 = vunpack.c.h.b16 %v693
        %v1741 = vunpack.c.l.b16 %v694
        %v1742 = vunpack.c.h.b16 %v694
        %v1743 = vunpack.c.l.b16 %v695
        %v1744 = vunpack.c.h.b16 %v695
        %v1745 = vunpack.c.l.b16 %v696
        %v1746 = vunpack.c.h.b16 %v696
        %v1747 = vunpack.c.l.b16 %v697
        %v1748 = vunpack.c.h.b16 %v697
        %v1749 = vunpack.c.l.b16 %v698
        %v1750 = vunpack.c.h.b16 %v698
        %v1751 = vunpack.c.l.b16 %v699
        %v1752 = vunpack.c.h.b16 %v699
        %v1753 = vunpack.c.l.b16 %v700
        %v1754 = vunpack.c.h.b16 %v700
        %v1755 = vunpack.c.l.b16 %v701
        %v1756 = vunpack.c.h.b16 %v701
        %v1757 = vunpack.c.l.b16 %v702
        %v1758 = vunpack.c.h.b16 %v702
        %v1759 = vunpack.c.l.b16 %v703
        %v1760 = vunpack.c.h.b16 %v703
        %v1761 = vunpack.c.l.b16 %v704
        %v1762 = vunpack.c.h.b16 %v704
        %v1763 = vunpack.c.l.b16 %v705
        %v1764 = vunpack.c.h.b16 %v705
        %v1765 = vunpack.c.l.b16 %v706
        %v1766 = vunpack.c.h.b16 %v706
        %v1767 = vunpack.c.l.b16 %v707
        %v1768 = vunpack.c.h.b16 %v707
        %v1769 = vunpack.c.l.b16 %v708
        %v1770 = vunpack.c.h.b16 %v708
        %v1771 = vunpack.c.l.b16 %v709
        %v1772 = vunpack.c.h.b16 %v709
        %v1773 = vunpack.c.l.b16 %v710
        %v1774 = vunpack.c.h.b16 %v710
        %v1775 = vunpack.c.l.b16 %v711
        %v1776 = vunpack.c.h.b16 %v711
        %v1777 = vunpack.c.l.b16 %v712
        %v1778 = vunpack.c.h.b16 %v712
        %v1779 = vunpack.c.l.b16 %v713
        %v1780 = vunpack.c.h.b16 %v713
        %v1781 = vunpack.c.l.b16 %v714
        %v1782 = vunpack.c.h.b16 %v714
        %v1783 = vunpack.c.l.b16 %v715
        %v1784 = vunpack.c.h.b16 %v715
        %v1785 = vunpack.c.l.b16 %v716
        %v1786 = vunpack.c.h.b16 %v716
        %v1787 = vunpack.c.l.b16 %v717
        %v1788 = vunpack.c.h.b16 %v717
        %v1789 = vunpack.c.l.b16 %v718
        %v1790 = vunpack.c.h.b16 %v718
        %v1791 = vunpack.c.l.b16 %v719
        %v1792 = vunpack.c.h.b16 %v719
        %v1793 = vunpack.c.l.b16 %v720
        %v1794 = vunpack.c.h.b16 %v720
        %v1795 = vunpack.c.l.b16 %v721
        %v1796 = vunpack.c.h.b16 %v721
        %v1797 = vunpack.c.l.b16 %v722
        %v1798 = vunpack.c.h.b16 %v722
        %v1799 = vunpack.c.l.b16 %v723
        %v1800 = vunpack.c.h.b16 %v723
        %v1801 = vunpack.c.l.b16 %v724
        %v1802 = vunpack.c.h.b16 %v724
        %v1803 = vunpack.c.l.b16 %v725
        %v1804 = vunpack.c.h.b16 %v725
        %v1805 = vunpack.c.l.b16 %v726
        %v1806 = vunpack.c.h.b16 %v726
        %v1807 = vunpack.c.l.b16 %v727
        %v1808 = vunpack.c.h.b16 %v727
        %v1809 = vunpack.c.l.b16 %v728
        %v1810 = vunpack.c.h.b16 %v728
        %v1811 = vunpack.c.l.b16 %v729
        %v1812 = vunpack.c.h.b16 %v729
        %v1813 = vunpack.c.l.b16 %v730
        %v1814 = vunpack.c.h.b16 %v730
        %v1815 = vunpack.c.l.b16 %v731
        %v1816 = vunpack.c.h.b16 %v731
        %v1817 = vunpack.c.l.b16 %v732
        %v1818 = vunpack.c.h.b16 %v732
        %v1819 = vunpack.c.l.b16 %v733
        %v1820 = vunpack.c.h.b16 %v733
        %v1821 = vunpack.c.l.b16 %v734
        %v1822 = vunpack.c.h.b16 %v734
        %v1823 = vunpack.c.l.b16 %v735
        %v1824 = vunpack.c.h.b16 %v735
        %v1825 = vunpack.c.l.b16 %v736
        %v1826 = vunpack.c.h.b16 %v736
        %v1827 = vunpack.c.l.b16 %v737
        %v1828 = vunpack.c.h.b16 %v737
        %v1829 = vunpack.c.l.b16 %v738
        %v1830 = vunpack.c.h.b16 %v738
        %v1831 = vunpack.c.l.b16 %v739
        %v1832 = vunpack.c.h.b16 %v739
        %v1833 = vunpack.c.l.b16 %v740
        %v1834 = vunpack.c.h.b16 %v740
        %v1835 = vunpack.c.l.b16 %v741
        %v1836 = vunpack.c.h.b16 %v741
        %v1837 = vunpack.c.l.b16 %v742
        %v1838 = vunpack.c.h.b16 %v742
        %v1839 = vunpack.c.l.b16 %v743
        %v1840 = vunpack.c.h.b16 %v743
        %v1841 = vunpack.c.l.b16 %v744
        %v1842 = vunpack.c.h.b16 %v744
        %v1843 = vunpack.c.l.b16 %v745
        %v1844 = vunpack.c.h.b16 %v745
        %v1845 = vunpack.c.l.b16 %v746
        %v1846 = vunpack.c.h.b16 %v746
        %v1847 = vunpack.c.l.b16 %v747
        %v1848 = vunpack.c.h.b16 %v747
        %v1849 = vunpack.c.l.b16 %v748
        %v1850 = vunpack.c.h.b16 %v748
        %v1851 = vunpack.c.l.b16 %v749
        %v1852 = vunpack.c.h.b16 %v749
        %v1853 = vunpack.c.l.b16 %v750
        %v1854 = vunpack.c.h.b16 %v750
        %v1855 = vunpack.c.l.b16 %v751
        %v1856 = vunpack.c.h.b16 %v751
        %v1857 = vunpack.c.l.b16 %v752
        %v1858 = vunpack.c.h.b16 %v752
        %v1859 = vunpack.c.l.b16 %v753
        %v1860 = vunpack.c.h.b16 %v753
        %v1861 = vunpack.c.l.b16 %v754
        %v1862 = vunpack.c.h.b16 %v754
        %v1863 = vunpack.c.l.b16 %v755
        %v1864 = vunpack.c.h.b16 %v755
        %v1865 = vunpack.c.l.b16 %v756
        %v1866 = vunpack.c.h.b16 %v756
        %v1867 = vunpack.c.l.b16 %v757
        %v1868 = vunpack.c.h.b16 %v757
        %v1869 = vunpack.c.l.b16 %v758
        %v1870 = vunpack.c.h.b16 %v758
        %v1871 = vunpack.c.l.b16 %v759
        %v1872 = vunpack.c.h.b16 %v759
        %v1873 = vunpack.c.l.b16 %v760
        %v1874 = vunpack.c.h.b16 %v760
        %v1875 = vunpack.c.l.b16 %v761
        %v1876 = vunpack.c.h.b16 %v761
        %v1877 = vunpack.c.l.b16 %v762
        %v1878 = vunpack.c.h.b16 %v762
        %v1879 = vunpack.c.l.b16 %v763
        %v1880 = vunpack.c.h.b16 %v763
        %v1881 = vunpack.c.l.b16 %v764
        %v1882 = vunpack.c.h.b16 %v764
        %v1883 = vunpack.c.l.b16 %v765
        %v1884 = vunpack.c.h.b16 %v765
        %v1885 = vunpack.c.l.b16 %v766
        %v1886 = vunpack.c.h.b16 %v766
        %v1887 = vunpack.c.l.b16 %v767
        %v1888 = vunpack.c.h.b16 %v767
        %v1889 = vunpack.c.l.b16 %v768
        %v1890 = vunpack.c.h.b16 %v768
        %v1891 = vunpack.c.l.b16 %v769
        %v1892 = vunpack.c.h.b16 %v769
        %v1893 = vunpack.c.l.b16 %v770
        %v1894 = vunpack.c.h.b16 %v770
        %v1895 = vunpack.c.l.b16 %v771
        %v1896 = vunpack.c.h.b16 %v771
        %v1897 = vunpack.c.l.b16 %v772
        %v1898 = vunpack.c.h.b16 %v772
        %v1899 = vunpack.c.l.b16 %v773
        %v1900 = vunpack.c.h.b16 %v773
        %v1901 = vunpack.c.l.b16 %v774
        %v1902 = vunpack.c.h.b16 %v774
        %v1903 = vunpack.c.l.b16 %v775
        %v1904 = vunpack.c.h.b16 %v775
        %v1905 = vunpack.c.l.b16 %v776
        %v1906 = vunpack.c.h.b16 %v776
        %v1907 = vunpack.c.l.b16 %v777
        %v1908 = vunpack.c.h.b16 %v777
        %v1909 = vunpack.c.l.b16 %v778
        %v1910 = vunpack.c.h.b16 %v778
        %v1911 = vunpack.c.l.b16 %v779
        %v1912 = vunpack.c.h.b16 %v779
        %v1913 = vunpack.c.l.b16 %v780
        %v1914 = vunpack.c.h.b16 %v780
        %v1915 = vunpack.c.l.b16 %v781
        %v1916 = vunpack.c.h.b16 %v781
        %v1917 = vunpack.c.l.b16 %v782
        %v1918 = vunpack.c.h.b16 %v782
        %v1919 = vunpack.c.l.b16 %v783
        %v1920 = vunpack.c.h.b16 %v783
        %v1921 = vunpack.c.l.b16 %v784
        %v1922 = vunpack.c.h.b16 %v784
        %v1923 = vunpack.c.l.b16 %v785
        %v1924 = vunpack.c.h.b16 %v785
        %v1925 = vunpack.c.l.b16 %v786
        %v1926 = vunpack.c.h.b16 %v786
        %v1927 = vunpack.c.l.b16 %v787
        %v1928 = vunpack.c.h.b16 %v787
        %v1929 = vunpack.c.l.b16 %v788
        %v1930 = vunpack.c.h.b16 %v788
        %v1931 = vunpack.c.l.b16 %v789
        %v1932 = vunpack.c.h.b16 %v789
        %v1933 = vunpack.c.l.b16 %v790
        %v1934 = vunpack.c.h.b16 %v790
        %v1935 = vunpack.c.l.b16 %v791
        %v1936 = vunpack.c.h.b16 %v791
        %v1937 = vunpack.c.l.b16 %v792
        %v1938 = vunpack.c.h.b16 %v792
        %v1939 = vunpack.c.l.b16 %v793
        %v1940 = vunpack.c.h.b16 %v793
        %v1941 = vunpack.c.l.b16 %v794
        %v1942 = vunpack.c.h.b16 %v794
        %v1943 = vunpack.c.l.b16 %v795
        %v1944 = vunpack.c.h.b16 %v795
        %v1945 = vunpack.c.l.b16 %v796
        %v1946 = vunpack.c.h.b16 %v796
        %v1947 = vunpack.c.l.b16 %v797
        %v1948 = vunpack.c.h.b16 %v797
        %v1949 = vunpack.c.l.b16 %v798
        %v1950 = vunpack.c.h.b16 %v798
        %v1951 = vunpack.c.l.b16 %v799
        %v1952 = vunpack.c.h.b16 %v799
        %v1953 = vunpack.c.l.b16 %v800
        %v1954 = vunpack.c.h.b16 %v800
        %v1955 = vunpack.c.l.b16 %v801
        %v1956 = vunpack.c.h.b16 %v801
        %v1957 = vunpack.c.l.b16 %v802
        %v1958 = vunpack.c.h.b16 %v802
        %v1959 = vunpack.c.l.b16 %v803
        %v1960 = vunpack.c.h.b16 %v803
        %v1961 = vunpack.c.l.b16 %v804
        %v1962 = vunpack.c.h.b16 %v804
        %v1963 = vunpack.c.l.b16 %v805
        %v1964 = vunpack.c.h.b16 %v805
        %v1965 = vunpack.c.l.b16 %v806
        %v1966 = vunpack.c.h.b16 %v806
        %v1967 = vunpack.c.l.b16 %v807
        %v1968 = vunpack.c.h.b16 %v807
        %v1969 = vunpack.c.l.b16 %v808
        %v1970 = vunpack.c.h.b16 %v808
        %v1971 = vunpack.c.l.b16 %v809
        %v1972 = vunpack.c.h.b16 %v809
        %v1973 = vunpack.c.l.b16 %v810
        %v1974 = vunpack.c.h.b16 %v810
        %v1975 = vunpack.c.l.b16 %v811
        %v1976 = vunpack.c.h.b16 %v811
        %v1977 = vunpack.c.l.b16 %v812
        %v1978 = vunpack.c.h.b16 %v812
        %v1979 = vunpack.c.l.b16 %v813
        %v1980 = vunpack.c.h.b16 %v813
        %v1981 = vunpack.c.l.b16 %v814
        %v1982 = vunpack.c.h.b16 %v814
        %v1983 = vunpack.c.l.b16 %v815
        %v1984 = vunpack.c.h.b16 %v815
        %v1985 = vunpack.c.l.b16 %v816
        %v1986 = vunpack.c.h.b16 %v816
        %v1987 = vunpack.c.l.b16 %v817
        %v1988 = vunpack.c.h.b16 %v817
        %v1989 = vunpack.c.l.b16 %v818
        %v1990 = vunpack.c.h.b16 %v818
        %v1991 = vunpack.c.l.b16 %v819
        %v1992 = vunpack.c.h.b16 %v819
        %v1993 = vunpack.c.l.b16 %v820
        %v1994 = vunpack.c.h.b16 %v820
        %v1995 = vunpack.c.l.b16 %v821
        %v1996 = vunpack.c.h.b16 %v821
        %v1997 = vunpack.c.l.b16 %v822
        %v1998 = vunpack.c.h.b16 %v822
        %v1999 = vunpack.c.l.b16 %v823
        %v2000 = vunpack.c.h.b16 %v823
        %v2001 = vunpack.c.l.b16 %v824
        %v2002 = vunpack.c.h.b16 %v824
        %v2003 = vunpack.c.l.b16 %v825
        %v2004 = vunpack.c.h.b16 %v825
        %v2005 = vunpack.c.l.b16 %v826
        %v2006 = vunpack.c.h.b16 %v826
        %v2007 = vunpack.c.l.b16 %v827
        %v2008 = vunpack.c.h.b16 %v827
        %v2009 = vunpack.c.l.b16 %v828
        %v2010 = vunpack.c.h.b16 %v828
        %v2011 = vunpack.c.l.b16 %v829
        %v2012 = vunpack.c.h.b16 %v829
        %v2013 = vunpack.c.l.b16 %v830
        %v2014 = vunpack.c.h.b16 %v830
        %v2015 = vunpack.c.l.b16 %v831
        %v2016 = vunpack.c.h.b16 %v831
        %v2017 = vunpack.c.l.b16 %v832
        %v2018 = vunpack.c.h.b16 %v832
        %v2019 = vunpack.c.l.b16 %v833
        %v2020 = vunpack.c.h.b16 %v833
        %v2021 = vunpack.c.l.b16 %v834
        %v2022 = vunpack.c.h.b16 %v834
        %v2023 = vunpack.c.l.b16 %v835
        %v2024 = vunpack.c.h.b16 %v835
        %v2025 = vunpack.c.l.b16 %v836
        %v2026 = vunpack.c.h.b16 %v836
        %v2027 = vunpack.c.l.b16 %v837
        %v2028 = vunpack.c.h.b16 %v837
        %v2029 = vunpack.c.l.b16 %v838
        %v2030 = vunpack.c.h.b16 %v838
        %v2031 = vunpack.c.l.b16 %v839
        %v2032 = vunpack.c.h.b16 %v839
        %v2033 = vunpack.c.l.b16 %v840
        %v2034 = vunpack.c.h.b16 %v840
        %v2035 = vunpack.c.l.b16 %v841
        %v2036 = vunpack.c.h.b16 %v841
        %v2037 = vunpack.c.l.b16 %v842
        %v2038 = vunpack.c.h.b16 %v842
        %v2039 = vunpack.c.l.b16 %v843
        %v2040 = vunpack.c.h.b16 %v843
        %v2041 = vunpack.c.l.b16 %v844
        %v2042 = vunpack.c.h.b16 %v844
        %v2043 = vunpack.c.l.b16 %v845
        %v2044 = vunpack.c.h.b16 %v845
        %v2045 = vunpack.c.l.b16 %v846
        %v2046 = vunpack.c.h.b16 %v846
        %v2047 = vunpack.c.l.b16 %v847
        %v2048 = vunpack.c.h.b16 %v847
        %v2049 = vunpack.c.l.b16 %v848
        %v2050 = vunpack.c.h.b16 %v848
        %v2051 = vunpack.c.l.b16 %v849
        %v2052 = vunpack.c.h.b16 %v849
        %v2053 = vunpack.c.l.b16 %v850
        %v2054 = vunpack.c.h.b16 %v850
        %v2055 = vunpack.c.l.b16 %v851
        %v2056 = vunpack.c.h.b16 %v851
        %v2057 = vunpack.c.l.b16 %v852
        %v2058 = vunpack.c.h.b16 %v852
        %v2059 = vunpack.c.l.b16 %v853
        %v2060 = vunpack.c.h.b16 %v853
        %v2061 = vunpack.c.l.b16 %v854
        %v2062 = vunpack.c.h.b16 %v854
        %v2063 = vunpack.c.l.b16 %v855
        %v2064 = vunpack.c.h.b16 %v855
        %v2065 = vunpack.c.l.b16 %v856
        %v2066 = vunpack.c.h.b16 %v856
        %v2067 = vunpack.c.l.b16 %v857
        %v2068 = vunpack.c.h.b16 %v857
        %v2069 = vunpack.c.l.b16 %v858
        %v2070 = vunpack.c.h.b16 %v858
        %v2071 = vunpack.c.l.b16 %v859
        %v2072 = vunpack.c.h.b16 %v859
        %v2073 = vunpack.c.l.b16 %v860
        %v2074 = vunpack.c.h.b16 %v860
        %v2075 = vunpack.c.l.b16 %v861
        %v2076 = vunpack.c.h.b16 %v861
        %v2077 = vunpack.c.l.b16 %v862
        %v2078 = vunpack.c.h.b16 %v862
        %v2079 = vunpack.c.l.b16 %v863
        %v2080 = vunpack.c.h.b16 %v863
        %v2081 = vunpack.c.l.b16 %v864
        %v2082 = vunpack.c.h.b16 %v864
        %v2083 = vunpack.c.l.b16 %v865
        %v2084 = vunpack.c.h.b16 %v865
        %v2085 = vunpack.c.l.b16 %v866
        %v2086 = vunpack.c.h.b16 %v866
        %v2087 = vunpack.c.l.b16 %v867
        %v2088 = vunpack.c.h.b16 %v867
        %v2089 = vunpack.c.l.b16 %v868
        %v2090 = vunpack.c.h.b16 %v868
        %v2091 = vunpack.c.l.b16 %v869
        %v2092 = vunpack.c.h.b16 %v869
        %v2093 = vunpack.c.l.b16 %v870
        %v2094 = vunpack.c.h.b16 %v870
        %v2095 = vunpack.c.l.b16 %v871
        %v2096 = vunpack.c.h.b16 %v871
        %v2097 = vunpack.c.l.b16 %v872
        %v2098 = vunpack.c.h.b16 %v872
        %v2099 = vunpack.c.l.b16 %v873
        %v2100 = vunpack.c.h.b16 %v873
        %v2101 = vunpack.c.l.b16 %v874
        %v2102 = vunpack.c.h.b16 %v874
        %v2103 = vunpack.c.l.b16 %v875
        %v2104 = vunpack.c.h.b16 %v875
        %v2105 = vunpack.c.l.b16 %v876
        %v2106 = vunpack.c.h.b16 %v876
        %v2107 = vunpack.c.l.b16 %v877
        %v2108 = vunpack.c.h.b16 %v877
        %v2109 = vunpack.c.l.b16 %v878
        %v2110 = vunpack.c.h.b16 %v878
        %v2111 = vunpack.c.l.b16 %v879
        %v2112 = vunpack.c.h.b16 %v879
        %v2113 = vunpack.c.l.b16 %v880
        %v2114 = vunpack.c.h.b16 %v880
        %v2115 = vunpack.c.l.b16 %v881
        %v2116 = vunpack.c.h.b16 %v881
        %v2117 = vunpack.c.l.b16 %v882
        %v2118 = vunpack.c.h.b16 %v882
        %v2119 = vunpack.c.l.b16 %v883
        %v2120 = vunpack.c.h.b16 %v883
        %v2121 = vunpack.c.l.b16 %v884
        %v2122 = vunpack.c.h.b16 %v884
        %v2123 = vunpack.c.l.b16 %v885
        %v2124 = vunpack.c.h.b16 %v885
        %v2125 = vunpack.c.l.b16 %v886
        %v2126 = vunpack.c.h.b16 %v886
        %v2127 = vunpack.c.l.b16 %v887
        %v2128 = vunpack.c.h.b16 %v887
        %v2129 = vunpack.c.l.b16 %v888
        %v2130 = vunpack.c.h.b16 %v888
        %v2131 = vunpack.c.l.b16 %v889
        %v2132 = vunpack.c.h.b16 %v889
        %v2133 = vunpack.c.l.b16 %v890
        %v2134 = vunpack.c.h.b16 %v890
        %v2135 = vunpack.c.l.b16 %v891
        %v2136 = vunpack.c.h.b16 %v891
        %v2137 = vunpack.c.l.b16 %v892
        %v2138 = vunpack.c.h.b16 %v892
        %v2139 = vunpack.c.l.b16 %v893
        %v2140 = vunpack.c.h.b16 %v893
        %v2141 = vunpack.c.l.b16 %v894
        %v2142 = vunpack.c.h.b16 %v894
        %v2143 = vunpack.c.l.b16 %v895
        %v2144 = vunpack.c.h.b16 %v895
        %v2145 = vunpack.c.l.b16 %v896
        %v2146 = vunpack.c.h.b16 %v896
        %v2147 = vunpack.c.l.b16 %v897
        %v2148 = vunpack.c.h.b16 %v897
        %v2149 = vunpack.c.l.b16 %v898
        %v2150 = vunpack.c.h.b16 %v898
        %v2151 = vunpack.c.l.b16 %v899
        %v2152 = vunpack.c.h.b16 %v899
        %v2153 = vunpack.c.l.b16 %v900
        %v2154 = vunpack.c.h.b16 %v900
        %v2155 = vunpack.c.l.b16 %v901
        %v2156 = vunpack.c.h.b16 %v901
        %v2157 = vunpack.c.l.b16 %v902
        %v2158 = vunpack.c.h.b16 %v902
        %v2159 = vunpack.c.l.b16 %v903
        %v2160 = vunpack.c.h.b16 %v903
        %v2161 = vunpack.c.l.b16 %v904
        %v2162 = vunpack.c.h.b16 %v904
        %v2163 = vunpack.c.l.b16 %v905
        %v2164 = vunpack.c.h.b16 %v905
        %v2165 = vunpack.c.l.b16 %v906
        %v2166 = vunpack.c.h.b16 %v906
        %v2167 = vunpack.c.l.b16 %v907
        %v2168 = vunpack.c.h.b16 %v907
        %v2169 = vunpack.c.l.b16 %v908
        %v2170 = vunpack.c.h.b16 %v908
        %v2171 = vunpack.c.l.b16 %v909
        %v2172 = vunpack.c.h.b16 %v909
        %v2173 = vunpack.c.l.b16 %v910
        %v2174 = vunpack.c.h.b16 %v910
        %v2175 = vunpack.c.l.b16 %v911
        %v2176 = vunpack.c.h.b16 %v911
        %v2177 = vunpack.c.l.b16 %v912
        %v2178 = vunpack.c.h.b16 %v912
        %v2179 = vunpack.c.l.b16 %v913
        %v2180 = vunpack.c.h.b16 %v913
        %v2181 = vunpack.c.l.b16 %v914
        %v2182 = vunpack.c.h.b16 %v914
        %v2183 = vunpack.c.l.b16 %v915
        %v2184 = vunpack.c.h.b16 %v915
        %v2185 = vunpack.c.l.b16 %v916
        %v2186 = vunpack.c.h.b16 %v916
        %v2187 = vunpack.c.l.b16 %v917
        %v2188 = vunpack.c.h.b16 %v917
        %v2189 = vunpack.c.l.b16 %v918
        %v2190 = vunpack.c.h.b16 %v918
        %v2191 = vunpack.c.l.b16 %v919
        %v2192 = vunpack.c.h.b16 %v919
        %v2193 = vunpack.c.l.b16 %v920
        %v2194 = vunpack.c.h.b16 %v920
        %v2195 = vunpack.c.l.b16 %v921
        %v2196 = vunpack.c.h.b16 %v921
        %v2197 = vunpack.c.l.b16 %v922
        %v2198 = vunpack.c.h.b16 %v922
        %v2199 = vunpack.c.l.b16 %v923
        %v2200 = vunpack.c.h.b16 %v923
        %v2201 = vunpack.c.l.b16 %v924
        %v2202 = vunpack.c.h.b16 %v924
        %v2203 = vunpack.c.l.b16 %v925
        %v2204 = vunpack.c.h.b16 %v925
        %v2205 = vunpack.c.l.b16 %v926
        %v2206 = vunpack.c.h.b16 %v926
        %v2207 = vunpack.c.l.b16 %v927
        %v2208 = vunpack.c.h.b16 %v927
        %v2209 = vunpack.c.l.b16 %v928
        %v2210 = vunpack.c.h.b16 %v928
        %v2211 = vunpack.c.l.b16 %v929
        %v2212 = vunpack.c.h.b16 %v929
        %v2213 = vunpack.c.l.b16 %v930
        %v2214 = vunpack.c.h.b16 %v930
        %v2215 = vunpack.c.l.b16 %v931
        %v2216 = vunpack.c.h.b16 %v931
        %v2217 = vunpack.c.l.b16 %v932
        %v2218 = vunpack.c.h.b16 %v932
        %v2219 = vunpack.c.l.b16 %v933
        %v2220 = vunpack.c.h.b16 %v933
        %v2221 = vunpack.c.l.b16 %v934
        %v2222 = vunpack.c.h.b16 %v934
        %v2223 = vunpack.c.l.b16 %v935
        %v2224 = vunpack.c.h.b16 %v935
        %v2225 = vunpack.c.l.b16 %v936
        %v2226 = vunpack.c.h.b16 %v936
        %v2227 = vunpack.c.l.b16 %v937
        %v2228 = vunpack.c.h.b16 %v937
        %v2229 = vunpack.c.l.b16 %v938
        %v2230 = vunpack.c.h.b16 %v938
        %v2231 = vunpack.c.l.b16 %v939
        %v2232 = vunpack.c.h.b16 %v939
        %v2233 = vunpack.c.l.b16 %v940
        %v2234 = vunpack.c.h.b16 %v940
        %v2235 = vunpack.c.l.b16 %v941
        %v2236 = vunpack.c.h.b16 %v941
        %v2237 = vunpack.c.l.b16 %v942
        %v2238 = vunpack.c.h.b16 %v942
        %v2239 = vunpack.c.l.b16 %v943
        %v2240 = vunpack.c.h.b16 %v943
        %v2241 = vunpack.c.l.b16 %v944
        %v2242 = vunpack.c.h.b16 %v944
        %v2243 = vunpack.c.l.b16 %v945
        %v2244 = vunpack.c.h.b16 %v945
        %v2245 = vunpack.c.l.b16 %v946
        %v2246 = vunpack.c.h.b16 %v946
        %v2247 = vunpack.c.l.b16 %v947
        %v2248 = vunpack.c.h.b16 %v947
        %v2249 = vunpack.c.l.b16 %v948
        %v2250 = vunpack.c.h.b16 %v948
        %v2251 = vunpack.c.l.b16 %v949
        %v2252 = vunpack.c.h.b16 %v949
        %v2253 = vunpack.c.l.b16 %v950
        %v2254 = vunpack.c.h.b16 %v950
        %v2255 = vunpack.c.l.b16 %v951
        %v2256 = vunpack.c.h.b16 %v951
        %v2257 = vunpack.c.l.b16 %v952
        %v2258 = vunpack.c.h.b16 %v952
        %v2259 = vunpack.c.l.b16 %v953
        %v2260 = vunpack.c.h.b16 %v953
        %v2261 = vunpack.c.l.b16 %v954
        %v2262 = vunpack.c.h.b16 %v954
        %v2263 = vunpack.c.l.b16 %v955
        %v2264 = vunpack.c.h.b16 %v955
        %v2265 = vunpack.c.l.b16 %v956
        %v2266 = vunpack.c.h.b16 %v956
        %v2267 = vunpack.c.l.b16 %v957
        %v2268 = vunpack.c.h.b16 %v957
        %v2269 = vunpack.c.l.b16 %v958
        %v2270 = vunpack.c.h.b16 %v958
        %v2271 = vunpack.c.l.b16 %v959
        %v2272 = vunpack.c.h.b16 %v959
        %v2273 = vunpack.c.l.b16 %v960
        %v2274 = vunpack.c.h.b16 %v960
        %v2275 = vunpack.c.l.b16 %v961
        %v2276 = vunpack.c.h.b16 %v961
        %v2277 = vunpack.c.l.b16 %v962
        %v2278 = vunpack.c.h.b16 %v962
        %v2279 = vunpack.c.l.b16 %v963
        %v2280 = vunpack.c.h.b16 %v963
        %v2281 = vunpack.c.l.b16 %v964
        %v2282 = vunpack.c.h.b16 %v964
        %v2283 = vunpack.c.l.b16 %v965
        %v2284 = vunpack.c.h.b16 %v965
        %v2285 = vunpack.c.l.b16 %v966
        %v2286 = vunpack.c.h.b16 %v966
        %v2287 = vunpack.c.l.b16 %v967
        %v2288 = vunpack.c.h.b16 %v967
        %v2289 = vunpack.c.l.b16 %v968
        %v2290 = vunpack.c.h.b16 %v968
        %v2291 = vunpack.c.l.b16 %v969
        %v2292 = vunpack.c.h.b16 %v969
        %v2293 = vunpack.c.l.b16 %v970
        %v2294 = vunpack.c.h.b16 %v970
        %v2295 = vunpack.c.l.b16 %v971
        %v2296 = vunpack.c.h.b16 %v971
        %v2297 = vunpack.c.l.b16 %v972
        %v2298 = vunpack.c.h.b16 %v972
        %v2299 = vunpack.c.l.b16 %v973
        %v2300 = vunpack.c.h.b16 %v973
        %v2301 = vunpack.c.l.b16 %v974
        %v2302 = vunpack.c.h.b16 %v974
        %v2303 = vunpack.c.l.b16 %v975
        %v2304 = vunpack.c.h.b16 %v975
        %v2305 = vunpack.c.l.b16 %v976
        %v2306 = vunpack.c.h.b16 %v976
        %v2307 = vunpack.c.l.b16 %v977
        %v2308 = vunpack.c.h.b16 %v977
        %v2309 = vunpack.c.l.b16 %v978
        %v2310 = vunpack.c.h.b16 %v978
        %v2311 = vunpack.c.l.b16 %v979
        %v2312 = vunpack.c.h.b16 %v979
        %v2313 = vunpack.c.l.b16 %v980
        %v2314 = vunpack.c.h.b16 %v980
        %v2315 = vunpack.c.l.b16 %v981
        %v2316 = vunpack.c.h.b16 %v981
        %v2317 = vunpack.c.l.b16 %v982
        %v2318 = vunpack.c.h.b16 %v982
        %v2319 = vunpack.c.l.b16 %v983
        %v2320 = vunpack.c.h.b16 %v983
        %v2321 = vunpack.c.l.b16 %v984
        %v2322 = vunpack.c.h.b16 %v984
        %v2323 = vunpack.c.l.b16 %v985
        %v2324 = vunpack.c.h.b16 %v985
        %v2325 = vunpack.c.l.b16 %v986
        %v2326 = vunpack.c.h.b16 %v986
        %v2327 = vunpack.c.l.b16 %v987
        %v2328 = vunpack.c.h.b16 %v987
        %v2329 = vunpack.c.l.b16 %v988
        %v2330 = vunpack.c.h.b16 %v988
        %v2331 = vunpack.c.l.b16 %v989
        %v2332 = vunpack.c.h.b16 %v989
        %v2333 = vunpack.c.l.b16 %v990
        %v2334 = vunpack.c.h.b16 %v990
        %v2335 = vunpack.c.l.b16 %v991
        %v2336 = vunpack.c.h.b16 %v991
        %v2337 = vunpack.c.l.b16 %v992
        %v2338 = vunpack.c.h.b16 %v992
        %v2339 = vunpack.c.l.b16 %v993
        %v2340 = vunpack.c.h.b16 %v993
        %v2341 = vunpack.c.l.b16 %v994
        %v2342 = vunpack.c.h.b16 %v994
        %v2343 = vunpack.c.l.b16 %v995
        %v2344 = vunpack.c.h.b16 %v995
        %v2345 = vunpack.c.l.b16 %v996
        %v2346 = vunpack.c.h.b16 %v996
        %v2347 = vunpack.c.l.b16 %v997
        %v2348 = vunpack.c.h.b16 %v997
        %v2349 = vunpack.c.l.b16 %v998
        %v2350 = vunpack.c.h.b16 %v998
        %v2351 = vunpack.c.l.b16 %v999
        %v2352 = vunpack.c.h.b16 %v999
        %v2353 = vunpack.c.l.b16 %v1000
        %v2354 = vunpack.c.h.b16 %v1000
        %v2355 = vunpack.c.l.b16 %v1001
        %v2356 = vunpack.c.h.b16 %v1001
        %v2357 = vunpack.c.l.b16 %v1002
        %v2358 = vunpack.c.h.b16 %v1002
        %v2359 = vunpack.c.l.b16 %v1003
        %v2360 = vunpack.c.h.b16 %v1003
        %v2361 = vunpack.c.l.b16 %v1004
        %v2362 = vunpack.c.h.b16 %v1004
        %v2363 = vunpack.c.l.b16 %v1005
        %v2364 = vunpack.c.h.b16 %v1005
        %v2365 = vunpack.c.l.b16 %v1006
        %v2366 = vunpack.c.h.b16 %v1006
        %v2367 = vunpack.c.l.b16 %v1007
        %v2368 = vunpack.c.h.b16 %v1007
        %v2369 = vunpack.c.l.b16 %v1008
        %v2370 = vunpack.c.h.b16 %v1008
        %v2371 = vunpack.c.l.b16 %v1009
        %v2372 = vunpack.c.h.b16 %v1009
        %v2373 = vunpack.c.l.b16 %v1010
        %v2374 = vunpack.c.h.b16 %v1010
        %v2375 = vunpack.c.l.b16 %v1011
        %v2376 = vunpack.c.h.b16 %v1011
        %v2377 = vunpack.c.l.b16 %v1012
        %v2378 = vunpack.c.h.b16 %v1012
        %v2379 = vunpack.c.l.b16 %v1013
        %v2380 = vunpack.c.h.b16 %v1013
        %v2381 = vunpack.c.l.b16 %v1014
        %v2382 = vunpack.c.h.b16 %v1014
        %v2383 = vunpack.c.l.b16 %v1015
        %v2384 = vunpack.c.h.b16 %v1015
        %v2385 = vunpack.c.l.b16 %v1016
        %v2386 = vunpack.c.h.b16 %v1016
        %v2387 = vunpack.c.l.b16 %v1017
        %v2388 = vunpack.c.h.b16 %v1017
        %v2389 = vunpack.c.l.b16 %v1018
        %v2390 = vunpack.c.h.b16 %v1018
        %v2391 = vunpack.c.l.b16 %v1019
        %v2392 = vunpack.c.h.b16 %v1019
        %v2393 = vunpack.c.l.b16 %v1020
        %v2394 = vunpack.c.h.b16 %v1020
        %v2395 = vunpack.c.l.b16 %v1021
        %v2396 = vunpack.c.h.b16 %v1021
        %v2397 = vunpack.c.l.b16 %v1022
        %v2398 = vunpack.c.h.b16 %v1022
        %v2399 = vunpack.c.l.b16 %v1023
        %v2400 = vunpack.c.h.b16 %v1023
        %v2401 = vunpack.c.l.b16 %v1024
        %v2402 = vunpack.c.h.b16 %v1024
        %v2403 = vunpack.c.l.b16 %v1025
        %v2404 = vunpack.c.h.b16 %v1025
        %v2405 = vunpack.c.l.b16 %v1026
        %v2406 = vunpack.c.h.b16 %v1026
        %v2407 = vunpack.c.l.b16 %v1027
        %v2408 = vunpack.c.h.b16 %v1027
        %v2409 = vunpack.c.l.b16 %v1028
        %v2410 = vunpack.c.h.b16 %v1028
        %v2411 = vunpack.c.l.b16 %v1029
        %v2412 = vunpack.c.h.b16 %v1029
        %v2413 = vunpack.c.l.b16 %v1030
        %v2414 = vunpack.c.h.b16 %v1030
        %v2415 = vunpack.c.l.b16 %v1031
        %v2416 = vunpack.c.h.b16 %v1031
        %v2417 = vunpack.c.l.b16 %v1032
        %v2418 = vunpack.c.h.b16 %v1032
        %v2419 = vunpack.c.l.b16 %v1033
        %v2420 = vunpack.c.h.b16 %v1033
        %v2421 = vunpack.c.l.b16 %v1034
        %v2422 = vunpack.c.h.b16 %v1034
        %v2423 = vunpack.c.l.b16 %v1035
        %v2424 = vunpack.c.h.b16 %v1035
        %v2425 = vunpack.c.l.b16 %v1036
        %v2426 = vunpack.c.h.b16 %v1036
        %v2427 = vunpack.c.l.b16 %v1037
        %v2428 = vunpack.c.h.b16 %v1037
        %v2429 = vunpack.c.l.b16 %v1038
        %v2430 = vunpack.c.h.b16 %v1038
        %v2431 = vunpack.c.l.b16 %v1039
        %v2432 = vunpack.c.h.b16 %v1039
        %v2433 = vunpack.c.l.b16 %v1040
        %v2434 = vunpack.c.h.b16 %v1040
        %v2435 = vunpack.c.l.b16 %v1041
        %v2436 = vunpack.c.h.b16 %v1041
        %v2437 = vunpack.c.l.b16 %v1042
        %v2438 = vunpack.c.h.b16 %v1042
        %v2439 = vunpack.c.l.b16 %v1043
        %v2440 = vunpack.c.h.b16 %v1043
        %v2441 = vunpack.c.l.b16 %v1044
        %v2442 = vunpack.c.h.b16 %v1044
        %v2443 = vunpack.c.l.b16 %v1045
        %v2444 = vunpack.c.h.b16 %v1045
        %v2445 = vunpack.c.l.b16 %v1046
        %v2446 = vunpack.c.h.b16 %v1046
        %v2447 = vunpack.c.l.b16 %v1047
        %v2448 = vunpack.c.h.b16 %v1047
        %v2449 = vunpack.c.l.b16 %v1048
        %v2450 = vunpack.c.h.b16 %v1048
        %v2451 = vunpack.c.l.b16 %v1049
        %v2452 = vunpack.c.h.b16 %v1049
        %v2453 = vunpack.c.l.b16 %v1050
        %v2454 = vunpack.c.h.b16 %v1050
        %v2455 = vunpack.c.l.b16 %v1051
        %v2456 = vunpack.c.h.b16 %v1051
        %v2457 = vunpack.c.l.b16 %v1052
        %v2458 = vunpack.c.h.b16 %v1052
        %v2459 = vunpack.c.l.b16 %v1053
        %v2460 = vunpack.c.h.b16 %v1053
        %v2461 = vunpack.c.l.b16 %v1054
        %v2462 = vunpack.c.h.b16 %v1054
        %v2463 = vunpack.c.l.b16 %v1055
        %v2464 = vunpack.c.h.b16 %v1055
        %v2465 = vunpack.c.l.b16 %v1056
        %v2466 = vunpack.c.h.b16 %v1056
        %v2467 = vunpack.c.l.b16 %v1057
        %v2468 = vunpack.c.h.b16 %v1057
        %v2469 = vunpack.c.l.b16 %v1058
        %v2470 = vunpack.c.h.b16 %v1058
        %v2471 = vunpack.c.l.b16 %v1059
        %v2472 = vunpack.c.h.b16 %v1059
        %v2473 = vunpack.c.l.b16 %v1060
        %v2474 = vunpack.c.h.b16 %v1060
        %v2475 = vunpack.c.l.b16 %v1061
        %v2476 = vunpack.c.h.b16 %v1061
        %v2477 = vunpack.c.l.b16 %v1062
        %v2478 = vunpack.c.h.b16 %v1062
        %v2479 = vunpack.c.l.b16 %v1063
        %v2480 = vunpack.c.h.b16 %v1063
        %v2481 = vunpack.c.l.b16 %v1064
        %v2482 = vunpack.c.h.b16 %v1064
        %v2483 = vunpack.c.l.b16 %v1065
        %v2484 = vunpack.c.h.b16 %v1065
        %v2485 = vunpack.c.l.b16 %v1066
        %v2486 = vunpack.c.h.b16 %v1066
        %v2487 = vunpack.c.l.b16 %v1067
        %v2488 = vunpack.c.h.b16 %v1067
        %v2489 = vunpack.c.l.b16 %v1068
        %v2490 = vunpack.c.h.b16 %v1068
        %v2491 = vunpack.c.l.b16 %v1069
        %v2492 = vunpack.c.h.b16 %v1069
        %v2493 = vunpack.c.l.b16 %v1070
        %v2494 = vunpack.c.h.b16 %v1070
        %v2495 = vunpack.c.l.b16 %v1071
        %v2496 = vunpack.c.h.b16 %v1071
        %v2497 = vunpack.c.l.b16 %v1072
        %v2498 = vunpack.c.h.b16 %v1072
        %v2499 = vunpack.c.l.b16 %v1073
        %v2500 = vunpack.c.h.b16 %v1073
        %v2501 = vunpack.c.l.b16 %v1074
        %v2502 = vunpack.c.h.b16 %v1074
        %v2503 = vunpack.c.l.b16 %v1075
        %v2504 = vunpack.c.h.b16 %v1075
        %v2505 = vunpack.c.l.b16 %v1076
        %v2506 = vunpack.c.h.b16 %v1076
        %v2507 = vunpack.c.l.b16 %v1077
        %v2508 = vunpack.c.h.b16 %v1077
        %v2509 = vunpack.c.l.b16 %v1078
        %v2510 = vunpack.c.h.b16 %v1078
        %v2511 = vunpack.c.l.b16 %v1079
        %v2512 = vunpack.c.h.b16 %v1079
        %v2513 = vunpack.c.l.b16 %v1080
        %v2514 = vunpack.c.h.b16 %v1080
        %v2515 = vunpack.c.l.b16 %v1081
        %v2516 = vunpack.c.h.b16 %v1081
        %v2517 = vunpack.c.l.b16 %v1082
        %v2518 = vunpack.c.h.b16 %v1082
        %v2519 = vunpack.c.l.b16 %v1083
        %v2520 = vunpack.c.h.b16 %v1083
        %v2521 = vunpack.c.l.b16 %v1084
        %v2522 = vunpack.c.h.b16 %v1084
        %v2523 = vunpack.c.l.b16 %v1085
        %v2524 = vunpack.c.h.b16 %v1085
        %v2525 = vunpack.c.l.b16 %v1086
        %v2526 = vunpack.c.h.b16 %v1086
        %v2527 = vunpack.c.l.b16 %v1087
        %v2528 = vunpack.c.h.b16 %v1087
        %v2529 = vunpack.c.l.b16 %v1088
        %v2530 = vunpack.c.h.b16 %v1088
        %v2531 = vunpack.c.l.b16 %v1089
        %v2532 = vunpack.c.h.b16 %v1089
        %v2533 = vunpack.c.l.b16 %v1090
        %v2534 = vunpack.c.h.b16 %v1090
        %v2535 = vunpack.c.l.b16 %v1091
        %v2536 = vunpack.c.h.b16 %v1091
        %v2537 = vunpack.c.l.b16 %v1092
        %v2538 = vunpack.c.h.b16 %v1092
        %v2539 = vunpack.c.l.b16 %v1093
        %v2540 = vunpack.c.h.b16 %v1093
        %v2541 = vunpack.c.l.b16 %v1094
        %v2542 = vunpack.c.h.b16 %v1094
        %v2543 = vunpack.c.l.b16 %v1095
        %v2544 = vunpack.c.h.b16 %v1095
        %v2545 = vunpack.c.l.b16 %v1096
        %v2546 = vunpack.c.h.b16 %v1096
        %v2547 = vunpack.c.l.b16 %v1097
        %v2548 = vunpack.c.h.b16 %v1097
        %v2549 = vunpack.c.l.b16 %v1098
        %v2550 = vunpack.c.h.b16 %v1098
        %v2551 = vunpack.c.l.b16 %v1099
        %v2552 = vunpack.c.h.b16 %v1099
        %v2553 = vunpack.c.l.b16 %v1100
        %v2554 = vunpack.c.h.b16 %v1100
        %v2555 = vunpack.c.l.b16 %v1101
        %v2556 = vunpack.c.h.b16 %v1101
        %v2557 = vunpack.c.l.b16 %v1102
        %v2558 = vunpack.c.h.b16 %v1102
        %v2559 = vunpack.c.l.b16 %v1103
        %v2560 = vunpack.c.h.b16 %v1103
        %v2561 = vunpack.c.l.b16 %v1104
        %v2562 = vunpack.c.h.b16 %v1104
        %v2563 = vunpack.c.l.b16 %v1105
        %v2564 = vunpack.c.h.b16 %v1105
        %v2565 = vunpack.c.l.b16 %v1106
        %v2566 = vunpack.c.h.b16 %v1106
        %v2567 = vunpack.c.l.b16 %v1107
        %v2568 = vunpack.c.h.b16 %v1107
        %v2569 = vunpack.c.l.b16 %v1108
        %v2570 = vunpack.c.h.b16 %v1108
        %v2571 = vunpack.c.l.b16 %v1109
        %v2572 = vunpack.c.h.b16 %v1109
        %v2573 = vunpack.c.l.b16 %v1110
        %v2574 = vunpack.c.h.b16 %v1110
        %v2575 = vunpack.c.l.b16 %v1111
        %v2576 = vunpack.c.h.b16 %v1111
        %v2577 = vunpack.c.l.b16 %v1112
        %v2578 = vunpack.c.h.b16 %v1112
        %v2579 = vunpack.c.l.b16 %v1113
        %v2580 = vunpack.c.h.b16 %v1113
        %v2581 = vunpack.c.l.b16 %v1114
        %v2582 = vunpack.c.h.b16 %v1114
        %v2583 = vunpack.c.l.b16 %v1115
        %v2584 = vunpack.c.h.b16 %v1115
        %v2585 = vunpack.c.l.b16 %v1116
        %v2586 = vunpack.c.h.b16 %v1116
        %v2587 = vunpack.c.l.b16 %v1117
        %v2588 = vunpack.c.h.b16 %v1117
        %v2589 = vunpack.c.l.b16 %v1118
        %v2590 = vunpack.c.h.b16 %v1118
        %v2591 = vunpack.c.l.b16 %v1119
        %v2592 = vunpack.c.h.b16 %v1119
        %v2593 = vunpack.c.l.b16 %v1120
        %v2594 = vunpack.c.h.b16 %v1120
        %v2595 = vunpack.c.l.b16 %v1121
        %v2596 = vunpack.c.h.b16 %v1121
        %v2597 = vunpack.c.l.b16 %v1122
        %v2598 = vunpack.c.h.b16 %v1122
        %v2599 = vunpack.c.l.b16 %v1123
        %v2600 = vunpack.c.h.b16 %v1123
        %v2601 = vunpack.c.l.b16 %v1124
        %v2602 = vunpack.c.h.b16 %v1124
        %v2603 = vunpack.c.l.b16 %v1125
        %v2604 = vunpack.c.h.b16 %v1125
        %v2605 = vunpack.c.l.b16 %v1126
        %v2606 = vunpack.c.h.b16 %v1126
        %v2607 = vunpack.c.l.b16 %v1127
        %v2608 = vunpack.c.h.b16 %v1127
        %v2609 = vunpack.c.l.b16 %v1128
        %v2610 = vunpack.c.h.b16 %v1128
        %v2611 = vunpack.c.l.b16 %v1129
        %v2612 = vunpack.c.h.b16 %v1129
        %v2613 = vunpack.c.l.b16 %v1130
        %v2614 = vunpack.c.h.b16 %v1130
        %v2615 = vunpack.c.l.b16 %v1131
        %v2616 = vunpack.c.h.b16 %v1131
        %v2617 = vunpack.c.l.b16 %v1132
        %v2618 = vunpack.c.h.b16 %v1132
        %v2619 = vunpack.c.l.b16 %v1133
        %v2620 = vunpack.c.h.b16 %v1133
        %v2621 = vunpack.c.l.b16 %v1134
        %v2622 = vunpack.c.h.b16 %v1134
        %v2623 = vunpack.c.l.b16 %v1135
        %v2624 = vunpack.c.h.b16 %v1135
        %v2625 = vunpack.c.l.b16 %v1136
        %v2626 = vunpack.c.h.b16 %v1136
        %v2627 = vunpack.c.l.b16 %v1137
        %v2628 = vunpack.c.h.b16 %v1137
        %v2629 = vunpack.c.l.b16 %v1138
        %v2630 = vunpack.c.h.b16 %v1138
        %v2631 = vunpack.c.l.b16 %v1139
        %v2632 = vunpack.c.h.b16 %v1139
        %v2633 = vunpack.c.l.b16 %v1140
        %v2634 = vunpack.c.h.b16 %v1140
        %v2635 = vunpack.c.l.b16 %v1141
        %v2636 = vunpack.c.h.b16 %v1141
        %v2637 = vunpack.c.l.b16 %v1142
        %v2638 = vunpack.c.h.b16 %v1142
        %v2639 = vunpack.c.l.b16 %v1143
        %v2640 = vunpack.c.h.b16 %v1143
        %v2641 = vunpack.c.l.b16 %v1144
        %v2642 = vunpack.c.h.b16 %v1144
        %v2643 = vunpack.c.l.b16 %v1145
        %v2644 = vunpack.c.h.b16 %v1145
        %v2645 = vunpack.c.l.b16 %v1146
        %v2646 = vunpack.c.h.b16 %v1146
        %v2647 = vunpack.c.l.b16 %v1147
        %v2648 = vunpack.c.h.b16 %v1147
        %v2649 = vunpack.c.l.b16 %v1148
        %v2650 = vunpack.c.h.b16 %v1148
        %v2651 = vunpack.c.l.b16 %v1149
        %v2652 = vunpack.c.h.b16 %v1149
        %v2653 = vunpack.c.l.b16 %v1150
        %v2654 = vunpack.c.h.b16 %v1150
        %v2655 = vunpack.c.l.b16 %v1151
        %v2656 = vunpack.c.h.b16 %v1151
        %v2657 = vunpack.c.l.b16 %v1152
        %v2658 = vunpack.c.h.b16 %v1152
        %v2659 = vunpack.c.l.b16 %v1153
        %v2660 = vunpack.c.h.b16 %v1153
        %v2661 = vunpack.c.l.b16 %v1154
        %v2662 = vunpack.c.h.b16 %v1154
        %v2663 = vunpack.c.l.b16 %v1155
        %v2664 = vunpack.c.h.b16 %v1155
        %v2665 = vunpack.c.l.b16 %v1156
        %v2666 = vunpack.c.h.b16 %v1156
        %v2667 = vunpack.c.l.b16 %v1157
        %v2668 = vunpack.c.h.b16 %v1157
        %v2669 = vunpack.c.l.b16 %v1158
        %v2670 = vunpack.c.h.b16 %v1158
        %v2671 = vunpack.c.l.b16 %v1159
        %v2672 = vunpack.c.h.b16 %v1159
        %v2673 = vunpack.c.l.b16 %v1160
        %v2674 = vunpack.c.h.b16 %v1160
        %v2675 = vunpack.c.l.b16 %v1161
        %v2676 = vunpack.c.h.b16 %v1161
        %v2677 = vunpack.c.l.b16 %v1162
        %v2678 = vunpack.c.h.b16 %v1162
        %v2679 = vunpack.c.l.b16 %v1163
        %v2680 = vunpack.c.h.b16 %v1163
        %v2681 = vunpack.c.l.b16 %v1164
        %v2682 = vunpack.c.h.b16 %v1164
        %v2683 = vunpack.c.l.b16 %v1165
        %v2684 = vunpack.c.h.b16 %v1165
        %v2685 = vunpack.c.l.b16 %v1166
        %v2686 = vunpack.c.h.b16 %v1166
        %v2687 = vunpack.c.l.b16 %v1167
        %v2688 = vunpack.c.h.b16 %v1167
        %v2689 = vunpack.c.l.b16 %v1168
        %v2690 = vunpack.c.h.b16 %v1168
        %v2691 = vunpack.c.l.b16 %v1169
        %v2692 = vunpack.c.h.b16 %v1169
        %v2693 = vunpack.c.l.b16 %v1170
        %v2694 = vunpack.c.h.b16 %v1170
        %v2695 = vunpack.c.l.b16 %v1171
        %v2696 = vunpack.c.h.b16 %v1171
        %v2697 = vunpack.c.l.b16 %v1172
        %v2698 = vunpack.c.h.b16 %v1172
        %v2699 = vunpack.c.l.b16 %v1173
        %v2700 = vunpack.c.h.b16 %v1173
        %v2701 = vunpack.c.l.b16 %v1174
        %v2702 = vunpack.c.h.b16 %v1174
        %v2703 = vunpack.c.l.b16 %v1175
        %v2704 = vunpack.c.h.b16 %v1175
        %v2705 = vunpack.c.l.b16 %v1176
        %v2706 = vunpack.c.h.b16 %v1176
        %v2707 = vunpack.c.l.b16 %v1177
        %v2708 = vunpack.c.h.b16 %v1177
        %v2709 = vunpack.c.l.b16 %v1178
        %v2710 = vunpack.c.h.b16 %v1178
        %v2711 = vunpack.c.l.b16 %v1179
        %v2712 = vunpack.c.h.b16 %v1179
        %v2713 = vunpack.c.l.b16 %v1180
        %v2714 = vunpack.c.h.b16 %v1180
        %v2715 = vunpack.c.l.b16 %v1181
        %v2716 = vunpack.c.h.b16 %v1181
        %v2717 = vunpack.c.l.b16 %v1182
        %v2718 = vunpack.c.h.b16 %v1182
        %v2719 = vpack.c.b16 %v1699, %v1695
        %v2720 = vpack.c.b16 %v1700, %v1696
        %v2721 = vpack.c.b16 %v1701, %v1697
        %v2722 = vpack.c.b16 %v1702, %v1698
        %v2723 = vpack.c.b16 %v1707, %v1703
        %v2724 = vpack.c.b16 %v1708, %v1704
        %v2725 = vpack.c.b16 %v1709, %v1705
        %v2726 = vpack.c.b16 %v1710, %v1706
        %v2727 = vpack.c.b16 %v1715, %v1711
        %v2728 = vpack.c.b16 %v1716, %v1712
        %v2729 = vpack.c.b16 %v1717, %v1713
        %v2730 = vpack.c.b16 %v1718, %v1714
        %v2731 = vpack.c.b16 %v1723, %v1719
        %v2732 = vpack.c.b16 %v1724, %v1720
        %v2733 = vpack.c.b16 %v1725, %v1721
        %v2734 = vpack.c.b16 %v1726, %v1722
        %v2735 = vpack.c.b16 %v1731, %v1727
        %v2736 = vpack.c.b16 %v1732, %v1728
        %v2737 = vpack.c.b16 %v1733, %v1729
        %v2738 = vpack.c.b16 %v1734, %v1730
        %v2739 = vpack.c.b16 %v1739, %v1735
        %v2740 = vpack.c.b16 %v1740, %v1736
        %v2741 = vpack.c.b16 %v1741, %v1737
        %v2742 = vpack.c.b16 %v1742, %v1738
        %v2743 = vpack.c.b16 %v1747, %v1743
        %v2744 = vpack.c.b16 %v1748, %v1744
        %v2745 = vpack.c.b16 %v1749, %v1745
        %v2746 = vpack.c.b16 %v1750, %v1746
        %v2747 = vpack.c.b16 %v1755, %v1751
        %v2748 = vpack.c.b16 %v1756, %v1752
        %v2749 = vpack.c.b16 %v1757, %v1753
        %v2750 = vpack.c.b16 %v1758, %v1754
        %v2751 = vpack.c.b16 %v1763, %v1759
        %v2752 = vpack.c.b16 %v1764, %v1760
        %v2753 = vpack.c.b16 %v1765, %v1761
        %v2754 = vpack.c.b16 %v1766, %v1762
        %v2755 = vpack.c.b16 %v1771, %v1767
        %v2756 = vpack.c.b16 %v1772, %v1768
        %v2757 = vpack.c.b16 %v1773, %v1769
        %v2758 = vpack.c.b16 %v1774, %v1770
        %v2759 = vpack.c.b16 %v1779, %v1775
        %v2760 = vpack.c.b16 %v1780, %v1776
        %v2761 = vpack.c.b16 %v1781, %v1777
        %v2762 = vpack.c.b16 %v1782, %v1778
        %v2763 = vpack.c.b16 %v1787, %v1783
        %v2764 = vpack.c.b16 %v1788, %v1784
        %v2765 = vpack.c.b16 %v1789, %v1785
        %v2766 = vpack.c.b16 %v1790, %v1786
        %v2767 = vpack.c.b16 %v1795, %v1791
        %v2768 = vpack.c.b16 %v1796, %v1792
        %v2769 = vpack.c.b16 %v1797, %v1793
        %v2770 = vpack.c.b16 %v1798, %v1794
        %v2771 = vpack.c.b16 %v1803, %v1799
        %v2772 = vpack.c.b16 %v1804, %v1800
        %v2773 = vpack.c.b16 %v1805, %v1801
        %v2774 = vpack.c.b16 %v1806, %v1802
        %v2775 = vpack.c.b16 %v1811, %v1807
        %v2776 = vpack.c.b16 %v1812, %v1808
        %v2777 = vpack.c.b16 %v1813, %v1809
        %v2778 = vpack.c.b16 %v1814, %v1810
        %v2779 = vpack.c.b16 %v1819, %v1815
        %v2780 = vpack.c.b16 %v1820, %v1816
        %v2781 = vpack.c.b16 %v1821, %v1817
        %v2782 = vpack.c.b16 %v1822, %v1818
        %v2783 = vpack.c.b16 %v1827, %v1823
        %v2784 = vpack.c.b16 %v1828, %v1824
        %v2785 = vpack.c.b16 %v1829, %v1825
        %v2786 = vpack.c.b16 %v1830, %v1826
        %v2787 = vpack.c.b16 %v1835, %v1831
        %v2788 = vpack.c.b16 %v1836, %v1832
        %v2789 = vpack.c.b16 %v1837, %v1833
        %v2790 = vpack.c.b16 %v1838, %v1834
        %v2791 = vpack.c.b16 %v1843, %v1839
        %v2792 = vpack.c.b16 %v1844, %v1840
        %v2793 = vpack.c.b16 %v1845, %v1841
        %v2794 = vpack.c.b16 %v1846, %v1842
        %v2795 = vpack.c.b16 %v1851, %v1847
        %v2796 = vpack.c.b16 %v1852, %v1848
        %v2797 = vpack.c.b16 %v1853, %v1849
        %v2798 = vpack.c.b16 %v1854, %v1850
        %v2799 = vpack.c.b16 %v1859, %v1855
        %v2800 = vpack.c.b16 %v1860, %v1856
        %v2801 = vpack.c.b16 %v1861, %v1857
        %v2802 = vpack.c.b16 %v1862, %v1858
        %v2803 = vpack.c.b16 %v1867, %v1863
        %v2804 = vpack.c.b16 %v1868, %v1864
        %v2805 = vpack.c.b16 %v1869, %v1865
        %v2806 = vpack.c.b16 %v1870, %v1866
        %v2807 = vpack.c.b16 %v1875, %v1871
        %v2808 = vpack.c.b16 %v1876, %v1872
        %v2809 = vpack.c.b16 %v1877, %v1873
        %v2810 = vpack.c.b16 %v1878, %v1874
        %v2811 = vpack.c.b16 %v1883, %v1879
        %v2812 = vpack.c.b16 %v1884, %v1880
        %v2813 = vpack.c.b16 %v1885, %v1881
        %v2814 = vpack.c.b16 %v1886, %v1882
        %v2815 = vpack.c.b16 %v1891, %v1887
        %v2816 = vpack.c.b16 %v1892, %v1888
        %v2817 = vpack.c.b16 %v1893, %v1889
        %v2818 = vpack.c.b16 %v1894, %v1890
        %v2819 = vpack.c.b16 %v1899, %v1895
        %v2820 = vpack.c.b16 %v1900, %v1896
        %v2821 = vpack.c.b16 %v1901, %v1897
        %v2822 = vpack.c.b16 %v1902, %v1898
        %v2823 = vpack.c.b16 %v1907, %v1903
        %v2824 = vpack.c.b16 %v1908, %v1904
        %v2825 = vpack.c.b16 %v1909, %v1905
        %v2826 = vpack.c.b16 %v1910, %v1906
        %v2827 = vpack.c.b16 %v1915, %v1911
        %v2828 = vpack.c.b16 %v1916, %v1912
        %v2829 = vpack.c.b16 %v1917, %v1913
        %v2830 = vpack.c.b16 %v1918, %v1914
        %v2831 = vpack.c.b16 %v1923, %v1919
        %v2832 = vpack.c.b16 %v1924, %v1920
        %v2833 = vpack.c.b16 %v1925, %v1921
        %v2834 = vpack.c.b16 %v1926, %v1922
        %v2835 = vpack.c.b16 %v1931, %v1927
        %v2836 = vpack.c.b16 %v1932, %v1928
        %v2837 = vpack.c.b16 %v1933, %v1929
        %v2838 = vpack.c.b16 %v1934, %v1930
        %v2839 = vpack.c.b16 %v1939, %v1935
        %v2840 = vpack.c.b16 %v1940, %v1936
        %v2841 = vpack.c.b16 %v1941, %v1937
        %v2842 = vpack.c.b16 %v1942, %v1938
        %v2843 = vpack.c.b16 %v1947, %v1943
        %v2844 = vpack.c.b16 %v1948, %v1944
        %v2845 = vpack.c.b16 %v1949, %v1945
        %v2846 = vpack.c.b16 %v1950, %v1946
        %v2847 = vpack.c.b16 %v1955, %v1951
        %v2848 = vpack.c.b16 %v1956, %v1952
        %v2849 = vpack.c.b16 %v1957, %v1953
        %v2850 = vpack.c.b16 %v1958, %v1954
        %v2851 = vpack.c.b16 %v1963, %v1959
        %v2852 = vpack.c.b16 %v1964, %v1960
        %v2853 = vpack.c.b16 %v1965, %v1961
        %v2854 = vpack.c.b16 %v1966, %v1962
        %v2855 = vpack.c.b16 %v1971, %v1967
        %v2856 = vpack.c.b16 %v1972, %v1968
        %v2857 = vpack.c.b16 %v1973, %v1969
        %v2858 = vpack.c.b16 %v1974, %v1970
        %v2859 = vpack.c.b16 %v1979, %v1975
        %v2860 = vpack.c.b16 %v1980, %v1976
        %v2861 = vpack.c.b16 %v1981, %v1977
        %v2862 = vpack.c.b16 %v1982, %v1978
        %v2863 = vpack.c.b16 %v1987, %v1983
        %v2864 = vpack.c.b16 %v1988, %v1984
        %v2865 = vpack.c.b16 %v1989, %v1985
        %v2866 = vpack.c.b16 %v1990, %v1986
        %v2867 = vpack.c.b16 %v1995, %v1991
        %v2868 = vpack.c.b16 %v1996, %v1992
        %v2869 = vpack.c.b16 %v1997, %v1993
        %v2870 = vpack.c.b16 %v1998, %v1994
        %v2871 = vpack.c.b16 %v2003, %v1999
        %v2872 = vpack.c.b16 %v2004, %v2000
        %v2873 = vpack.c.b16 %v2005, %v2001
        %v2874 = vpack.c.b16 %v2006, %v2002
        %v2875 = vpack.c.b16 %v2011, %v2007
        %v2876 = vpack.c.b16 %v2012, %v2008
        %v2877 = vpack.c.b16 %v2013, %v2009
        %v2878 = vpack.c.b16 %v2014, %v2010
        %v2879 = vpack.c.b16 %v2019, %v2015
        %v2880 = vpack.c.b16 %v2020, %v2016
        %v2881 = vpack.c.b16 %v2021, %v2017
        %v2882 = vpack.c.b16 %v2022, %v2018
        %v2883 = vpack.c.b16 %v2027, %v2023
        %v2884 = vpack.c.b16 %v2028, %v2024
        %v2885 = vpack.c.b16 %v2029, %v2025
        %v2886 = vpack.c.b16 %v2030, %v2026
        %v2887 = vpack.c.b16 %v2035, %v2031
        %v2888 = vpack.c.b16 %v2036, %v2032
        %v2889 = vpack.c.b16 %v2037, %v2033
        %v2890 = vpack.c.b16 %v2038, %v2034
        %v2891 = vpack.c.b16 %v2043, %v2039
        %v2892 = vpack.c.b16 %v2044, %v2040
        %v2893 = vpack.c.b16 %v2045, %v2041
        %v2894 = vpack.c.b16 %v2046, %v2042
        %v2895 = vpack.c.b16 %v2051, %v2047
        %v2896 = vpack.c.b16 %v2052, %v2048
        %v2897 = vpack.c.b16 %v2053, %v2049
        %v2898 = vpack.c.b16 %v2054, %v2050
        %v2899 = vpack.c.b16 %v2059, %v2055
        %v2900 = vpack.c.b16 %v2060, %v2056
        %v2901 = vpack.c.b16 %v2061, %v2057
        %v2902 = vpack.c.b16 %v2062, %v2058
        %v2903 = vpack.c.b16 %v2067, %v2063
        %v2904 = vpack.c.b16 %v2068, %v2064
        %v2905 = vpack.c.b16 %v2069, %v2065
        %v2906 = vpack.c.b16 %v2070, %v2066
        %v2907 = vpack.c.b16 %v2075, %v2071
        %v2908 = vpack.c.b16 %v2076, %v2072
        %v2909 = vpack.c.b16 %v2077, %v2073
        %v2910 = vpack.c.b16 %v2078, %v2074
        %v2911 = vpack.c.b16 %v2083, %v2079
        %v2912 = vpack.c.b16 %v2084, %v2080
        %v2913 = vpack.c.b16 %v2085, %v2081
        %v2914 = vpack.c.b16 %v2086, %v2082
        %v2915 = vpack.c.b16 %v2091, %v2087
        %v2916 = vpack.c.b16 %v2092, %v2088
        %v2917 = vpack.c.b16 %v2093, %v2089
        %v2918 = vpack.c.b16 %v2094, %v2090
        %v2919 = vpack.c.b16 %v2099, %v2095
        %v2920 = vpack.c.b16 %v2100, %v2096
        %v2921 = vpack.c.b16 %v2101, %v2097
        %v2922 = vpack.c.b16 %v2102, %v2098
        %v2923 = vpack.c.b16 %v2107, %v2103
        %v2924 = vpack.c.b16 %v2108, %v2104
        %v2925 = vpack.c.b16 %v2109, %v2105
        %v2926 = vpack.c.b16 %v2110, %v2106
        %v2927 = vpack.c.b16 %v2115, %v2111
        %v2928 = vpack.c.b16 %v2116, %v2112
        %v2929 = vpack.c.b16 %v2117, %v2113
        %v2930 = vpack.c.b16 %v2118, %v2114
        %v2931 = vpack.c.b16 %v2123, %v2119
        %v2932 = vpack.c.b16 %v2124, %v2120
        %v2933 = vpack.c.b16 %v2125, %v2121
        %v2934 = vpack.c.b16 %v2126, %v2122
        %v2935 = vpack.c.b16 %v2131, %v2127
        %v2936 = vpack.c.b16 %v2132, %v2128
        %v2937 = vpack.c.b16 %v2133, %v2129
        %v2938 = vpack.c.b16 %v2134, %v2130
        %v2939 = vpack.c.b16 %v2139, %v2135
        %v2940 = vpack.c.b16 %v2140, %v2136
        %v2941 = vpack.c.b16 %v2141, %v2137
        %v2942 = vpack.c.b16 %v2142, %v2138
        %v2943 = vpack.c.b16 %v2147, %v2143
        %v2944 = vpack.c.b16 %v2148, %v2144
        %v2945 = vpack.c.b16 %v2149, %v2145
        %v2946 = vpack.c.b16 %v2150, %v2146
        %v2947 = vpack.c.b16 %v2155, %v2151
        %v2948 = vpack.c.b16 %v2156, %v2152
        %v2949 = vpack.c.b16 %v2157, %v2153
        %v2950 = vpack.c.b16 %v2158, %v2154
        %v2951 = vpack.c.b16 %v2163, %v2159
        %v2952 = vpack.c.b16 %v2164, %v2160
        %v2953 = vpack.c.b16 %v2165, %v2161
        %v2954 = vpack.c.b16 %v2166, %v2162
        %v2955 = vpack.c.b16 %v2171, %v2167
        %v2956 = vpack.c.b16 %v2172, %v2168
        %v2957 = vpack.c.b16 %v2173, %v2169
        %v2958 = vpack.c.b16 %v2174, %v2170
        %v2959 = vpack.c.b16 %v2179, %v2175
        %v2960 = vpack.c.b16 %v2180, %v2176
        %v2961 = vpack.c.b16 %v2181, %v2177
        %v2962 = vpack.c.b16 %v2182, %v2178
        %v2963 = vpack.c.b16 %v2187, %v2183
        %v2964 = vpack.c.b16 %v2188, %v2184
        %v2965 = vpack.c.b16 %v2189, %v2185
        %v2966 = vpack.c.b16 %v2190, %v2186
        %v2967 = vpack.c.b16 %v2195, %v2191
        %v2968 = vpack.c.b16 %v2196, %v2192
        %v2969 = vpack.c.b16 %v2197, %v2193
        %v2970 = vpack.c.b16 %v2198, %v2194
        %v2971 = vpack.c.b16 %v2203, %v2199
        %v2972 = vpack.c.b16 %v2204, %v2200
        %v2973 = vpack.c.b16 %v2205, %v2201
        %v2974 = vpack.c.b16 %v2206, %v2202
        %v2975 = vpack.c.b16 %v2211, %v2207
        %v2976 = vpack.c.b16 %v2212, %v2208
        %v2977 = vpack.c.b16 %v2213, %v2209
        %v2978 = vpack.c.b16 %v2214, %v2210
        %v2979 = vpack.c.b16 %v2219, %v2215
        %v2980 = vpack.c.b16 %v2220, %v2216
        %v2981 = vpack.c.b16 %v2221, %v2217
        %v2982 = vpack.c.b16 %v2222, %v2218
        %v2983 = vpack.c.b16 %v2227, %v2223
        %v2984 = vpack.c.b16 %v2228, %v2224
        %v2985 = vpack.c.b16 %v2229, %v2225
        %v2986 = vpack.c.b16 %v2230, %v2226
        %v2987 = vpack.c.b16 %v2235, %v2231
        %v2988 = vpack.c.b16 %v2236, %v2232
        %v2989 = vpack.c.b16 %v2237, %v2233
        %v2990 = vpack.c.b16 %v2238, %v2234
        %v2991 = vpack.c.b16 %v2243, %v2239
        %v2992 = vpack.c.b16 %v2244, %v2240
        %v2993 = vpack.c.b16 %v2245, %v2241
        %v2994 = vpack.c.b16 %v2246, %v2242
        %v2995 = vpack.c.b16 %v2251, %v2247
        %v2996 = vpack.c.b16 %v2252, %v2248
        %v2997 = vpack.c.b16 %v2253, %v2249
        %v2998 = vpack.c.b16 %v2254, %v2250
        %v2999 = vpack.c.b16 %v2259, %v2255
        %v3000 = vpack.c.b16 %v2260, %v2256
        %v3001 = vpack.c.b16 %v2261, %v2257
        %v3002 = vpack.c.b16 %v2262, %v2258
        %v3003 = vpack.c.b16 %v2267, %v2263
        %v3004 = vpack.c.b16 %v2268, %v2264
        %v3005 = vpack.c.b16 %v2269, %v2265
        %v3006 = vpack.c.b16 %v2270, %v2266
        %v3007 = vpack.c.b16 %v2275, %v2271
        %v3008 = vpack.c.b16 %v2276, %v2272
        %v3009 = vpack.c.b16 %v2277, %v2273
        %v3010 = vpack.c.b16 %v2278, %v2274
        %v3011 = vpack.c.b16 %v2283, %v2279
        %v3012 = vpack.c.b16 %v2284, %v2280
        %v3013 = vpack.c.b16 %v2285, %v2281
        %v3014 = vpack.c.b16 %v2286, %v2282
        %v3015 = vpack.c.b16 %v2291, %v2287
        %v3016 = vpack.c.b16 %v2292, %v2288
        %v3017 = vpack.c.b16 %v2293, %v2289
        %v3018 = vpack.c.b16 %v2294, %v2290
        %v3019 = vpack.c.b16 %v2299, %v2295
        %v3020 = vpack.c.b16 %v2300, %v2296
        %v3021 = vpack.c.b16 %v2301, %v2297
        %v3022 = vpack.c.b16 %v2302, %v2298
        %v3023 = vpack.c.b16 %v2307, %v2303
        %v3024 = vpack.c.b16 %v2308, %v2304
        %v3025 = vpack.c.b16 %v2309, %v2305
        %v3026 = vpack.c.b16 %v2310, %v2306
        %v3027 = vpack.c.b16 %v2315, %v2311
        %v3028 = vpack.c.b16 %v2316, %v2312
        %v3029 = vpack.c.b16 %v2317, %v2313
        %v3030 = vpack.c.b16 %v2318, %v2314
        %v3031 = vpack.c.b16 %v2323, %v2319
        %v3032 = vpack.c.b16 %v2324, %v2320
        %v3033 = vpack.c.b16 %v2325, %v2321
        %v3034 = vpack.c.b16 %v2326, %v2322
        %v3035 = vpack.c.b16 %v2331, %v2327
        %v3036 = vpack.c.b16 %v2332, %v2328
        %v3037 = vpack.c.b16 %v2333, %v2329
        %v3038 = vpack.c.b16 %v2334, %v2330
        %v3039 = vpack.c.b16 %v2339, %v2335
        %v3040 = vpack.c.b16 %v2340, %v2336
        %v3041 = vpack.c.b16 %v2341, %v2337
        %v3042 = vpack.c.b16 %v2342, %v2338
        %v3043 = vpack.c.b16 %v2347, %v2343
        %v3044 = vpack.c.b16 %v2348, %v2344
        %v3045 = vpack.c.b16 %v2349, %v2345
        %v3046 = vpack.c.b16 %v2350, %v2346
        %v3047 = vpack.c.b16 %v2355, %v2351
        %v3048 = vpack.c.b16 %v2356, %v2352
        %v3049 = vpack.c.b16 %v2357, %v2353
        %v3050 = vpack.c.b16 %v2358, %v2354
        %v3051 = vpack.c.b16 %v2363, %v2359
        %v3052 = vpack.c.b16 %v2364, %v2360
        %v3053 = vpack.c.b16 %v2365, %v2361
        %v3054 = vpack.c.b16 %v2366, %v2362
        %v3055 = vpack.c.b16 %v2371, %v2367
        %v3056 = vpack.c.b16 %v2372, %v2368
        %v3057 = vpack.c.b16 %v2373, %v2369
        %v3058 = vpack.c.b16 %v2374, %v2370
        %v3059 = vpack.c.b16 %v2379, %v2375
        %v3060 = vpack.c.b16 %v2380, %v2376
        %v3061 = vpack.c.b16 %v2381, %v2377
        %v3062 = vpack.c.b16 %v2382, %v2378
        %v3063 = vpack.c.b16 %v2387, %v2383
        %v3064 = vpack.c.b16 %v2388, %v2384
        %v3065 = vpack.c.b16 %v2389, %v2385
        %v3066 = vpack.c.b16 %v2390, %v2386
        %v3067 = vpack.c.b16 %v2395, %v2391
        %v3068 = vpack.c.b16 %v2396, %v2392
        %v3069 = vpack.c.b16 %v2397, %v2393
        %v3070 = vpack.c.b16 %v2398, %v2394
        %v3071 = vpack.c.b16 %v2403, %v2399
        %v3072 = vpack.c.b16 %v2404, %v2400
        %v3073 = vpack.c.b16 %v2405, %v2401
        %v3074 = vpack.c.b16 %v2406, %v2402
        %v3075 = vpack.c.b16 %v2411, %v2407
        %v3076 = vpack.c.b16 %v2412, %v2408
        %v3077 = vpack.c.b16 %v2413, %v2409
        %v3078 = vpack.c.b16 %v2414, %v2410
        %v3079 = vpack.c.b16 %v2419, %v2415
        %v3080 = vpack.c.b16 %v2420, %v2416
        %v3081 = vpack.c.b16 %v2421, %v2417
        %v3082 = vpack.c.b16 %v2422, %v2418
        %v3083 = vpack.c.b16 %v2427, %v2423
        %v3084 = vpack.c.b16 %v2428, %v2424
        %v3085 = vpack.c.b16 %v2429, %v2425
        %v3086 = vpack.c.b16 %v2430, %v2426
        %v3087 = vpack.c.b16 %v2435, %v2431
        %v3088 = vpack.c.b16 %v2436, %v2432
        %v3089 = vpack.c.b16 %v2437, %v2433
        %v3090 = vpack.c.b16 %v2438, %v2434
        %v3091 = vpack.c.b16 %v2443, %v2439
        %v3092 = vpack.c.b16 %v2444, %v2440
        %v3093 = vpack.c.b16 %v2445, %v2441
        %v3094 = vpack.c.b16 %v2446, %v2442
        %v3095 = vpack.c.b16 %v2451, %v2447
        %v3096 = vpack.c.b16 %v2452, %v2448
        %v3097 = vpack.c.b16 %v2453, %v2449
        %v3098 = vpack.c.b16 %v2454, %v2450
        %v3099 = vpack.c.b16 %v2459, %v2455
        %v3100 = vpack.c.b16 %v2460, %v2456
        %v3101 = vpack.c.b16 %v2461, %v2457
        %v3102 = vpack.c.b16 %v2462, %v2458
        %v3103 = vpack.c.b16 %v2467, %v2463
        %v3104 = vpack.c.b16 %v2468, %v2464
        %v3105 = vpack.c.b16 %v2469, %v2465
        %v3106 = vpack.c.b16 %v2470, %v2466
        %v3107 = vpack.c.b16 %v2475, %v2471
        %v3108 = vpack.c.b16 %v2476, %v2472
        %v3109 = vpack.c.b16 %v2477, %v2473
        %v3110 = vpack.c.b16 %v2478, %v2474
        %v3111 = vpack.c.b16 %v2483, %v2479
        %v3112 = vpack.c.b16 %v2484, %v2480
        %v3113 = vpack.c.b16 %v2485, %v2481
        %v3114 = vpack.c.b16 %v2486, %v2482
        %v3115 = vpack.c.b16 %v2491, %v2487
        %v3116 = vpack.c.b16 %v2492, %v2488
        %v3117 = vpack.c.b16 %v2493, %v2489
        %v3118 = vpack.c.b16 %v2494, %v2490
        %v3119 = vpack.c.b16 %v2499, %v2495
        %v3120 = vpack.c.b16 %v2500, %v2496
        %v3121 = vpack.c.b16 %v2501, %v2497
        %v3122 = vpack.c.b16 %v2502, %v2498
        %v3123 = vpack.c.b16 %v2507, %v2503
        %v3124 = vpack.c.b16 %v2508, %v2504
        %v3125 = vpack.c.b16 %v2509, %v2505
        %v3126 = vpack.c.b16 %v2510, %v2506
        %v3127 = vpack.c.b16 %v2515, %v2511
        %v3128 = vpack.c.b16 %v2516, %v2512
        %v3129 = vpack.c.b16 %v2517, %v2513
        %v3130 = vpack.c.b16 %v2518, %v2514
        %v3131 = vpack.c.b16 %v2523, %v2519
        %v3132 = vpack.c.b16 %v2524, %v2520
        %v3133 = vpack.c.b16 %v2525, %v2521
        %v3134 = vpack.c.b16 %v2526, %v2522
        %v3135 = vpack.c.b16 %v2531, %v2527
        %v3136 = vpack.c.b16 %v2532, %v2528
        %v3137 = vpack.c.b16 %v2533, %v2529
        %v3138 = vpack.c.b16 %v2534, %v2530
        %v3139 = vpack.c.b16 %v2539, %v2535
        %v3140 = vpack.c.b16 %v2540, %v2536
        %v3141 = vpack.c.b16 %v2541, %v2537
        %v3142 = vpack.c.b16 %v2542, %v2538
        %v3143 = vpack.c.b16 %v2547, %v2543
        %v3144 = vpack.c.b16 %v2548, %v2544
        %v3145 = vpack.c.b16 %v2549, %v2545
        %v3146 = vpack.c.b16 %v2550, %v2546
        %v3147 = vpack.c.b16 %v2555, %v2551
        %v3148 = vpack.c.b16 %v2556, %v2552
        %v3149 = vpack.c.b16 %v2557, %v2553
        %v3150 = vpack.c.b16 %v2558, %v2554
        %v3151 = vpack.c.b16 %v2563, %v2559
        %v3152 = vpack.c.b16 %v2564, %v2560
        %v3153 = vpack.c.b16 %v2565, %v2561
        %v3154 = vpack.c.b16 %v2566, %v2562
        %v3155 = vpack.c.b16 %v2571, %v2567
        %v3156 = vpack.c.b16 %v2572, %v2568
        %v3157 = vpack.c.b16 %v2573, %v2569
        %v3158 = vpack.c.b16 %v2574, %v2570
        %v3159 = vpack.c.b16 %v2579, %v2575
        %v3160 = vpack.c.b16 %v2580, %v2576
        %v3161 = vpack.c.b16 %v2581, %v2577
        %v3162 = vpack.c.b16 %v2582, %v2578
        %v3163 = vpack.c.b16 %v2587, %v2583
        %v3164 = vpack.c.b16 %v2588, %v2584
        %v3165 = vpack.c.b16 %v2589, %v2585
        %v3166 = vpack.c.b16 %v2590, %v2586
        %v3167 = vpack.c.b16 %v2595, %v2591
        %v3168 = vpack.c.b16 %v2596, %v2592
        %v3169 = vpack.c.b16 %v2597, %v2593
        %v3170 = vpack.c.b16 %v2598, %v2594
        %v3171 = vpack.c.b16 %v2603, %v2599
        %v3172 = vpack.c.b16 %v2604, %v2600
        %v3173 = vpack.c.b16 %v2605, %v2601
        %v3174 = vpack.c.b16 %v2606, %v2602
        %v3175 = vpack.c.b16 %v2611, %v2607
        %v3176 = vpack.c.b16 %v2612, %v2608
        %v3177 = vpack.c.b16 %v2613, %v2609
        %v3178 = vpack.c.b16 %v2614, %v2610
        %v3179 = vpack.c.b16 %v2619, %v2615
        %v3180 = vpack.c.b16 %v2620, %v2616
        %v3181 = vpack.c.b16 %v2621, %v2617
        %v3182 = vpack.c.b16 %v2622, %v2618
        %v3183 = vpack.c.b16 %v2627, %v2623
        %v3184 = vpack.c.b16 %v2628, %v2624
        %v3185 = vpack.c.b16 %v2629, %v2625
        %v3186 = vpack.c.b16 %v2630, %v2626
        %v3187 = vpack.c.b16 %v2635, %v2631
        %v3188 = vpack.c.b16 %v2636, %v2632
        %v3189 = vpack.c.b16 %v2637, %v2633
        %v3190 = vpack.c.b16 %v2638, %v2634
        %v3191 = vpack.c.b16 %v2643, %v2639
        %v3192 = vpack.c.b16 %v2644, %v2640
        %v3193 = vpack.c.b16 %v2645, %v2641
        %v3194 = vpack.c.b16 %v2646, %v2642
        %v3195 = vpack.c.b16 %v2651, %v2647
        %v3196 = vpack.c.b16 %v2652, %v2648
        %v3197 = vpack.c.b16 %v2653, %v2649
        %v3198 = vpack.c.b16 %v2654, %v2650
        %v3199 = vpack.c.b16 %v2659, %v2655
        %v3200 = vpack.c.b16 %v2660, %v2656
        %v3201 = vpack.c.b16 %v2661, %v2657
        %v3202 = vpack.c.b16 %v2662, %v2658
        %v3203 = vpack.c.b16 %v2667, %v2663
        %v3204 = vpack.c.b16 %v2668, %v2664
        %v3205 = vpack.c.b16 %v2669, %v2665
        %v3206 = vpack.c.b16 %v2670, %v2666
        %v3207 = vpack.c.b16 %v2675, %v2671
        %v3208 = vpack.c.b16 %v2676, %v2672
        %v3209 = vpack.c.b16 %v2677, %v2673
        %v3210 = vpack.c.b16 %v2678, %v2674
        %v3211 = vpack.c.b16 %v2683, %v2679
        %v3212 = vpack.c.b16 %v2684, %v2680
        %v3213 = vpack.c.b16 %v2685, %v2681
        %v3214 = vpack.c.b16 %v2686, %v2682
        %v3215 = vpack.c.b16 %v2691, %v2687
        %v3216 = vpack.c.b16 %v2692, %v2688
        %v3217 = vpack.c.b16 %v2693, %v2689
        %v3218 = vpack.c.b16 %v2694, %v2690
        %v3219 = vpack.c.b16 %v2699, %v2695
        %v3220 = vpack.c.b16 %v2700, %v2696
        %v3221 = vpack.c.b16 %v2701, %v2697
        %v3222 = vpack.c.b16 %v2702, %v2698
        %v3223 = vpack.c.b16 %v2707, %v2703
        %v3224 = vpack.c.b16 %v2708, %v2704
        %v3225 = vpack.c.b16 %v2709, %v2705
        %v3226 = vpack.c.b16 %v2710, %v2706
        %v3227 = vpack.c.b16 %v2715, %v2711
        %v3228 = vpack.c.b16 %v2716, %v2712
        %v3229 = vpack.c.b16 %v2717, %v2713
        %v3230 = vpack.c.b16 %v2718, %v2714
        %3743 = vmatprep.subr.bf16.mxu0 %v2720
        %3744 = vmatpush1.bf16.msra.mxu0 %v2719
        %3745 = vmatprep.subr.bf16.mxu0 %v2724
        %3746 = vmatpush1.bf16.msra.mxu0 %v2723
        %3747 = vmatprep.subr.bf16.mxu0 %v2728
        %3748 = vmatpush1.bf16.msra.mxu0 %v2727
        %3749 = vmatprep.subr.bf16.mxu0 %v2732
        %3750 = vmatpush1.bf16.msra.mxu0 %v2731
        %3751 = vmatprep.subr.bf16.mxu0 %v2736
        %3752 = vmatpush1.bf16.msra.mxu0 %v2735
        %3753 = vmatprep.subr.bf16.mxu0 %v2740
        %3754 = vmatpush1.bf16.msra.mxu0 %v2739
        %3755 = vmatprep.subr.bf16.mxu0 %v2744
        %3756 = vmatpush1.bf16.msra.mxu0 %v2743
        %3757 = vmatprep.subr.bf16.mxu0 %v2748
        %3758 = vmatpush1.bf16.msra.mxu0 %v2747
        %3759 = vmatprep.subr.bf16.mxu0 %v2752
        %3760 = vmatpush1.bf16.msra.mxu0 %v2751
        %3761 = vmatprep.subr.bf16.mxu0 %v2756
        %3762 = vmatpush1.bf16.msra.mxu0 %v2755
        %3763 = vmatprep.subr.bf16.mxu0 %v2760
        %3764 = vmatpush1.bf16.msra.mxu0 %v2759
        %3765 = vmatprep.subr.bf16.mxu0 %v2764
        %3766 = vmatpush1.bf16.msra.mxu0 %v2763
        %3767 = vmatprep.subr.bf16.mxu0 %v2768
        %3768 = vmatpush1.bf16.msra.mxu0 %v2767
        %3769 = vmatprep.subr.bf16.mxu0 %v2772
        %3770 = vmatpush1.bf16.msra.mxu0 %v2771
        %3771 = vmatprep.subr.bf16.mxu0 %v2776
        %3772 = vmatpush1.bf16.msra.mxu0 %v2775
        %3773 = vmatprep.subr.bf16.mxu0 %v2780
        %3774 = vmatpush1.bf16.msra.mxu0 %v2779
        %3775 = vmatprep.mubr.bf16.mxu0 %v656
        %3776 = vmatmul.mubr.bf16.gmra.mrb[0].mxu0 %v655
        %v3777 = vpop.f32.mrb[0].mxu0
        %v3778 = vadd.f32 0.0, %v3777
        %v3779 = vpop.f32.mrb[0].mxu0
        %v3780 = vadd.f32 0.0, %v3779
        %v3781 = vpop.f32.mrb[0].mxu0
        %v3782 = vadd.f32 0.0, %v3781
        %v3783 = vpop.f32.mrb[0].mxu0
        %v3784 = vadd.f32 0.0, %v3783
        %3785 = vdwg.mxu0
        %3786 = vmatprep.subr.bf16.mxu0 %v2784
        %3787 = vmatpush1.bf16.msra.mxu0 %v2783
        %3788 = vmatprep.subr.bf16.mxu0 %v2788
        %3789 = vmatpush1.bf16.msra.mxu0 %v2787
        %3790 = vmatprep.subr.bf16.mxu0 %v2792
        %3791 = vmatpush1.bf16.msra.mxu0 %v2791
        %3792 = vmatprep.subr.bf16.mxu0 %v2796
        %3793 = vmatpush1.bf16.msra.mxu0 %v2795
        %3794 = vmatprep.subr.bf16.mxu0 %v2800
        %3795 = vmatpush1.bf16.msra.mxu0 %v2799
        %3796 = vmatprep.subr.bf16.mxu0 %v2804
        %3797 = vmatpush1.bf16.msra.mxu0 %v2803
        %3798 = vmatprep.subr.bf16.mxu0 %v2808
        %3799 = vmatpush1.bf16.msra.mxu0 %v2807
        %3800 = vmatprep.subr.bf16.mxu0 %v2812
        %3801 = vmatpush1.bf16.msra.mxu0 %v2811
        %3802 = vmatprep.subr.bf16.mxu0 %v2816
        %3803 = vmatpush1.bf16.msra.mxu0 %v2815
        %3804 = vmatprep.subr.bf16.mxu0 %v2820
        %3805 = vmatpush1.bf16.msra.mxu0 %v2819
        %3806 = vmatprep.subr.bf16.mxu0 %v2824
        %3807 = vmatpush1.bf16.msra.mxu0 %v2823
        %3808 = vmatprep.subr.bf16.mxu0 %v2828
        %3809 = vmatpush1.bf16.msra.mxu0 %v2827
        %3810 = vmatprep.subr.bf16.mxu0 %v2832
        %3811 = vmatpush1.bf16.msra.mxu0 %v2831
        %3812 = vmatprep.subr.bf16.mxu0 %v2836
        %3813 = vmatpush1.bf16.msra.mxu0 %v2835
        %3814 = vmatprep.subr.bf16.mxu0 %v2840
        %3815 = vmatpush1.bf16.msra.mxu0 %v2839
        %3816 = vmatprep.subr.bf16.mxu0 %v2844
        %3817 = vmatpush1.bf16.msra.mxu0 %v2843
        %3818 = vmatprep.mubr.bf16.mxu0 %v658
        %3819 = vmatmul.mubr.bf16.gmra.mrb[0].mxu0 %v657
        %v3820 = vpop.f32.mrb[0].mxu0
        %v3821 = vadd.f32 %v3778, %v3820
        %v3822 = vpop.f32.mrb[0].mxu0
        %v3823 = vadd.f32 %v3780, %v3822
        %v3824 = vpop.f32.mrb[0].mxu0
        %v3825 = vadd.f32 %v3782, %v3824
        %v3826 = vpop.f32.mrb[0].mxu0
        %v3827 = vadd.f32 %v3784, %v3826
        %3828 = vdwg.mxu0
        %3829 = vmatprep.subr.bf16.mxu0 %v2848
        %3830 = vmatpush1.bf16.msra.mxu0 %v2847
        %3831 = vmatprep.subr.bf16.mxu0 %v2852
        %3832 = vmatpush1.bf16.msra.mxu0 %v2851
        %3833 = vmatprep.subr.bf16.mxu0 %v2856
        %3834 = vmatpush1.bf16.msra.mxu0 %v2855
        %3835 = vmatprep.subr.bf16.mxu0 %v2860
        %3836 = vmatpush1.bf16.msra.mxu0 %v2859
        %3837 = vmatprep.subr.bf16.mxu0 %v2864
        %3838 = vmatpush1.bf16.msra.mxu0 %v2863
        %3839 = vmatprep.subr.bf16.mxu0 %v2868
        %3840 = vmatpush1.bf16.msra.mxu0 %v2867
        %3841 = vmatprep.subr.bf16.mxu0 %v2872
        %3842 = vmatpush1.bf16.msra.mxu0 %v2871
        %3843 = vmatprep.subr.bf16.mxu0 %v2876
        %3844 = vmatpush1.bf16.msra.mxu0 %v2875
        %3845 = vmatprep.subr.bf16.mxu0 %v2880
        %3846 = vmatpush1.bf16.msra.mxu0 %v2879
        %3847 = vmatprep.subr.bf16.mxu0 %v2884
        %3848 = vmatpush1.bf16.msra.mxu0 %v2883
        %3849 = vmatprep.subr.bf16.mxu0 %v2888
        %3850 = vmatpush1.bf16.msra.mxu0 %v2887
        %3851 = vmatprep.subr.bf16.mxu0 %v2892
        %3852 = vmatpush1.bf16.msra.mxu0 %v2891
        %3853 = vmatprep.subr.bf16.mxu0 %v2896
        %3854 = vmatpush1.bf16.msra.mxu0 %v2895
        %3855 = vmatprep.subr.bf16.mxu0 %v2900
        %3856 = vmatpush1.bf16.msra.mxu0 %v2899
        %3857 = vmatprep.subr.bf16.mxu0 %v2904
        %3858 = vmatpush1.bf16.msra.mxu0 %v2903
        %3859 = vmatprep.subr.bf16.mxu0 %v2908
        %3860 = vmatpush1.bf16.msra.mxu0 %v2907
        %3861 = vmatprep.mubr.bf16.mxu0 %v660
        %3862 = vmatmul.mubr.bf16.gmra.mrb[0].mxu0 %v659
        %v3863 = vpop.f32.mrb[0].mxu0
        %v3864 = vadd.f32 %v3821, %v3863
        %v3865 = vpop.f32.mrb[0].mxu0
        %v3866 = vadd.f32 %v3823, %v3865
        %v3867 = vpop.f32.mrb[0].mxu0
        %v3868 = vadd.f32 %v3825, %v3867
        %v3869 = vpop.f32.mrb[0].mxu0
        %v3870 = vadd.f32 %v3827, %v3869
        %3871 = vdwg.mxu0
        %3872 = vmatprep.subr.bf16.mxu0 %v2912
        %3873 = vmatpush1.bf16.msra.mxu0 %v2911
        %3874 = vmatprep.subr.bf16.mxu0 %v2916
        %3875 = vmatpush1.bf16.msra.mxu0 %v2915
        %3876 = vmatprep.subr.bf16.mxu0 %v2920
        %3877 = vmatpush1.bf16.msra.mxu0 %v2919
        %3878 = vmatprep.subr.bf16.mxu0 %v2924
        %3879 = vmatpush1.bf16.msra.mxu0 %v2923
        %3880 = vmatprep.subr.bf16.mxu0 %v2928
        %3881 = vmatpush1.bf16.msra.mxu0 %v2927
        %3882 = vmatprep.subr.bf16.mxu0 %v2932
        %3883 = vmatpush1.bf16.msra.mxu0 %v2931
        %3884 = vmatprep.subr.bf16.mxu0 %v2936
        %3885 = vmatpush1.bf16.msra.mxu0 %v2935
        %3886 = vmatprep.subr.bf16.mxu0 %v2940
        %3887 = vmatpush1.bf16.msra.mxu0 %v2939
        %3888 = vmatprep.subr.bf16.mxu0 %v2944
        %3889 = vmatpush1.bf16.msra.mxu0 %v2943
        %3890 = vmatprep.subr.bf16.mxu0 %v2948
        %3891 = vmatpush1.bf16.msra.mxu0 %v2947
        %3892 = vmatprep.subr.bf16.mxu0 %v2952
        %3893 = vmatpush1.bf16.msra.mxu0 %v2951
        %3894 = vmatprep.subr.bf16.mxu0 %v2956
        %3895 = vmatpush1.bf16.msra.mxu0 %v2955
        %3896 = vmatprep.subr.bf16.mxu0 %v2960
        %3897 = vmatpush1.bf16.msra.mxu0 %v2959
        %3898 = vmatprep.subr.bf16.mxu0 %v2964
        %3899 = vmatpush1.bf16.msra.mxu0 %v2963
        %3900 = vmatprep.subr.bf16.mxu0 %v2968
        %3901 = vmatpush1.bf16.msra.mxu0 %v2967
        %3902 = vmatprep.subr.bf16.mxu0 %v2972
        %3903 = vmatpush1.bf16.msra.mxu0 %v2971
        %3904 = vmatprep.mubr.bf16.mxu0 %v662
        %3905 = vmatmul.mubr.bf16.gmra.mrb[0].mxu0 %v661
        %v3906 = vpop.f32.mrb[0].mxu0
        %v3907 = vadd.f32 %v3864, %v3906
        %v3908 = vpop.f32.mrb[0].mxu0
        %v3909 = vadd.f32 %v3866, %v3908
        %v3910 = vpop.f32.mrb[0].mxu0
        %v3911 = vadd.f32 %v3868, %v3910
        %v3912 = vpop.f32.mrb[0].mxu0
        %v3913 = vadd.f32 %v3870, %v3912
        %3914 = vdwg.mxu0
        %3915 = vmatprep.subr.bf16.mxu0 %v2976
        %3916 = vmatpush1.bf16.msra.mxu0 %v2975
        %3917 = vmatprep.subr.bf16.mxu0 %v2980
        %3918 = vmatpush1.bf16.msra.mxu0 %v2979
        %3919 = vmatprep.subr.bf16.mxu0 %v2984
        %3920 = vmatpush1.bf16.msra.mxu0 %v2983
        %3921 = vmatprep.subr.bf16.mxu0 %v2988
        %3922 = vmatpush1.bf16.msra.mxu0 %v2987
        %3923 = vmatprep.subr.bf16.mxu0 %v2992
        %3924 = vmatpush1.bf16.msra.mxu0 %v2991
        %3925 = vmatprep.subr.bf16.mxu0 %v2996
        %3926 = vmatpush1.bf16.msra.mxu0 %v2995
        %3927 = vmatprep.subr.bf16.mxu0 %v3000
        %3928 = vmatpush1.bf16.msra.mxu0 %v2999
        %3929 = vmatprep.subr.bf16.mxu0 %v3004
        %3930 = vmatpush1.bf16.msra.mxu0 %v3003
        %3931 = vmatprep.subr.bf16.mxu0 %v3008
        %3932 = vmatpush1.bf16.msra.mxu0 %v3007
        %3933 = vmatprep.subr.bf16.mxu0 %v3012
        %3934 = vmatpush1.bf16.msra.mxu0 %v3011
        %3935 = vmatprep.subr.bf16.mxu0 %v3016
        %3936 = vmatpush1.bf16.msra.mxu0 %v3015
        %3937 = vmatprep.subr.bf16.mxu0 %v3020
        %3938 = vmatpush1.bf16.msra.mxu0 %v3019
        %3939 = vmatprep.subr.bf16.mxu0 %v3024
        %3940 = vmatpush1.bf16.msra.mxu0 %v3023
        %3941 = vmatprep.subr.bf16.mxu0 %v3028
        %3942 = vmatpush1.bf16.msra.mxu0 %v3027
        %3943 = vmatprep.subr.bf16.mxu0 %v3032
        %3944 = vmatpush1.bf16.msra.mxu0 %v3031
        %3945 = vmatprep.subr.bf16.mxu0 %v3036
        %3946 = vmatpush1.bf16.msra.mxu0 %v3035
        %3947 = vmatprep.mubr.bf16.mxu0 %v664
        %3948 = vmatmul.mubr.bf16.gmra.mrb[0].mxu0 %v663
        %v3949 = vpop.f32.mrb[0].mxu0
        %v3950 = vadd.f32 %v3907, %v3949
        %v3951 = vpop.f32.mrb[0].mxu0
        %v3952 = vadd.f32 %v3909, %v3951
        %v3953 = vpop.f32.mrb[0].mxu0
        %v3954 = vadd.f32 %v3911, %v3953
        %v3955 = vpop.f32.mrb[0].mxu0
        %v3956 = vadd.f32 %v3913, %v3955
        %3957 = vdwg.mxu0
        %3958 = vmatprep.subr.bf16.mxu0 %v3040
        %3959 = vmatpush1.bf16.msra.mxu0 %v3039
        %3960 = vmatprep.subr.bf16.mxu0 %v3044
        %3961 = vmatpush1.bf16.msra.mxu0 %v3043
        %3962 = vmatprep.subr.bf16.mxu0 %v3048
        %3963 = vmatpush1.bf16.msra.mxu0 %v3047
        %3964 = vmatprep.subr.bf16.mxu0 %v3052
        %3965 = vmatpush1.bf16.msra.mxu0 %v3051
        %3966 = vmatprep.subr.bf16.mxu0 %v3056
        %3967 = vmatpush1.bf16.msra.mxu0 %v3055
        %3968 = vmatprep.subr.bf16.mxu0 %v3060
        %3969 = vmatpush1.bf16.msra.mxu0 %v3059
        %3970 = vmatprep.subr.bf16.mxu0 %v3064
        %3971 = vmatpush1.bf16.msra.mxu0 %v3063
        %3972 = vmatprep.subr.bf16.mxu0 %v3068
        %3973 = vmatpush1.bf16.msra.mxu0 %v3067
        %3974 = vmatprep.subr.bf16.mxu0 %v3072
        %3975 = vmatpush1.bf16.msra.mxu0 %v3071
        %3976 = vmatprep.subr.bf16.mxu0 %v3076
        %3977 = vmatpush1.bf16.msra.mxu0 %v3075
        %3978 = vmatprep.subr.bf16.mxu0 %v3080
        %3979 = vmatpush1.bf16.msra.mxu0 %v3079
        %3980 = vmatprep.subr.bf16.mxu0 %v3084
        %3981 = vmatpush1.bf16.msra.mxu0 %v3083
        %3982 = vmatprep.subr.bf16.mxu0 %v3088
        %3983 = vmatpush1.bf16.msra.mxu0 %v3087
        %3984 = vmatprep.subr.bf16.mxu0 %v3092
        %3985 = vmatpush1.bf16.msra.mxu0 %v3091
        %3986 = vmatprep.subr.bf16.mxu0 %v3096
        %3987 = vmatpush1.bf16.msra.mxu0 %v3095
        %3988 = vmatprep.subr.bf16.mxu0 %v3100
        %3989 = vmatpush1.bf16.msra.mxu0 %v3099
        %3990 = vmatprep.mubr.bf16.mxu0 %v666
        %3991 = vmatmul.mubr.bf16.gmra.mrb[0].mxu0 %v665
        %v3992 = vpop.f32.mrb[0].mxu0
        %v3993 = vadd.f32 %v3950, %v3992
        %v3994 = vpop.f32.mrb[0].mxu0
        %v3995 = vadd.f32 %v3952, %v3994
        %v3996 = vpop.f32.mrb[0].mxu0
        %v3997 = vadd.f32 %v3954, %v3996
        %v3998 = vpop.f32.mrb[0].mxu0
        %v3999 = vadd.f32 %v3956, %v3998
        %4000 = vdwg.mxu0
        %4001 = vmatprep.subr.bf16.mxu0 %v3104
        %4002 = vmatpush1.bf16.msra.mxu0 %v3103
        %4003 = vmatprep.subr.bf16.mxu0 %v3108
        %4004 = vmatpush1.bf16.msra.mxu0 %v3107
        %4005 = vmatprep.subr.bf16.mxu0 %v3112
        %4006 = vmatpush1.bf16.msra.mxu0 %v3111
        %4007 = vmatprep.subr.bf16.mxu0 %v3116
        %4008 = vmatpush1.bf16.msra.mxu0 %v3115
        %4009 = vmatprep.subr.bf16.mxu0 %v3120
        %4010 = vmatpush1.bf16.msra.mxu0 %v3119
        %4011 = vmatprep.subr.bf16.mxu0 %v3124
        %4012 = vmatpush1.bf16.msra.mxu0 %v3123
        %4013 = vmatprep.subr.bf16.mxu0 %v3128
        %4014 = vmatpush1.bf16.msra.mxu0 %v3127
        %4015 = vmatprep.subr.bf16.mxu0 %v3132
        %4016 = vmatpush1.bf16.msra.mxu0 %v3131
        %4017 = vmatprep.subr.bf16.mxu0 %v3136
        %4018 = vmatpush1.bf16.msra.mxu0 %v3135
        %4019 = vmatprep.subr.bf16.mxu0 %v3140
        %4020 = vmatpush1.bf16.msra.mxu0 %v3139
        %4021 = vmatprep.subr.bf16.mxu0 %v3144
        %4022 = vmatpush1.bf16.msra.mxu0 %v3143
        %4023 = vmatprep.subr.bf16.mxu0 %v3148
        %4024 = vmatpush1.bf16.msra.mxu0 %v3147
        %4025 = vmatprep.subr.bf16.mxu0 %v3152
        %4026 = vmatpush1.bf16.msra.mxu0 %v3151
        %4027 = vmatprep.subr.bf16.mxu0 %v3156
        %4028 = vmatpush1.bf16.msra.mxu0 %v3155
        %4029 = vmatprep.subr.bf16.mxu0 %v3160
        %4030 = vmatpush1.bf16.msra.mxu0 %v3159
        %4031 = vmatprep.subr.bf16.mxu0 %v3164
        %4032 = vmatpush1.bf16.msra.mxu0 %v3163
        %4033 = vmatprep.mubr.bf16.mxu0 %v668
        %4034 = vmatmul.mubr.bf16.gmra.mrb[0].mxu0 %v667
        %v4035 = vpop.f32.mrb[0].mxu0
        %v4036 = vadd.f32 %v3993, %v4035
        %v4037 = vpop.f32.mrb[0].mxu0
        %v4038 = vadd.f32 %v3995, %v4037
        %v4039 = vpop.f32.mrb[0].mxu0
        %v4040 = vadd.f32 %v3997, %v4039
        %v4041 = vpop.f32.mrb[0].mxu0
        %v4042 = vadd.f32 %v3999, %v4041
        %4043 = vdwg.mxu0
        %4044 = vmatprep.subr.bf16.mxu0 %v3168
        %4045 = vmatpush1.bf16.msra.mxu0 %v3167
        %4046 = vmatprep.subr.bf16.mxu0 %v3172
        %4047 = vmatpush1.bf16.msra.mxu0 %v3171
        %4048 = vmatprep.subr.bf16.mxu0 %v3176
        %4049 = vmatpush1.bf16.msra.mxu0 %v3175
        %4050 = vmatprep.subr.bf16.mxu0 %v3180
        %4051 = vmatpush1.bf16.msra.mxu0 %v3179
        %4052 = vmatprep.subr.bf16.mxu0 %v3184
        %4053 = vmatpush1.bf16.msra.mxu0 %v3183
        %4054 = vmatprep.subr.bf16.mxu0 %v3188
        %4055 = vmatpush1.bf16.msra.mxu0 %v3187
        %4056 = vmatprep.subr.bf16.mxu0 %v3192
        %4057 = vmatpush1.bf16.msra.mxu0 %v3191
        %4058 = vmatprep.subr.bf16.mxu0 %v3196
        %4059 = vmatpush1.bf16.msra.mxu0 %v3195
        %4060 = vmatprep.subr.bf16.mxu0 %v3200
        %4061 = vmatpush1.bf16.msra.mxu0 %v3199
        %4062 = vmatprep.subr.bf16.mxu0 %v3204
        %4063 = vmatpush1.bf16.msra.mxu0 %v3203
        %4064 = vmatprep.subr.bf16.mxu0 %v3208
        %4065 = vmatpush1.bf16.msra.mxu0 %v3207
        %4066 = vmatprep.subr.bf16.mxu0 %v3212
        %4067 = vmatpush1.bf16.msra.mxu0 %v3211
        %4068 = vmatprep.subr.bf16.mxu0 %v3216
        %4069 = vmatpush1.bf16.msra.mxu0 %v3215
        %4070 = vmatprep.subr.bf16.mxu0 %v3220
        %4071 = vmatpush1.bf16.msra.mxu0 %v3219
        %4072 = vmatprep.subr.bf16.mxu0 %v3224
        %4073 = vmatpush1.bf16.msra.mxu0 %v3223
        %4074 = vmatprep.subr.bf16.mxu0 %v3228
        %4075 = vmatpush1.bf16.msra.mxu0 %v3227
        %4076 = vmatprep.mubr.bf16.mxu0 %v670
        %4077 = vmatmul.mubr.bf16.gmra.mrb[0].mxu0 %v669
        %v4078 = vpop.f32.mrb[0].mxu0
        %v4079 = vadd.f32 %v4036, %v4078
        %v4080 = vpop.f32.mrb[0].mxu0
        %v4081 = vadd.f32 %v4038, %v4080
        %v4082 = vpop.f32.mrb[0].mxu0
        %v4083 = vadd.f32 %v4040, %v4082
        %v4084 = vpop.f32.mrb[0].mxu0
        %v4085 = vadd.f32 %v4042, %v4084
        %4086 = vdwg.mxu0
        %4087 = vmatprep.subr.bf16.mxu0 %v2722
        %4088 = vmatpush1.bf16.msra.mxu0 %v2721
        %4089 = vmatprep.subr.bf16.mxu0 %v2726
        %4090 = vmatpush1.bf16.msra.mxu0 %v2725
        %4091 = vmatprep.subr.bf16.mxu0 %v2730
        %4092 = vmatpush1.bf16.msra.mxu0 %v2729
        %4093 = vmatprep.subr.bf16.mxu0 %v2734
        %4094 = vmatpush1.bf16.msra.mxu0 %v2733
        %4095 = vmatprep.subr.bf16.mxu0 %v2738
        %4096 = vmatpush1.bf16.msra.mxu0 %v2737
        %4097 = vmatprep.subr.bf16.mxu0 %v2742
        %4098 = vmatpush1.bf16.msra.mxu0 %v2741
        %4099 = vmatprep.subr.bf16.mxu0 %v2746
        %4100 = vmatpush1.bf16.msra.mxu0 %v2745
        %4101 = vmatprep.subr.bf16.mxu0 %v2750
        %4102 = vmatpush1.bf16.msra.mxu0 %v2749
        %4103 = vmatprep.subr.bf16.mxu0 %v2754
        %4104 = vmatpush1.bf16.msra.mxu0 %v2753
        %4105 = vmatprep.subr.bf16.mxu0 %v2758
        %4106 = vmatpush1.bf16.msra.mxu0 %v2757
        %4107 = vmatprep.subr.bf16.mxu0 %v2762
        %4108 = vmatpush1.bf16.msra.mxu0 %v2761
        %4109 = vmatprep.subr.bf16.mxu0 %v2766
        %4110 = vmatpush1.bf16.msra.mxu0 %v2765
        %4111 = vmatprep.subr.bf16.mxu0 %v2770
        %4112 = vmatpush1.bf16.msra.mxu0 %v2769
        %4113 = vmatprep.subr.bf16.mxu0 %v2774
        %4114 = vmatpush1.bf16.msra.mxu0 %v2773
        %4115 = vmatprep.subr.bf16.mxu0 %v2778
        %4116 = vmatpush1.bf16.msra.mxu0 %v2777
        %4117 = vmatprep.subr.bf16.mxu0 %v2782
        %4118 = vmatpush1.bf16.msra.mxu0 %v2781
        %4119 = vmatprep.mubr.bf16.mxu0 %v656
        %4120 = vmatmul.mubr.bf16.gmra.mrb[0].mxu0 %v655
        %v4121 = vpop.f32.mrb[0].mxu0
        %v4122 = vadd.f32 0.0, %v4121
        %v4123 = vpop.f32.mrb[0].mxu0
        %v4124 = vadd.f32 0.0, %v4123
        %v4125 = vpop.f32.mrb[0].mxu0
        %v4126 = vadd.f32 0.0, %v4125
        %v4127 = vpop.f32.mrb[0].mxu0
        %v4128 = vadd.f32 0.0, %v4127
        %4129 = vdwg.mxu0
        %4130 = vmatprep.subr.bf16.mxu0 %v2786
        %4131 = vmatpush1.bf16.msra.mxu0 %v2785
        %4132 = vmatprep.subr.bf16.mxu0 %v2790
        %4133 = vmatpush1.bf16.msra.mxu0 %v2789
        %4134 = vmatprep.subr.bf16.mxu0 %v2794
        %4135 = vmatpush1.bf16.msra.mxu0 %v2793
        %4136 = vmatprep.subr.bf16.mxu0 %v2798
        %4137 = vmatpush1.bf16.msra.mxu0 %v2797
        %4138 = vmatprep.subr.bf16.mxu0 %v2802
        %4139 = vmatpush1.bf16.msra.mxu0 %v2801
        %4140 = vmatprep.subr.bf16.mxu0 %v2806
        %4141 = vmatpush1.bf16.msra.mxu0 %v2805
        %4142 = vmatprep.subr.bf16.mxu0 %v2810
        %4143 = vmatpush1.bf16.msra.mxu0 %v2809
        %4144 = vmatprep.subr.bf16.mxu0 %v2814
        %4145 = vmatpush1.bf16.msra.mxu0 %v2813
        %4146 = vmatprep.subr.bf16.mxu0 %v2818
        %4147 = vmatpush1.bf16.msra.mxu0 %v2817
        %4148 = vmatprep.subr.bf16.mxu0 %v2822
        %4149 = vmatpush1.bf16.msra.mxu0 %v2821
        %4150 = vmatprep.subr.bf16.mxu0 %v2826
        %4151 = vmatpush1.bf16.msra.mxu0 %v2825
        %4152 = vmatprep.subr.bf16.mxu0 %v2830
        %4153 = vmatpush1.bf16.msra.mxu0 %v2829
        %4154 = vmatprep.subr.bf16.mxu0 %v2834
        %4155 = vmatpush1.bf16.msra.mxu0 %v2833
        %4156 = vmatprep.subr.bf16.mxu0 %v2838
        %4157 = vmatpush1.bf16.msra.mxu0 %v2837
        %4158 = vmatprep.subr.bf16.mxu0 %v2842
        %4159 = vmatpush1.bf16.msra.mxu0 %v2841
        %4160 = vmatprep.subr.bf16.mxu0 %v2846
        %4161 = vmatpush1.bf16.msra.mxu0 %v2845
        %4162 = vmatprep.mubr.bf16.mxu0 %v658
        %4163 = vmatmul.mubr.bf16.gmra.mrb[0].mxu0 %v657
        %v4164 = vpop.f32.mrb[0].mxu0
        %v4165 = vadd.f32 %v4122, %v4164
        %v4166 = vpop.f32.mrb[0].mxu0
        %v4167 = vadd.f32 %v4124, %v4166
        %v4168 = vpop.f32.mrb[0].mxu0
        %v4169 = vadd.f32 %v4126, %v4168
        %v4170 = vpop.f32.mrb[0].mxu0
        %v4171 = vadd.f32 %v4128, %v4170
        %4172 = vdwg.mxu0
        %4173 = vmatprep.subr.bf16.mxu0 %v2850
        %4174 = vmatpush1.bf16.msra.mxu0 %v2849
        %4175 = vmatprep.subr.bf16.mxu0 %v2854
        %4176 = vmatpush1.bf16.msra.mxu0 %v2853
        %4177 = vmatprep.subr.bf16.mxu0 %v2858
        %4178 = vmatpush1.bf16.msra.mxu0 %v2857
        %4179 = vmatprep.subr.bf16.mxu0 %v2862
        %4180 = vmatpush1.bf16.msra.mxu0 %v2861
        %4181 = vmatprep.subr.bf16.mxu0 %v2866
        %4182 = vmatpush1.bf16.msra.mxu0 %v2865
        %4183 = vmatprep.subr.bf16.mxu0 %v2870
        %4184 = vmatpush1.bf16.msra.mxu0 %v2869
        %4185 = vmatprep.subr.bf16.mxu0 %v2874
        %4186 = vmatpush1.bf16.msra.mxu0 %v2873
        %4187 = vmatprep.subr.bf16.mxu0 %v2878
        %4188 = vmatpush1.bf16.msra.mxu0 %v2877
        %4189 = vmatprep.subr.bf16.mxu0 %v2882
        %4190 = vmatpush1.bf16.msra.mxu0 %v2881
        %4191 = vmatprep.subr.bf16.mxu0 %v2886
        %4192 = vmatpush1.bf16.msra.mxu0 %v2885
        %4193 = vmatprep.subr.bf16.mxu0 %v2890
        %4194 = vmatpush1.bf16.msra.mxu0 %v2889
        %4195 = vmatprep.subr.bf16.mxu0 %v2894
        %4196 = vmatpush1.bf16.msra.mxu0 %v2893
        %4197 = vmatprep.subr.bf16.mxu0 %v2898
        %4198 = vmatpush1.bf16.msra.mxu0 %v2897
        %4199 = vmatprep.subr.bf16.mxu0 %v2902
        %4200 = vmatpush1.bf16.msra.mxu0 %v2901
        %4201 = vmatprep.subr.bf16.mxu0 %v2906
        %4202 = vmatpush1.bf16.msra.mxu0 %v2905
        %4203 = vmatprep.subr.bf16.mxu0 %v2910
        %4204 = vmatpush1.bf16.msra.mxu0 %v2909
        %4205 = vmatprep.mubr.bf16.mxu0 %v660
        %4206 = vmatmul.mubr.bf16.gmra.mrb[0].mxu0 %v659
        %v4207 = vpop.f32.mrb[0].mxu0
        %v4208 = vadd.f32 %v4165, %v4207
        %v4209 = vpop.f32.mrb[0].mxu0
        %v4210 = vadd.f32 %v4167, %v4209
        %v4211 = vpop.f32.mrb[0].mxu0
        %v4212 = vadd.f32 %v4169, %v4211
        %v4213 = vpop.f32.mrb[0].mxu0
        %v4214 = vadd.f32 %v4171, %v4213
        %4215 = vdwg.mxu0
        %4216 = vmatprep.subr.bf16.mxu0 %v2914
        %4217 = vmatpush1.bf16.msra.mxu0 %v2913
        %4218 = vmatprep.subr.bf16.mxu0 %v2918
        %4219 = vmatpush1.bf16.msra.mxu0 %v2917
        %4220 = vmatprep.subr.bf16.mxu0 %v2922
        %4221 = vmatpush1.bf16.msra.mxu0 %v2921
        %4222 = vmatprep.subr.bf16.mxu0 %v2926
        %4223 = vmatpush1.bf16.msra.mxu0 %v2925
        %4224 = vmatprep.subr.bf16.mxu0 %v2930
        %4225 = vmatpush1.bf16.msra.mxu0 %v2929
        %4226 = vmatprep.subr.bf16.mxu0 %v2934
        %4227 = vmatpush1.bf16.msra.mxu0 %v2933
        %4228 = vmatprep.subr.bf16.mxu0 %v2938
        %4229 = vmatpush1.bf16.msra.mxu0 %v2937
        %4230 = vmatprep.subr.bf16.mxu0 %v2942
        %4231 = vmatpush1.bf16.msra.mxu0 %v2941
        %4232 = vmatprep.subr.bf16.mxu0 %v2946
        %4233 = vmatpush1.bf16.msra.mxu0 %v2945
        %4234 = vmatprep.subr.bf16.mxu0 %v2950
        %4235 = vmatpush1.bf16.msra.mxu0 %v2949
        %4236 = vmatprep.subr.bf16.mxu0 %v2954
        %4237 = vmatpush1.bf16.msra.mxu0 %v2953
        %4238 = vmatprep.subr.bf16.mxu0 %v2958
        %4239 = vmatpush1.bf16.msra.mxu0 %v2957
        %4240 = vmatprep.subr.bf16.mxu0 %v2962
        %4241 = vmatpush1.bf16.msra.mxu0 %v2961
        %4242 = vmatprep.subr.bf16.mxu0 %v2966
        %4243 = vmatpush1.bf16.msra.mxu0 %v2965
        %4244 = vmatprep.subr.bf16.mxu0 %v2970
        %4245 = vmatpush1.bf16.msra.mxu0 %v2969
        %4246 = vmatprep.subr.bf16.mxu0 %v2974
        %4247 = vmatpush1.bf16.msra.mxu0 %v2973
        %4248 = vmatprep.mubr.bf16.mxu0 %v662
        %4249 = vmatmul.mubr.bf16.gmra.mrb[0].mxu0 %v661
        %v4250 = vpop.f32.mrb[0].mxu0
        %v4251 = vadd.f32 %v4208, %v4250
        %v4252 = vpop.f32.mrb[0].mxu0
        %v4253 = vadd.f32 %v4210, %v4252
        %v4254 = vpop.f32.mrb[0].mxu0
        %v4255 = vadd.f32 %v4212, %v4254
        %v4256 = vpop.f32.mrb[0].mxu0
        %v4257 = vadd.f32 %v4214, %v4256
        %4258 = vdwg.mxu0
        %4259 = vmatprep.subr.bf16.mxu0 %v2978
        %4260 = vmatpush1.bf16.msra.mxu0 %v2977
        %4261 = vmatprep.subr.bf16.mxu0 %v2982
        %4262 = vmatpush1.bf16.msra.mxu0 %v2981
        %4263 = vmatprep.subr.bf16.mxu0 %v2986
        %4264 = vmatpush1.bf16.msra.mxu0 %v2985
        %4265 = vmatprep.subr.bf16.mxu0 %v2990
        %4266 = vmatpush1.bf16.msra.mxu0 %v2989
        %4267 = vmatprep.subr.bf16.mxu0 %v2994
        %4268 = vmatpush1.bf16.msra.mxu0 %v2993
        %4269 = vmatprep.subr.bf16.mxu0 %v2998
        %4270 = vmatpush1.bf16.msra.mxu0 %v2997
        %4271 = vmatprep.subr.bf16.mxu0 %v3002
        %4272 = vmatpush1.bf16.msra.mxu0 %v3001
        %4273 = vmatprep.subr.bf16.mxu0 %v3006
        %4274 = vmatpush1.bf16.msra.mxu0 %v3005
        %4275 = vmatprep.subr.bf16.mxu0 %v3010
        %4276 = vmatpush1.bf16.msra.mxu0 %v3009
        %4277 = vmatprep.subr.bf16.mxu0 %v3014
        %4278 = vmatpush1.bf16.msra.mxu0 %v3013
        %4279 = vmatprep.subr.bf16.mxu0 %v3018
        %4280 = vmatpush1.bf16.msra.mxu0 %v3017
        %4281 = vmatprep.subr.bf16.mxu0 %v3022
        %4282 = vmatpush1.bf16.msra.mxu0 %v3021
        %4283 = vmatprep.subr.bf16.mxu0 %v3026
        %4284 = vmatpush1.bf16.msra.mxu0 %v3025
        %4285 = vmatprep.subr.bf16.mxu0 %v3030
        %4286 = vmatpush1.bf16.msra.mxu0 %v3029
        %4287 = vmatprep.subr.bf16.mxu0 %v3034
        %4288 = vmatpush1.bf16.msra.mxu0 %v3033
        %4289 = vmatprep.subr.bf16.mxu0 %v3038
        %4290 = vmatpush1.bf16.msra.mxu0 %v3037
        %4291 = vmatprep.mubr.bf16.mxu0 %v664
        %4292 = vmatmul.mubr.bf16.gmra.mrb[0].mxu0 %v663
        %v4293 = vpop.f32.mrb[0].mxu0
        %v4294 = vadd.f32 %v4251, %v4293
        %v4295 = vpop.f32.mrb[0].mxu0
        %v4296 = vadd.f32 %v4253, %v4295
        %v4297 = vpop.f32.mrb[0].mxu0
        %v4298 = vadd.f32 %v4255, %v4297
        %v4299 = vpop.f32.mrb[0].mxu0
        %v4300 = vadd.f32 %v4257, %v4299
        %4301 = vdwg.mxu0
        %4302 = vmatprep.subr.bf16.mxu0 %v3042
        %4303 = vmatpush1.bf16.msra.mxu0 %v3041
        %4304 = vmatprep.subr.bf16.mxu0 %v3046
        %4305 = vmatpush1.bf16.msra.mxu0 %v3045
        %4306 = vmatprep.subr.bf16.mxu0 %v3050
        %4307 = vmatpush1.bf16.msra.mxu0 %v3049
        %4308 = vmatprep.subr.bf16.mxu0 %v3054
        %4309 = vmatpush1.bf16.msra.mxu0 %v3053
        %4310 = vmatprep.subr.bf16.mxu0 %v3058
        %4311 = vmatpush1.bf16.msra.mxu0 %v3057
        %4312 = vmatprep.subr.bf16.mxu0 %v3062
        %4313 = vmatpush1.bf16.msra.mxu0 %v3061
        %4314 = vmatprep.subr.bf16.mxu0 %v3066
        %4315 = vmatpush1.bf16.msra.mxu0 %v3065
        %4316 = vmatprep.subr.bf16.mxu0 %v3070
        %4317 = vmatpush1.bf16.msra.mxu0 %v3069
        %4318 = vmatprep.subr.bf16.mxu0 %v3074
        %4319 = vmatpush1.bf16.msra.mxu0 %v3073
        %4320 = vmatprep.subr.bf16.mxu0 %v3078
        %4321 = vmatpush1.bf16.msra.mxu0 %v3077
        %4322 = vmatprep.subr.bf16.mxu0 %v3082
        %4323 = vmatpush1.bf16.msra.mxu0 %v3081
        %4324 = vmatprep.subr.bf16.mxu0 %v3086
        %4325 = vmatpush1.bf16.msra.mxu0 %v3085
        %4326 = vmatprep.subr.bf16.mxu0 %v3090
        %4327 = vmatpush1.bf16.msra.mxu0 %v3089
        %4328 = vmatprep.subr.bf16.mxu0 %v3094
        %4329 = vmatpush1.bf16.msra.mxu0 %v3093
        %4330 = vmatprep.subr.bf16.mxu0 %v3098
        %4331 = vmatpush1.bf16.msra.mxu0 %v3097
        %4332 = vmatprep.subr.bf16.mxu0 %v3102
        %4333 = vmatpush1.bf16.msra.mxu0 %v3101
        %4334 = vmatprep.mubr.bf16.mxu0 %v666
        %4335 = vmatmul.mubr.bf16.gmra.mrb[0].mxu0 %v665
        %v4336 = vpop.f32.mrb[0].mxu0
        %v4337 = vadd.f32 %v4294, %v4336
        %v4338 = vpop.f32.mrb[0].mxu0
        %v4339 = vadd.f32 %v4296, %v4338
        %v4340 = vpop.f32.mrb[0].mxu0
        %v4341 = vadd.f32 %v4298, %v4340
        %v4342 = vpop.f32.mrb[0].mxu0
        %v4343 = vadd.f32 %v4300, %v4342
        %4344 = vdwg.mxu0
        %4345 = vmatprep.subr.bf16.mxu0 %v3106
        %4346 = vmatpush1.bf16.msra.mxu0 %v3105
        %4347 = vmatprep.subr.bf16.mxu0 %v3110
        %4348 = vmatpush1.bf16.msra.mxu0 %v3109
        %4349 = vmatprep.subr.bf16.mxu0 %v3114
        %4350 = vmatpush1.bf16.msra.mxu0 %v3113
        %4351 = vmatprep.subr.bf16.mxu0 %v3118
        %4352 = vmatpush1.bf16.msra.mxu0 %v3117
        %4353 = vmatprep.subr.bf16.mxu0 %v3122
        %4354 = vmatpush1.bf16.msra.mxu0 %v3121
        %4355 = vmatprep.subr.bf16.mxu0 %v3126
        %4356 = vmatpush1.bf16.msra.mxu0 %v3125
        %4357 = vmatprep.subr.bf16.mxu0 %v3130
        %4358 = vmatpush1.bf16.msra.mxu0 %v3129
        %4359 = vmatprep.subr.bf16.mxu0 %v3134
        %4360 = vmatpush1.bf16.msra.mxu0 %v3133
        %4361 = vmatprep.subr.bf16.mxu0 %v3138
        %4362 = vmatpush1.bf16.msra.mxu0 %v3137
        %4363 = vmatprep.subr.bf16.mxu0 %v3142
        %4364 = vmatpush1.bf16.msra.mxu0 %v3141
        %4365 = vmatprep.subr.bf16.mxu0 %v3146
        %4366 = vmatpush1.bf16.msra.mxu0 %v3145
        %4367 = vmatprep.subr.bf16.mxu0 %v3150
        %4368 = vmatpush1.bf16.msra.mxu0 %v3149
        %4369 = vmatprep.subr.bf16.mxu0 %v3154
        %4370 = vmatpush1.bf16.msra.mxu0 %v3153
        %4371 = vmatprep.subr.bf16.mxu0 %v3158
        %4372 = vmatpush1.bf16.msra.mxu0 %v3157
        %4373 = vmatprep.subr.bf16.mxu0 %v3162
        %4374 = vmatpush1.bf16.msra.mxu0 %v3161
        %4375 = vmatprep.subr.bf16.mxu0 %v3166
        %4376 = vmatpush1.bf16.msra.mxu0 %v3165
        %4377 = vmatprep.mubr.bf16.mxu0 %v668
        %4378 = vmatmul.mubr.bf16.gmra.mrb[0].mxu0 %v667
        %v4379 = vpop.f32.mrb[0].mxu0
        %v4380 = vadd.f32 %v4337, %v4379
        %v4381 = vpop.f32.mrb[0].mxu0
        %v4382 = vadd.f32 %v4339, %v4381
        %v4383 = vpop.f32.mrb[0].mxu0
        %v4384 = vadd.f32 %v4341, %v4383
        %v4385 = vpop.f32.mrb[0].mxu0
        %v4386 = vadd.f32 %v4343, %v4385
        %4387 = vdwg.mxu0
        %4388 = vmatprep.subr.bf16.mxu0 %v3170
        %4389 = vmatpush1.bf16.msra.mxu0 %v3169
        %4390 = vmatprep.subr.bf16.mxu0 %v3174
        %4391 = vmatpush1.bf16.msra.mxu0 %v3173
        %4392 = vmatprep.subr.bf16.mxu0 %v3178
        %4393 = vmatpush1.bf16.msra.mxu0 %v3177
        %4394 = vmatprep.subr.bf16.mxu0 %v3182
        %4395 = vmatpush1.bf16.msra.mxu0 %v3181
        %4396 = vmatprep.subr.bf16.mxu0 %v3186
        %4397 = vmatpush1.bf16.msra.mxu0 %v3185
        %4398 = vmatprep.subr.bf16.mxu0 %v3190
        %4399 = vmatpush1.bf16.msra.mxu0 %v3189
        %4400 = vmatprep.subr.bf16.mxu0 %v3194
        %4401 = vmatpush1.bf16.msra.mxu0 %v3193
        %4402 = vmatprep.subr.bf16.mxu0 %v3198
        %4403 = vmatpush1.bf16.msra.mxu0 %v3197
        %4404 = vmatprep.subr.bf16.mxu0 %v3202
        %4405 = vmatpush1.bf16.msra.mxu0 %v3201
        %4406 = vmatprep.subr.bf16.mxu0 %v3206
        %4407 = vmatpush1.bf16.msra.mxu0 %v3205
        %4408 = vmatprep.subr.bf16.mxu0 %v3210
        %4409 = vmatpush1.bf16.msra.mxu0 %v3209
        %4410 = vmatprep.subr.bf16.mxu0 %v3214
        %4411 = vmatpush1.bf16.msra.mxu0 %v3213
        %4412 = vmatprep.subr.bf16.mxu0 %v3218
        %4413 = vmatpush1.bf16.msra.mxu0 %v3217
        %4414 = vmatprep.subr.bf16.mxu0 %v3222
        %4415 = vmatpush1.bf16.msra.mxu0 %v3221
        %4416 = vmatprep.subr.bf16.mxu0 %v3226
        %4417 = vmatpush1.bf16.msra.mxu0 %v3225
        %4418 = vmatprep.subr.bf16.mxu0 %v3230
        %4419 = vmatpush1.bf16.msra.mxu0 %v3229
        %4420 = vmatprep.mubr.bf16.mxu0 %v670
        %4421 = vmatmul.mubr.bf16.gmra.mrb[0].mxu0 %v669
        %v4422 = vpop.f32.mrb[0].mxu0
        %v4423 = vadd.f32 %v4380, %v4422
        %v4424 = vpop.f32.mrb[0].mxu0
        %v4425 = vadd.f32 %v4382, %v4424
        %v4426 = vpop.f32.mrb[0].mxu0
        %v4427 = vadd.f32 %v4384, %v4426
        %v4428 = vpop.f32.mrb[0].mxu0
        %v4429 = vadd.f32 %v4386, %v4428
        %4430 = vdwg.mxu0
        %v4431 = vadd.f32 %v615, %v4079
        %v4432 = vadd.f32 %v616, %v4081
        %v4433 = vadd.f32 %v617, %v4423
        %v4434 = vadd.f32 %v618, %v4425
        %v4435 = vadd.f32 %v619, %v4083
        %v4436 = vadd.f32 %v620, %v4085
        %v4437 = vadd.f32 %v621, %v4427
        %v4438 = vadd.f32 %v622, %v4429
        %4439 = vst [vmem:[#allocation2] sm:$0xff] %v4431
        %4440 = vst [vmem:[#allocation2 + $0x8] sm:$0xff] %v4432
        %4441 = vst [vmem:[#allocation2 + $0x10] sm:$0xff] %v4433
        %4442 = vst [vmem:[#allocation2 + $0x18] sm:$0xff] %v4434
        %4443 = vst [vmem:[#allocation2 + $0x20] sm:$0xff] %v4435
        %4444 = vst [vmem:[#allocation2 + $0x28] sm:$0xff] %v4436
        %4445 = vst [vmem:[#allocation2 + $0x30] sm:$0xff] %v4437
        %4446 = vst [vmem:[#allocation2 + $0x38] sm:$0xff] %v4438
        %p4447 = scmp.eq.s32.totalorder %s41, 3
        // Predicated region
        $region89: #{tpu_custom_call.1} parent=51 // pred_check
          %p4448 = pneg %p4447
        $region90: #{tpu_custom_call.1} parent=51 // pred_check_branch
          %4450 = sbr.rel (%p4448) target = $region92
        $region91: #{tpu_custom_call.1} parent=51 // pred_region
          %v4451 = vld [vmem:[#allocation2] sm:$0xff]
          %v4452 = vld [vmem:[#allocation2 + $0x8] sm:$0xff]
          %v4453 = vld [vmem:[#allocation2 + $0x10] sm:$0xff]
          %v4454 = vld [vmem:[#allocation2 + $0x18] sm:$0xff]
          %v4455 = vld [vmem:[#allocation2 + $0x20] sm:$0xff]
          %v4456 = vld [vmem:[#allocation2 + $0x28] sm:$0xff]
          %v4457 = vld [vmem:[#allocation2 + $0x30] sm:$0xff]
          %v4458 = vld [vmem:[#allocation2 + $0x38] sm:$0xff]
          %v4459 = vld [vmem:[#allocation8] sm:$0xf]
          %v4461 = vlaneseq
          %v4462 = vshrl.u32 %v4461, 7
          %v4463 = vsub.s32 0, %v4462
          %v4464 = vrot.slane %v4459, %v4463
          %v4465 = vlaneseq
          %v4466 = vshrl.u32 %v4465, 7
          %v4467 = vsub.s32 1, %v4466
          %v4468 = vrot.slane %v4459, %v4467
          %v4469 = vlaneseq
          %v4470 = vshrl.u32 %v4469, 7
          %v4471 = vsub.s32 2, %v4470
          %v4472 = vrot.slane %v4459, %v4471
          %v4473 = vlaneseq
          %v4474 = vshrl.u32 %v4473, 7
          %v4475 = vsub.s32 3, %v4474
          %v4476 = vrot.slane %v4459, %v4475
          %v4481 = vadd.f32 %v4451, %v4464
          %v4482 = vadd.f32 %v4452, %v4468
          %v4483 = vadd.f32 %v4453, %v4472
          %v4484 = vadd.f32 %v4454, %v4476
          %v4485 = vadd.f32 %v4455, %v4464
          %v4486 = vadd.f32 %v4456, %v4468
          %v4487 = vadd.f32 %v4457, %v4472
          %v4488 = vadd.f32 %v4458, %v4476
          %4489 = vst [vmem:[#allocation17] sm:$0xff] %v4481
          %4490 = vst [vmem:[#allocation17 + $0x8] sm:$0xff] %v4482
          %4491 = vst [vmem:[#allocation17 + $0x10] sm:$0xff] %v4483
          %4492 = vst [vmem:[#allocation17 + $0x18] sm:$0xff] %v4484
          %4493 = vst [vmem:[#allocation17 + $0x20] sm:$0xff] %v4485
          %4494 = vst [vmem:[#allocation17 + $0x28] sm:$0xff] %v4486
          %4495 = vst [vmem:[#allocation17 + $0x30] sm:$0xff] %v4487
          %4496 = vst [vmem:[#allocation17 + $0x38] sm:$0xff] %v4488
          %v4497 = vld [vmem:[#allocation9] sm:$0xff]
          %v4498 = vld [vmem:[#allocation9 + $0x8] sm:$0xff]
          %v4499 = vld [vmem:[#allocation9 + $0x10] sm:$0xff]
          %v4500 = vld [vmem:[#allocation9 + $0x18] sm:$0xff]
          %v4501 = vld [vmem:[#allocation9 + $0x20] sm:$0xff]
          %v4502 = vld [vmem:[#allocation9 + $0x28] sm:$0xff]
          %v4503 = vld [vmem:[#allocation9 + $0x30] sm:$0xff]
          %v4504 = vld [vmem:[#allocation9 + $0x38] sm:$0xff]
          %v4505 = vld [vmem:[#allocation9 + $0x40] sm:$0xff]
          %v4506 = vld [vmem:[#allocation9 + $0x48] sm:$0xff]
          %v4507 = vld [vmem:[#allocation9 + $0x50] sm:$0xff]
          %v4508 = vld [vmem:[#allocation9 + $0x58] sm:$0xff]
          %v4509 = vld [vmem:[#allocation9 + $0x60] sm:$0xff]
          %v4510 = vld [vmem:[#allocation9 + $0x68] sm:$0xff]
          %v4511 = vld [vmem:[#allocation9 + $0x70] sm:$0xff]
          %v4512 = vld [vmem:[#allocation9 + $0x78] sm:$0xff]
          %v4513 = vld [vmem:[#allocation9 + $0x80] sm:$0xff]
          %v4514 = vld [vmem:[#allocation9 + $0x88] sm:$0xff]
          %v4515 = vld [vmem:[#allocation9 + $0x90] sm:$0xff]
          %v4516 = vld [vmem:[#allocation9 + $0x98] sm:$0xff]
          %v4517 = vld [vmem:[#allocation9 + $0xa0] sm:$0xff]
          %v4518 = vld [vmem:[#allocation9 + $0xa8] sm:$0xff]
          %v4519 = vld [vmem:[#allocation9 + $0xb0] sm:$0xff]
          %v4520 = vld [vmem:[#allocation9 + $0xb8] sm:$0xff]
          %v4521 = vld [vmem:[#allocation9 + $0xc0] sm:$0xff]
          %v4522 = vld [vmem:[#allocation9 + $0xc8] sm:$0xff]
          %v4523 = vld [vmem:[#allocation9 + $0xd0] sm:$0xff]
          %v4524 = vld [vmem:[#allocation9 + $0xd8] sm:$0xff]
          %v4525 = vld [vmem:[#allocation9 + $0xe0] sm:$0xff]
          %v4526 = vld [vmem:[#allocation9 + $0xe8] sm:$0xff]
          %v4527 = vld [vmem:[#allocation9 + $0xf0] sm:$0xff]
          %v4528 = vld [vmem:[#allocation9 + $0xf8] sm:$0xff]
          %v4529 = vld [vmem:[#allocation9 + $0x100] sm:$0xff]
          %v4530 = vld [vmem:[#allocation9 + $0x108] sm:$0xff]
          %v4531 = vld [vmem:[#allocation9 + $0x110] sm:$0xff]
          %v4532 = vld [vmem:[#allocation9 + $0x118] sm:$0xff]
          %v4533 = vld [vmem:[#allocation9 + $0x120] sm:$0xff]
          %v4534 = vld [vmem:[#allocation9 + $0x128] sm:$0xff]
          %v4535 = vld [vmem:[#allocation9 + $0x130] sm:$0xff]
          %v4536 = vld [vmem:[#allocation9 + $0x138] sm:$0xff]
          %v4537 = vld [vmem:[#allocation9 + $0x140] sm:$0xff]
          %v4538 = vld [vmem:[#allocation9 + $0x148] sm:$0xff]
          %v4539 = vld [vmem:[#allocation9 + $0x150] sm:$0xff]
          %v4540 = vld [vmem:[#allocation9 + $0x158] sm:$0xff]
          %v4541 = vld [vmem:[#allocation9 + $0x160] sm:$0xff]
          %v4542 = vld [vmem:[#allocation9 + $0x168] sm:$0xff]
          %v4543 = vld [vmem:[#allocation9 + $0x170] sm:$0xff]
          %v4544 = vld [vmem:[#allocation9 + $0x178] sm:$0xff]
          %v4545 = vld [vmem:[#allocation9 + $0x180] sm:$0xff]
          %v4546 = vld [vmem:[#allocation9 + $0x188] sm:$0xff]
          %v4547 = vld [vmem:[#allocation9 + $0x190] sm:$0xff]
          %v4548 = vld [vmem:[#allocation9 + $0x198] sm:$0xff]
          %v4549 = vld [vmem:[#allocation9 + $0x1a0] sm:$0xff]
          %v4550 = vld [vmem:[#allocation9 + $0x1a8] sm:$0xff]
          %v4551 = vld [vmem:[#allocation9 + $0x1b0] sm:$0xff]
          %v4552 = vld [vmem:[#allocation9 + $0x1b8] sm:$0xff]
          %v4553 = vld [vmem:[#allocation9 + $0x1c0] sm:$0xff]
          %v4554 = vld [vmem:[#allocation9 + $0x1c8] sm:$0xff]
          %v4555 = vld [vmem:[#allocation9 + $0x1d0] sm:$0xff]
          %v4556 = vld [vmem:[#allocation9 + $0x1d8] sm:$0xff]
          %v4557 = vld [vmem:[#allocation9 + $0x1e0] sm:$0xff]
          %v4558 = vld [vmem:[#allocation9 + $0x1e8] sm:$0xff]
          %v4559 = vld [vmem:[#allocation9 + $0x1f0] sm:$0xff]
          %v4560 = vld [vmem:[#allocation9 + $0x1f8] sm:$0xff]
          %v4561 = vld [vmem:[#allocation9 + $0x200] sm:$0xff]
          %v4562 = vld [vmem:[#allocation9 + $0x208] sm:$0xff]
          %v4563 = vld [vmem:[#allocation9 + $0x210] sm:$0xff]
          %v4564 = vld [vmem:[#allocation9 + $0x218] sm:$0xff]
          %v4565 = vld [vmem:[#allocation9 + $0x220] sm:$0xff]
          %v4566 = vld [vmem:[#allocation9 + $0x228] sm:$0xff]
          %v4567 = vld [vmem:[#allocation9 + $0x230] sm:$0xff]
          %v4568 = vld [vmem:[#allocation9 + $0x238] sm:$0xff]
          %v4569 = vld [vmem:[#allocation9 + $0x240] sm:$0xff]
          %v4570 = vld [vmem:[#allocation9 + $0x248] sm:$0xff]
          %v4571 = vld [vmem:[#allocation9 + $0x250] sm:$0xff]
          %v4572 = vld [vmem:[#allocation9 + $0x258] sm:$0xff]
          %v4573 = vld [vmem:[#allocation9 + $0x260] sm:$0xff]
          %v4574 = vld [vmem:[#allocation9 + $0x268] sm:$0xff]
          %v4575 = vld [vmem:[#allocation9 + $0x270] sm:$0xff]
          %v4576 = vld [vmem:[#allocation9 + $0x278] sm:$0xff]
          %v4577 = vld [vmem:[#allocation9 + $0x280] sm:$0xff]
          %v4578 = vld [vmem:[#allocation9 + $0x288] sm:$0xff]
          %v4579 = vld [vmem:[#allocation9 + $0x290] sm:$0xff]
          %v4580 = vld [vmem:[#allocation9 + $0x298] sm:$0xff]
          %v4581 = vld [vmem:[#allocation9 + $0x2a0] sm:$0xff]
          %v4582 = vld [vmem:[#allocation9 + $0x2a8] sm:$0xff]
          %v4583 = vld [vmem:[#allocation9 + $0x2b0] sm:$0xff]
          %v4584 = vld [vmem:[#allocation9 + $0x2b8] sm:$0xff]
          %v4585 = vld [vmem:[#allocation9 + $0x2c0] sm:$0xff]
          %v4586 = vld [vmem:[#allocation9 + $0x2c8] sm:$0xff]
          %v4587 = vld [vmem:[#allocation9 + $0x2d0] sm:$0xff]
          %v4588 = vld [vmem:[#allocation9 + $0x2d8] sm:$0xff]
          %v4589 = vld [vmem:[#allocation9 + $0x2e0] sm:$0xff]
          %v4590 = vld [vmem:[#allocation9 + $0x2e8] sm:$0xff]
          %v4591 = vld [vmem:[#allocation9 + $0x2f0] sm:$0xff]
          %v4592 = vld [vmem:[#allocation9 + $0x2f8] sm:$0xff]
          %v4593 = vld [vmem:[#allocation9 + $0x300] sm:$0xff]
          %v4594 = vld [vmem:[#allocation9 + $0x308] sm:$0xff]
          %v4595 = vld [vmem:[#allocation9 + $0x310] sm:$0xff]
          %v4596 = vld [vmem:[#allocation9 + $0x318] sm:$0xff]
          %v4597 = vld [vmem:[#allocation9 + $0x320] sm:$0xff]
          %v4598 = vld [vmem:[#allocation9 + $0x328] sm:$0xff]
          %v4599 = vld [vmem:[#allocation9 + $0x330] sm:$0xff]
          %v4600 = vld [vmem:[#allocation9 + $0x338] sm:$0xff]
          %v4601 = vld [vmem:[#allocation9 + $0x340] sm:$0xff]
          %v4602 = vld [vmem:[#allocation9 + $0x348] sm:$0xff]
          %v4603 = vld [vmem:[#allocation9 + $0x350] sm:$0xff]
          %v4604 = vld [vmem:[#allocation9 + $0x358] sm:$0xff]
          %v4605 = vld [vmem:[#allocation9 + $0x360] sm:$0xff]
          %v4606 = vld [vmem:[#allocation9 + $0x368] sm:$0xff]
          %v4607 = vld [vmem:[#allocation9 + $0x370] sm:$0xff]
          %v4608 = vld [vmem:[#allocation9 + $0x378] sm:$0xff]
          %v4609 = vld [vmem:[#allocation9 + $0x380] sm:$0xff]
          %v4610 = vld [vmem:[#allocation9 + $0x388] sm:$0xff]
          %v4611 = vld [vmem:[#allocation9 + $0x390] sm:$0xff]
          %v4612 = vld [vmem:[#allocation9 + $0x398] sm:$0xff]
          %v4613 = vld [vmem:[#allocation9 + $0x3a0] sm:$0xff]
          %v4614 = vld [vmem:[#allocation9 + $0x3a8] sm:$0xff]
          %v4615 = vld [vmem:[#allocation9 + $0x3b0] sm:$0xff]
          %v4616 = vld [vmem:[#allocation9 + $0x3b8] sm:$0xff]
          %v4617 = vld [vmem:[#allocation9 + $0x3c0] sm:$0xff]
          %v4618 = vld [vmem:[#allocation9 + $0x3c8] sm:$0xff]
          %v4619 = vld [vmem:[#allocation9 + $0x3d0] sm:$0xff]
          %v4620 = vld [vmem:[#allocation9 + $0x3d8] sm:$0xff]
          %v4621 = vld [vmem:[#allocation9 + $0x3e0] sm:$0xff]
          %v4622 = vld [vmem:[#allocation9 + $0x3e8] sm:$0xff]
          %v4623 = vld [vmem:[#allocation9 + $0x3f0] sm:$0xff]
          %v4624 = vld [vmem:[#allocation9 + $0x3f8] sm:$0xff]
          %v4625 = vld [vmem:[#allocation9 + $0x400] sm:$0xff]
          %v4626 = vld [vmem:[#allocation9 + $0x408] sm:$0xff]
          %v4627 = vld [vmem:[#allocation9 + $0x410] sm:$0xff]
          %v4628 = vld [vmem:[#allocation9 + $0x418] sm:$0xff]
          %v4629 = vld [vmem:[#allocation9 + $0x420] sm:$0xff]
          %v4630 = vld [vmem:[#allocation9 + $0x428] sm:$0xff]
          %v4631 = vld [vmem:[#allocation9 + $0x430] sm:$0xff]
          %v4632 = vld [vmem:[#allocation9 + $0x438] sm:$0xff]
          %v4633 = vld [vmem:[#allocation9 + $0x440] sm:$0xff]
          %v4634 = vld [vmem:[#allocation9 + $0x448] sm:$0xff]
          %v4635 = vld [vmem:[#allocation9 + $0x450] sm:$0xff]
          %v4636 = vld [vmem:[#allocation9 + $0x458] sm:$0xff]
          %v4637 = vld [vmem:[#allocation9 + $0x460] sm:$0xff]
          %v4638 = vld [vmem:[#allocation9 + $0x468] sm:$0xff]
          %v4639 = vld [vmem:[#allocation9 + $0x470] sm:$0xff]
          %v4640 = vld [vmem:[#allocation9 + $0x478] sm:$0xff]
          %v4641 = vld [vmem:[#allocation9 + $0x480] sm:$0xff]
          %v4642 = vld [vmem:[#allocation9 + $0x488] sm:$0xff]
          %v4643 = vld [vmem:[#allocation9 + $0x490] sm:$0xff]
          %v4644 = vld [vmem:[#allocation9 + $0x498] sm:$0xff]
          %v4645 = vld [vmem:[#allocation9 + $0x4a0] sm:$0xff]
          %v4646 = vld [vmem:[#allocation9 + $0x4a8] sm:$0xff]
          %v4647 = vld [vmem:[#allocation9 + $0x4b0] sm:$0xff]
          %v4648 = vld [vmem:[#allocation9 + $0x4b8] sm:$0xff]
          %v4649 = vld [vmem:[#allocation9 + $0x4c0] sm:$0xff]
          %v4650 = vld [vmem:[#allocation9 + $0x4c8] sm:$0xff]
          %v4651 = vld [vmem:[#allocation9 + $0x4d0] sm:$0xff]
          %v4652 = vld [vmem:[#allocation9 + $0x4d8] sm:$0xff]
          %v4653 = vld [vmem:[#allocation9 + $0x4e0] sm:$0xff]
          %v4654 = vld [vmem:[#allocation9 + $0x4e8] sm:$0xff]
          %v4655 = vld [vmem:[#allocation9 + $0x4f0] sm:$0xff]
          %v4656 = vld [vmem:[#allocation9 + $0x4f8] sm:$0xff]
          %v4657 = vld [vmem:[#allocation9 + $0x500] sm:$0xff]
          %v4658 = vld [vmem:[#allocation9 + $0x508] sm:$0xff]
          %v4659 = vld [vmem:[#allocation9 + $0x510] sm:$0xff]
          %v4660 = vld [vmem:[#allocation9 + $0x518] sm:$0xff]
          %v4661 = vld [vmem:[#allocation9 + $0x520] sm:$0xff]
          %v4662 = vld [vmem:[#allocation9 + $0x528] sm:$0xff]
          %v4663 = vld [vmem:[#allocation9 + $0x530] sm:$0xff]
          %v4664 = vld [vmem:[#allocation9 + $0x538] sm:$0xff]
          %v4665 = vld [vmem:[#allocation9 + $0x540] sm:$0xff]
          %v4666 = vld [vmem:[#allocation9 + $0x548] sm:$0xff]
          %v4667 = vld [vmem:[#allocation9 + $0x550] sm:$0xff]
          %v4668 = vld [vmem:[#allocation9 + $0x558] sm:$0xff]
          %v4669 = vld [vmem:[#allocation9 + $0x560] sm:$0xff]
          %v4670 = vld [vmem:[#allocation9 + $0x568] sm:$0xff]
          %v4671 = vld [vmem:[#allocation9 + $0x570] sm:$0xff]
          %v4672 = vld [vmem:[#allocation9 + $0x578] sm:$0xff]
          %v4673 = vld [vmem:[#allocation9 + $0x580] sm:$0xff]
          %v4674 = vld [vmem:[#allocation9 + $0x588] sm:$0xff]
          %v4675 = vld [vmem:[#allocation9 + $0x590] sm:$0xff]
          %v4676 = vld [vmem:[#allocation9 + $0x598] sm:$0xff]
          %v4677 = vld [vmem:[#allocation9 + $0x5a0] sm:$0xff]
          %v4678 = vld [vmem:[#allocation9 + $0x5a8] sm:$0xff]
          %v4679 = vld [vmem:[#allocation9 + $0x5b0] sm:$0xff]
          %v4680 = vld [vmem:[#allocation9 + $0x5b8] sm:$0xff]
          %v4681 = vld [vmem:[#allocation9 + $0x5c0] sm:$0xff]
          %v4682 = vld [vmem:[#allocation9 + $0x5c8] sm:$0xff]
          %v4683 = vld [vmem:[#allocation9 + $0x5d0] sm:$0xff]
          %v4684 = vld [vmem:[#allocation9 + $0x5d8] sm:$0xff]
          %v4685 = vld [vmem:[#allocation9 + $0x5e0] sm:$0xff]
          %v4686 = vld [vmem:[#allocation9 + $0x5e8] sm:$0xff]
          %v4687 = vld [vmem:[#allocation9 + $0x5f0] sm:$0xff]
          %v4688 = vld [vmem:[#allocation9 + $0x5f8] sm:$0xff]
          %v4689 = vld [vmem:[#allocation9 + $0x600] sm:$0xff]
          %v4690 = vld [vmem:[#allocation9 + $0x608] sm:$0xff]
          %v4691 = vld [vmem:[#allocation9 + $0x610] sm:$0xff]
          %v4692 = vld [vmem:[#allocation9 + $0x618] sm:$0xff]
          %v4693 = vld [vmem:[#allocation9 + $0x620] sm:$0xff]
          %v4694 = vld [vmem:[#allocation9 + $0x628] sm:$0xff]
          %v4695 = vld [vmem:[#allocation9 + $0x630] sm:$0xff]
          %v4696 = vld [vmem:[#allocation9 + $0x638] sm:$0xff]
          %v4697 = vld [vmem:[#allocation9 + $0x640] sm:$0xff]
          %v4698 = vld [vmem:[#allocation9 + $0x648] sm:$0xff]
          %v4699 = vld [vmem:[#allocation9 + $0x650] sm:$0xff]
          %v4700 = vld [vmem:[#allocation9 + $0x658] sm:$0xff]
          %v4701 = vld [vmem:[#allocation9 + $0x660] sm:$0xff]
          %v4702 = vld [vmem:[#allocation9 + $0x668] sm:$0xff]
          %v4703 = vld [vmem:[#allocation9 + $0x670] sm:$0xff]
          %v4704 = vld [vmem:[#allocation9 + $0x678] sm:$0xff]
          %v4705 = vld [vmem:[#allocation9 + $0x680] sm:$0xff]
          %v4706 = vld [vmem:[#allocation9 + $0x688] sm:$0xff]
          %v4707 = vld [vmem:[#allocation9 + $0x690] sm:$0xff]
          %v4708 = vld [vmem:[#allocation9 + $0x698] sm:$0xff]
          %v4709 = vld [vmem:[#allocation9 + $0x6a0] sm:$0xff]
          %v4710 = vld [vmem:[#allocation9 + $0x6a8] sm:$0xff]
          %v4711 = vld [vmem:[#allocation9 + $0x6b0] sm:$0xff]
          %v4712 = vld [vmem:[#allocation9 + $0x6b8] sm:$0xff]
          %v4713 = vld [vmem:[#allocation9 + $0x6c0] sm:$0xff]
          %v4714 = vld [vmem:[#allocation9 + $0x6c8] sm:$0xff]
          %v4715 = vld [vmem:[#allocation9 + $0x6d0] sm:$0xff]
          %v4716 = vld [vmem:[#allocation9 + $0x6d8] sm:$0xff]
          %v4717 = vld [vmem:[#allocation9 + $0x6e0] sm:$0xff]
          %v4718 = vld [vmem:[#allocation9 + $0x6e8] sm:$0xff]
          %v4719 = vld [vmem:[#allocation9 + $0x6f0] sm:$0xff]
          %v4720 = vld [vmem:[#allocation9 + $0x6f8] sm:$0xff]
          %v4721 = vld [vmem:[#allocation9 + $0x700] sm:$0xff]
          %v4722 = vld [vmem:[#allocation9 + $0x708] sm:$0xff]
          %v4723 = vld [vmem:[#allocation9 + $0x710] sm:$0xff]
          %v4724 = vld [vmem:[#allocation9 + $0x718] sm:$0xff]
          %v4725 = vld [vmem:[#allocation9 + $0x720] sm:$0xff]
          %v4726 = vld [vmem:[#allocation9 + $0x728] sm:$0xff]
          %v4727 = vld [vmem:[#allocation9 + $0x730] sm:$0xff]
          %v4728 = vld [vmem:[#allocation9 + $0x738] sm:$0xff]
          %v4729 = vld [vmem:[#allocation9 + $0x740] sm:$0xff]
          %v4730 = vld [vmem:[#allocation9 + $0x748] sm:$0xff]
          %v4731 = vld [vmem:[#allocation9 + $0x750] sm:$0xff]
          %v4732 = vld [vmem:[#allocation9 + $0x758] sm:$0xff]
          %v4733 = vld [vmem:[#allocation9 + $0x760] sm:$0xff]
          %v4734 = vld [vmem:[#allocation9 + $0x768] sm:$0xff]
          %v4735 = vld [vmem:[#allocation9 + $0x770] sm:$0xff]
          %v4736 = vld [vmem:[#allocation9 + $0x778] sm:$0xff]
          %v4737 = vld [vmem:[#allocation9 + $0x780] sm:$0xff]
          %v4738 = vld [vmem:[#allocation9 + $0x788] sm:$0xff]
          %v4739 = vld [vmem:[#allocation9 + $0x790] sm:$0xff]
          %v4740 = vld [vmem:[#allocation9 + $0x798] sm:$0xff]
          %v4741 = vld [vmem:[#allocation9 + $0x7a0] sm:$0xff]
          %v4742 = vld [vmem:[#allocation9 + $0x7a8] sm:$0xff]
          %v4743 = vld [vmem:[#allocation9 + $0x7b0] sm:$0xff]
          %v4744 = vld [vmem:[#allocation9 + $0x7b8] sm:$0xff]
          %v4745 = vld [vmem:[#allocation9 + $0x7c0] sm:$0xff]
          %v4746 = vld [vmem:[#allocation9 + $0x7c8] sm:$0xff]
          %v4747 = vld [vmem:[#allocation9 + $0x7d0] sm:$0xff]
          %v4748 = vld [vmem:[#allocation9 + $0x7d8] sm:$0xff]
          %v4749 = vld [vmem:[#allocation9 + $0x7e0] sm:$0xff]
          %v4750 = vld [vmem:[#allocation9 + $0x7e8] sm:$0xff]
          %v4751 = vld [vmem:[#allocation9 + $0x7f0] sm:$0xff]
          %v4752 = vld [vmem:[#allocation9 + $0x7f8] sm:$0xff]
          %v4753 = vld [vmem:[#allocation11] sm:$0xf]
          %v4755 = vlaneseq
          %v4756 = vshrl.u32 %v4755, 7
          %v4757 = vsub.s32 0, %v4756
          %v4758 = vrot.slane %v4753, %v4757
          %v4759 = vlaneseq
          %v4760 = vshrl.u32 %v4759, 7
          %v4761 = vsub.s32 1, %v4760
          %v4762 = vrot.slane %v4753, %v4761
          %v4763 = vlaneseq
          %v4764 = vshrl.u32 %v4763, 7
          %v4765 = vsub.s32 2, %v4764
          %v4766 = vrot.slane %v4753, %v4765
          %v4767 = vlaneseq
          %v4768 = vshrl.u32 %v4767, 7
          %v4769 = vsub.s32 3, %v4768
          %v4770 = vrot.slane %v4753, %v4769
          %4775 = vmatprep.subr.mxu0 %v4498
          %4776 = vmatpush1.msra.mxu0 %v4497
          %4777 = vmatprep.subr.mxu0 %v4502
          %4778 = vmatpush1.msra.mxu0 %v4501
          %4779 = vmatprep.subr.mxu0 %v4506
          %4780 = vmatpush1.msra.mxu0 %v4505
          %4781 = vmatprep.subr.mxu0 %v4510
          %4782 = vmatpush1.msra.mxu0 %v4509
          %4783 = vmatprep.subr.mxu0 %v4514
          %4784 = vmatpush1.msra.mxu0 %v4513
          %4785 = vmatprep.subr.mxu0 %v4518
          %4786 = vmatpush1.msra.mxu0 %v4517
          %4787 = vmatprep.subr.mxu0 %v4522
          %4788 = vmatpush1.msra.mxu0 %v4521
          %4789 = vmatprep.subr.mxu0 %v4526
          %4790 = vmatpush1.msra.mxu0 %v4525
          %4791 = vmatprep.subr.mxu0 %v4530
          %4792 = vmatpush1.msra.mxu0 %v4529
          %4793 = vmatprep.subr.mxu0 %v4534
          %4794 = vmatpush1.msra.mxu0 %v4533
          %4795 = vmatprep.subr.mxu0 %v4538
          %4796 = vmatpush1.msra.mxu0 %v4537
          %4797 = vmatprep.subr.mxu0 %v4542
          %4798 = vmatpush1.msra.mxu0 %v4541
          %4799 = vmatprep.subr.mxu0 %v4546
          %4800 = vmatpush1.msra.mxu0 %v4545
          %4801 = vmatprep.subr.mxu0 %v4550
          %4802 = vmatpush1.msra.mxu0 %v4549
          %4803 = vmatprep.subr.mxu0 %v4554
          %4804 = vmatpush1.msra.mxu0 %v4553
          %4805 = vmatprep.subr.mxu0 %v4558
          %4806 = vmatpush1.msra.mxu0 %v4557
          %4807 = vmatprep.subr.mxu0 %v4562
          %4808 = vmatpush1.msra.mxu0 %v4561
          %4809 = vmatprep.subr.mxu0 %v4566
          %4810 = vmatpush1.msra.mxu0 %v4565
          %4811 = vmatprep.subr.mxu0 %v4570
          %4812 = vmatpush1.msra.mxu0 %v4569
          %4813 = vmatprep.subr.mxu0 %v4574
          %4814 = vmatpush1.msra.mxu0 %v4573
          %4815 = vmatprep.subr.mxu0 %v4578
          %4816 = vmatpush1.msra.mxu0 %v4577
          %4817 = vmatprep.subr.mxu0 %v4582
          %4818 = vmatpush1.msra.mxu0 %v4581
          %4819 = vmatprep.subr.mxu0 %v4586
          %4820 = vmatpush1.msra.mxu0 %v4585
          %4821 = vmatprep.subr.mxu0 %v4590
          %4822 = vmatpush1.msra.mxu0 %v4589
          %4823 = vmatprep.subr.mxu0 %v4594
          %4824 = vmatpush1.msra.mxu0 %v4593
          %4825 = vmatprep.subr.mxu0 %v4598
          %4826 = vmatpush1.msra.mxu0 %v4597
          %4827 = vmatprep.subr.mxu0 %v4602
          %4828 = vmatpush1.msra.mxu0 %v4601
          %4829 = vmatprep.subr.mxu0 %v4606
          %4830 = vmatpush1.msra.mxu0 %v4605
          %4831 = vmatprep.subr.mxu0 %v4610
          %4832 = vmatpush1.msra.mxu0 %v4609
          %4833 = vmatprep.subr.mxu0 %v4614
          %4834 = vmatpush1.msra.mxu0 %v4613
          %4835 = vmatprep.subr.mxu0 %v4618
          %4836 = vmatpush1.msra.mxu0 %v4617
          %4837 = vmatprep.subr.mxu0 %v4622
          %4838 = vmatpush1.msra.mxu0 %v4621
          %4839 = vmatprep.mubr.f32.mxu0 %v4482
          %4840 = vmatmul.mubr.f32.gmra.mrb[0].mxu0 %v4481
          %v4841 = vpop.f32.mrb[0].mxu0
          %v4842 = vadd.f32 %v4758, %v4841
          %v4843 = vpop.f32.mrb[0].mxu0
          %v4844 = vadd.f32 %v4762, %v4843
          %4845 = vmatprep.mubr.f32.mxu0 %v4486
          %4846 = vmatmul.mubr.f32.gmra.mrb[0].mxu0 %v4485
          %v4847 = vpop.f32.mrb[0].mxu0
          %v4848 = vadd.f32 %v4758, %v4847
          %v4849 = vpop.f32.mrb[0].mxu0
          %v4850 = vadd.f32 %v4762, %v4849
          %4851 = vdwg.mxu0
          %4852 = vmatprep.subr.mxu0 %v4626
          %4853 = vmatpush1.msra.mxu0 %v4625
          %4854 = vmatprep.subr.mxu0 %v4630
          %4855 = vmatpush1.msra.mxu0 %v4629
          %4856 = vmatprep.subr.mxu0 %v4634
          %4857 = vmatpush1.msra.mxu0 %v4633
          %4858 = vmatprep.subr.mxu0 %v4638
          %4859 = vmatpush1.msra.mxu0 %v4637
          %4860 = vmatprep.subr.mxu0 %v4642
          %4861 = vmatpush1.msra.mxu0 %v4641
          %4862 = vmatprep.subr.mxu0 %v4646
          %4863 = vmatpush1.msra.mxu0 %v4645
          %4864 = vmatprep.subr.mxu0 %v4650
          %4865 = vmatpush1.msra.mxu0 %v4649
          %4866 = vmatprep.subr.mxu0 %v4654
          %4867 = vmatpush1.msra.mxu0 %v4653
          %4868 = vmatprep.subr.mxu0 %v4658
          %4869 = vmatpush1.msra.mxu0 %v4657
          %4870 = vmatprep.subr.mxu0 %v4662
          %4871 = vmatpush1.msra.mxu0 %v4661
          %4872 = vmatprep.subr.mxu0 %v4666
          %4873 = vmatpush1.msra.mxu0 %v4665
          %4874 = vmatprep.subr.mxu0 %v4670
          %4875 = vmatpush1.msra.mxu0 %v4669
          %4876 = vmatprep.subr.mxu0 %v4674
          %4877 = vmatpush1.msra.mxu0 %v4673
          %4878 = vmatprep.subr.mxu0 %v4678
          %4879 = vmatpush1.msra.mxu0 %v4677
          %4880 = vmatprep.subr.mxu0 %v4682
          %4881 = vmatpush1.msra.mxu0 %v4681
          %4882 = vmatprep.subr.mxu0 %v4686
          %4883 = vmatpush1.msra.mxu0 %v4685
          %4884 = vmatprep.subr.mxu0 %v4690
          %4885 = vmatpush1.msra.mxu0 %v4689
          %4886 = vmatprep.subr.mxu0 %v4694
          %4887 = vmatpush1.msra.mxu0 %v4693
          %4888 = vmatprep.subr.mxu0 %v4698
          %4889 = vmatpush1.msra.mxu0 %v4697
          %4890 = vmatprep.subr.mxu0 %v4702
          %4891 = vmatpush1.msra.mxu0 %v4701
          %4892 = vmatprep.subr.mxu0 %v4706
          %4893 = vmatpush1.msra.mxu0 %v4705
          %4894 = vmatprep.subr.mxu0 %v4710
          %4895 = vmatpush1.msra.mxu0 %v4709
          %4896 = vmatprep.subr.mxu0 %v4714
          %4897 = vmatpush1.msra.mxu0 %v4713
          %4898 = vmatprep.subr.mxu0 %v4718
          %4899 = vmatpush1.msra.mxu0 %v4717
          %4900 = vmatprep.subr.mxu0 %v4722
          %4901 = vmatpush1.msra.mxu0 %v4721
          %4902 = vmatprep.subr.mxu0 %v4726
          %4903 = vmatpush1.msra.mxu0 %v4725
          %4904 = vmatprep.subr.mxu0 %v4730
          %4905 = vmatpush1.msra.mxu0 %v4729
          %4906 = vmatprep.subr.mxu0 %v4734
          %4907 = vmatpush1.msra.mxu0 %v4733
          %4908 = vmatprep.subr.mxu0 %v4738
          %4909 = vmatpush1.msra.mxu0 %v4737
          %4910 = vmatprep.subr.mxu0 %v4742
          %4911 = vmatpush1.msra.mxu0 %v4741
          %4912 = vmatprep.subr.mxu0 %v4746
          %4913 = vmatpush1.msra.mxu0 %v4745
          %4914 = vmatprep.subr.mxu0 %v4750
          %4915 = vmatpush1.msra.mxu0 %v4749
          %4916 = vmatprep.mubr.f32.mxu0 %v4484
          %4917 = vmatmul.mubr.f32.gmra.mrb[0].mxu0 %v4483
          %v4918 = vpop.f32.mrb[0].mxu0
          %v4919 = vadd.f32 %v4842, %v4918
          %v4920 = vpop.f32.mrb[0].mxu0
          %v4921 = vadd.f32 %v4844, %v4920
          %4922 = vmatprep.mubr.f32.mxu0 %v4488
          %4923 = vmatmul.mubr.f32.gmra.mrb[0].mxu0 %v4487
          %v4924 = vpop.f32.mrb[0].mxu0
          %v4925 = vadd.f32 %v4848, %v4924
          %v4926 = vpop.f32.mrb[0].mxu0
          %v4927 = vadd.f32 %v4850, %v4926
          %4928 = vdwg.mxu0
          %4929 = vmatprep.subr.mxu0 %v4500
          %4930 = vmatpush1.msra.mxu0 %v4499
          %4931 = vmatprep.subr.mxu0 %v4504
          %4932 = vmatpush1.msra.mxu0 %v4503
          %4933 = vmatprep.subr.mxu0 %v4508
          %4934 = vmatpush1.msra.mxu0 %v4507
          %4935 = vmatprep.subr.mxu0 %v4512
          %4936 = vmatpush1.msra.mxu0 %v4511
          %4937 = vmatprep.subr.mxu0 %v4516
          %4938 = vmatpush1.msra.mxu0 %v4515
          %4939 = vmatprep.subr.mxu0 %v4520
          %4940 = vmatpush1.msra.mxu0 %v4519
          %4941 = vmatprep.subr.mxu0 %v4524
          %4942 = vmatpush1.msra.mxu0 %v4523
          %4943 = vmatprep.subr.mxu0 %v4528
          %4944 = vmatpush1.msra.mxu0 %v4527
          %4945 = vmatprep.subr.mxu0 %v4532
          %4946 = vmatpush1.msra.mxu0 %v4531
          %4947 = vmatprep.subr.mxu0 %v4536
          %4948 = vmatpush1.msra.mxu0 %v4535
          %4949 = vmatprep.subr.mxu0 %v4540
          %4950 = vmatpush1.msra.mxu0 %v4539
          %4951 = vmatprep.subr.mxu0 %v4544
          %4952 = vmatpush1.msra.mxu0 %v4543
          %4953 = vmatprep.subr.mxu0 %v4548
          %4954 = vmatpush1.msra.mxu0 %v4547
          %4955 = vmatprep.subr.mxu0 %v4552
          %4956 = vmatpush1.msra.mxu0 %v4551
          %4957 = vmatprep.subr.mxu0 %v4556
          %4958 = vmatpush1.msra.mxu0 %v4555
          %4959 = vmatprep.subr.mxu0 %v4560
          %4960 = vmatpush1.msra.mxu0 %v4559
          %4961 = vmatprep.subr.mxu0 %v4564
          %4962 = vmatpush1.msra.mxu0 %v4563
          %4963 = vmatprep.subr.mxu0 %v4568
          %4964 = vmatpush1.msra.mxu0 %v4567
          %4965 = vmatprep.subr.mxu0 %v4572
          %4966 = vmatpush1.msra.mxu0 %v4571
          %4967 = vmatprep.subr.mxu0 %v4576
          %4968 = vmatpush1.msra.mxu0 %v4575
          %4969 = vmatprep.subr.mxu0 %v4580
          %4970 = vmatpush1.msra.mxu0 %v4579
          %4971 = vmatprep.subr.mxu0 %v4584
          %4972 = vmatpush1.msra.mxu0 %v4583
          %4973 = vmatprep.subr.mxu0 %v4588
          %4974 = vmatpush1.msra.mxu0 %v4587
          %4975 = vmatprep.subr.mxu0 %v4592
          %4976 = vmatpush1.msra.mxu0 %v4591
          %4977 = vmatprep.subr.mxu0 %v4596
          %4978 = vmatpush1.msra.mxu0 %v4595
          %4979 = vmatprep.subr.mxu0 %v4600
          %4980 = vmatpush1.msra.mxu0 %v4599
          %4981 = vmatprep.subr.mxu0 %v4604
          %4982 = vmatpush1.msra.mxu0 %v4603
          %4983 = vmatprep.subr.mxu0 %v4608
          %4984 = vmatpush1.msra.mxu0 %v4607
          %4985 = vmatprep.subr.mxu0 %v4612
          %4986 = vmatpush1.msra.mxu0 %v4611
          %4987 = vmatprep.subr.mxu0 %v4616
          %4988 = vmatpush1.msra.mxu0 %v4615
          %4989 = vmatprep.subr.mxu0 %v4620
          %4990 = vmatpush1.msra.mxu0 %v4619
          %4991 = vmatprep.subr.mxu0 %v4624
          %4992 = vmatpush1.msra.mxu0 %v4623
          %4993 = vmatprep.mubr.f32.mxu0 %v4482
          %4994 = vmatmul.mubr.f32.gmra.mrb[0].mxu0 %v4481
          %v4995 = vpop.f32.mrb[0].mxu0
          %v4996 = vadd.f32 %v4766, %v4995
          %v4997 = vpop.f32.mrb[0].mxu0
          %v4998 = vadd.f32 %v4770, %v4997
          %4999 = vmatprep.mubr.f32.mxu0 %v4486
          %5000 = vmatmul.mubr.f32.gmra.mrb[0].mxu0 %v4485
          %v5001 = vpop.f32.mrb[0].mxu0
          %v5002 = vadd.f32 %v4766, %v5001
          %v5003 = vpop.f32.mrb[0].mxu0
          %v5004 = vadd.f32 %v4770, %v5003
          %5005 = vdwg.mxu0
          %5006 = vmatprep.subr.mxu0 %v4628
          %5007 = vmatpush1.msra.mxu0 %v4627
          %5008 = vmatprep.subr.mxu0 %v4632
          %5009 = vmatpush1.msra.mxu0 %v4631
          %5010 = vmatprep.subr.mxu0 %v4636
          %5011 = vmatpush1.msra.mxu0 %v4635
          %5012 = vmatprep.subr.mxu0 %v4640
          %5013 = vmatpush1.msra.mxu0 %v4639
          %5014 = vmatprep.subr.mxu0 %v4644
          %5015 = vmatpush1.msra.mxu0 %v4643
          %5016 = vmatprep.subr.mxu0 %v4648
          %5017 = vmatpush1.msra.mxu0 %v4647
          %5018 = vmatprep.subr.mxu0 %v4652
          %5019 = vmatpush1.msra.mxu0 %v4651
          %5020 = vmatprep.subr.mxu0 %v4656
          %5021 = vmatpush1.msra.mxu0 %v4655
          %5022 = vmatprep.subr.mxu0 %v4660
          %5023 = vmatpush1.msra.mxu0 %v4659
          %5024 = vmatprep.subr.mxu0 %v4664
          %5025 = vmatpush1.msra.mxu0 %v4663
          %5026 = vmatprep.subr.mxu0 %v4668
          %5027 = vmatpush1.msra.mxu0 %v4667
          %5028 = vmatprep.subr.mxu0 %v4672
          %5029 = vmatpush1.msra.mxu0 %v4671
          %5030 = vmatprep.subr.mxu0 %v4676
          %5031 = vmatpush1.msra.mxu0 %v4675
          %5032 = vmatprep.subr.mxu0 %v4680
          %5033 = vmatpush1.msra.mxu0 %v4679
          %5034 = vmatprep.subr.mxu0 %v4684
          %5035 = vmatpush1.msra.mxu0 %v4683
          %5036 = vmatprep.subr.mxu0 %v4688
          %5037 = vmatpush1.msra.mxu0 %v4687
          %5038 = vmatprep.subr.mxu0 %v4692
          %5039 = vmatpush1.msra.mxu0 %v4691
          %5040 = vmatprep.subr.mxu0 %v4696
          %5041 = vmatpush1.msra.mxu0 %v4695
          %5042 = vmatprep.subr.mxu0 %v4700
          %5043 = vmatpush1.msra.mxu0 %v4699
          %5044 = vmatprep.subr.mxu0 %v4704
          %5045 = vmatpush1.msra.mxu0 %v4703
          %5046 = vmatprep.subr.mxu0 %v4708
          %5047 = vmatpush1.msra.mxu0 %v4707
          %5048 = vmatprep.subr.mxu0 %v4712
          %5049 = vmatpush1.msra.mxu0 %v4711
          %5050 = vmatprep.subr.mxu0 %v4716
          %5051 = vmatpush1.msra.mxu0 %v4715
          %5052 = vmatprep.subr.mxu0 %v4720
          %5053 = vmatpush1.msra.mxu0 %v4719
          %5054 = vmatprep.subr.mxu0 %v4724
          %5055 = vmatpush1.msra.mxu0 %v4723
          %5056 = vmatprep.subr.mxu0 %v4728
          %5057 = vmatpush1.msra.mxu0 %v4727
          %5058 = vmatprep.subr.mxu0 %v4732
          %5059 = vmatpush1.msra.mxu0 %v4731
          %5060 = vmatprep.subr.mxu0 %v4736
          %5061 = vmatpush1.msra.mxu0 %v4735
          %5062 = vmatprep.subr.mxu0 %v4740
          %5063 = vmatpush1.msra.mxu0 %v4739
          %5064 = vmatprep.subr.mxu0 %v4744
          %5065 = vmatpush1.msra.mxu0 %v4743
          %5066 = vmatprep.subr.mxu0 %v4748
          %5067 = vmatpush1.msra.mxu0 %v4747
          %5068 = vmatprep.subr.mxu0 %v4752
          %5069 = vmatpush1.msra.mxu0 %v4751
          %5070 = vmatprep.mubr.f32.mxu0 %v4484
          %5071 = vmatmul.mubr.f32.gmra.mrb[0].mxu0 %v4483
          %v5072 = vpop.f32.mrb[0].mxu0
          %v5073 = vadd.f32 %v4996, %v5072
          %v5074 = vpop.f32.mrb[0].mxu0
          %v5075 = vadd.f32 %v4998, %v5074
          %5076 = vmatprep.mubr.f32.mxu0 %v4488
          %5077 = vmatmul.mubr.f32.gmra.mrb[0].mxu0 %v4487
          %v5078 = vpop.f32.mrb[0].mxu0
          %v5079 = vadd.f32 %v5002, %v5078
          %v5080 = vpop.f32.mrb[0].mxu0
          %v5081 = vadd.f32 %v5004, %v5080
          %5082 = vdwg.mxu0
          %v5083 = vsub.f32 %v5073, 5.0
          %v5084 = vsub.f32 %v5075, 5.0
          %v5085 = vsub.f32 %v5079, 5.0
          %v5086 = vsub.f32 %v5081, 5.0
          %v5087 = vmax.f32 %v5083, 0.0
          %v5088 = vmax.f32 %v5084, 0.0
          %v5089 = vmax.f32 %v5085, 0.0
          %v5090 = vmax.f32 %v5086, 0.0
          %v5091 = vand.u32 2147483647, %v5083
          %v5092 = vand.u32 2147483647, %v5084
          %v5093 = vand.u32 2147483647, %v5085
          %v5094 = vand.u32 2147483647, %v5086
          %v5095 = vsub.f32 0.0, %v5091
          %v5096 = vsub.f32 0.0, %v5092
          %v5097 = vsub.f32 0.0, %v5093
          %v5098 = vsub.f32 0.0, %v5094
          %v5099 = vmul.f32 %v5095, 1.442695
          %v5100 = vpow.pop %v5099
          %v5101 = vmul.f32 %v5096, 1.442695
          %v5102 = vpow.pop %v5101
          %v5103 = vmul.f32 %v5097, 1.442695
          %v5104 = vpow.pop %v5103
          %v5105 = vmul.f32 %v5098, 1.442695
          %v5106 = vpow.pop %v5105
          %v5107 = vadd.f32 %v5100, 1.0
          %v5108 = vadd.f32 %v5102, 1.0
          %v5109 = vadd.f32 %v5104, 1.0
          %v5110 = vadd.f32 %v5106, 1.0
          %v5111 = vlog2.pop %v5107
          %v5112 = vmul.f32 %v5111, 0.6931472
          %v5113 = vlog2.pop %v5108
          %v5114 = vmul.f32 %v5113, 0.6931472
          %v5115 = vlog2.pop %v5109
          %v5116 = vmul.f32 %v5115, 0.6931472
          %v5117 = vlog2.pop %v5110
          %v5118 = vmul.f32 %v5117, 0.6931472
          %v5119 = vadd.f32 %v5087, %v5112
          %v5120 = vadd.f32 %v5088, %v5114
          %v5121 = vadd.f32 %v5089, %v5116
          %v5122 = vadd.f32 %v5090, %v5118
          %5123 = vst [vmem:[#allocation20] sm:$0xff] %v4919
          %5124 = vst [vmem:[#allocation20 + $0x8] sm:$0xff] %v4921
          %5125 = vst [vmem:[#allocation20 + $0x10] sm:$0xff] %v4925
          %5126 = vst [vmem:[#allocation20 + $0x18] sm:$0xff] %v4927
          %5127 = vst [vmem:[#allocation21] sm:$0xff] %v5119
          %5128 = vst [vmem:[#allocation21 + $0x8] sm:$0xff] %v5120
          %5129 = vst [vmem:[#allocation21 + $0x10] sm:$0xff] %v5121
          %5130 = vst [vmem:[#allocation21 + $0x18] sm:$0xff] %v5122
          %v5131 = vld [vmem:[#allocation12] sm:$0xff]
          %v5132 = vld [vmem:[#allocation12 + $0x8] sm:$0xff]
          %v5133 = vld [vmem:[#allocation12 + $0x10] sm:$0xff]
          %v5134 = vld [vmem:[#allocation12 + $0x18] sm:$0xff]
          %v5135 = vmul.f32 %v5119, %v5131
          %v5136 = vmul.f32 %v5120, %v5132
          %v5137 = vmul.f32 %v5121, %v5133
          %v5138 = vmul.f32 %v5122, %v5134
          %v5139 = vadd.f32 %v4919, %v5135
          %v5140 = vadd.f32 %v4921, %v5136
          %v5141 = vadd.f32 %v4925, %v5137
          %v5142 = vadd.f32 %v4927, %v5138
          %v5143 = vld [vmem:[#allocation14] sm:$0xff]
          %v5144 = vld [vmem:[#allocation14 + $0x8] sm:$0xff]
          %v5145 = vld [vmem:[#allocation14 + $0x10] sm:$0xff]
          %v5146 = vld [vmem:[#allocation14 + $0x18] sm:$0xff]
          %v5147 = vld [vmem:[#allocation14 + $0x20] sm:$0xff]
          %v5148 = vld [vmem:[#allocation14 + $0x28] sm:$0xff]
          %v5149 = vld [vmem:[#allocation14 + $0x30] sm:$0xff]
          %v5150 = vld [vmem:[#allocation14 + $0x38] sm:$0xff]
          %v5151 = vld [vmem:[#allocation14 + $0x40] sm:$0xff]
          %v5152 = vld [vmem:[#allocation14 + $0x48] sm:$0xff]
          %v5153 = vld [vmem:[#allocation14 + $0x50] sm:$0xff]
          %v5154 = vld [vmem:[#allocation14 + $0x58] sm:$0xff]
          %v5155 = vld [vmem:[#allocation14 + $0x60] sm:$0xff]
          %v5156 = vld [vmem:[#allocation14 + $0x68] sm:$0xff]
          %v5157 = vld [vmem:[#allocation14 + $0x70] sm:$0xff]
          %v5158 = vld [vmem:[#allocation14 + $0x78] sm:$0xff]
          %v5159 = vld [vmem:[#allocation14 + $0x80] sm:$0xff]
          %v5160 = vld [vmem:[#allocation14 + $0x88] sm:$0xff]
          %v5161 = vld [vmem:[#allocation14 + $0x90] sm:$0xff]
          %v5162 = vld [vmem:[#allocation14 + $0x98] sm:$0xff]
          %v5163 = vld [vmem:[#allocation14 + $0xa0] sm:$0xff]
          %v5164 = vld [vmem:[#allocation14 + $0xa8] sm:$0xff]
          %v5165 = vld [vmem:[#allocation14 + $0xb0] sm:$0xff]
          %v5166 = vld [vmem:[#allocation14 + $0xb8] sm:$0xff]
          %v5167 = vld [vmem:[#allocation14 + $0xc0] sm:$0xff]
          %v5168 = vld [vmem:[#allocation14 + $0xc8] sm:$0xff]
          %v5169 = vld [vmem:[#allocation14 + $0xd0] sm:$0xff]
          %v5170 = vld [vmem:[#allocation14 + $0xd8] sm:$0xff]
          %v5171 = vld [vmem:[#allocation14 + $0xe0] sm:$0xff]
          %v5172 = vld [vmem:[#allocation14 + $0xe8] sm:$0xff]
          %v5173 = vld [vmem:[#allocation14 + $0xf0] sm:$0xff]
          %v5174 = vld [vmem:[#allocation14 + $0xf8] sm:$0xff]
          %v5175 = vld [vmem:[#allocation14 + $0x100] sm:$0xff]
          %v5176 = vld [vmem:[#allocation14 + $0x108] sm:$0xff]
          %v5177 = vld [vmem:[#allocation14 + $0x110] sm:$0xff]
          %v5178 = vld [vmem:[#allocation14 + $0x118] sm:$0xff]
          %v5179 = vld [vmem:[#allocation14 + $0x120] sm:$0xff]
          %v5180 = vld [vmem:[#allocation14 + $0x128] sm:$0xff]
          %v5181 = vld [vmem:[#allocation14 + $0x130] sm:$0xff]
          %v5182 = vld [vmem:[#allocation14 + $0x138] sm:$0xff]
          %v5183 = vld [vmem:[#allocation14 + $0x140] sm:$0xff]
          %v5184 = vld [vmem:[#allocation14 + $0x148] sm:$0xff]
          %v5185 = vld [vmem:[#allocation14 + $0x150] sm:$0xff]
          %v5186 = vld [vmem:[#allocation14 + $0x158] sm:$0xff]
          %v5187 = vld [vmem:[#allocation14 + $0x160] sm:$0xff]
          %v5188 = vld [vmem:[#allocation14 + $0x168] sm:$0xff]
          %v5189 = vld [vmem:[#allocation14 + $0x170] sm:$0xff]
          %v5190 = vld [vmem:[#allocation14 + $0x178] sm:$0xff]
          %v5191 = vld [vmem:[#allocation14 + $0x180] sm:$0xff]
          %v5192 = vld [vmem:[#allocation14 + $0x188] sm:$0xff]
          %v5193 = vld [vmem:[#allocation14 + $0x190] sm:$0xff]
          %v5194 = vld [vmem:[#allocation14 + $0x198] sm:$0xff]
          %v5195 = vld [vmem:[#allocation14 + $0x1a0] sm:$0xff]
          %v5196 = vld [vmem:[#allocation14 + $0x1a8] sm:$0xff]
          %v5197 = vld [vmem:[#allocation14 + $0x1b0] sm:$0xff]
          %v5198 = vld [vmem:[#allocation14 + $0x1b8] sm:$0xff]
          %v5199 = vld [vmem:[#allocation14 + $0x1c0] sm:$0xff]
          %v5200 = vld [vmem:[#allocation14 + $0x1c8] sm:$0xff]
          %v5201 = vld [vmem:[#allocation14 + $0x1d0] sm:$0xff]
          %v5202 = vld [vmem:[#allocation14 + $0x1d8] sm:$0xff]
          %v5203 = vld [vmem:[#allocation14 + $0x1e0] sm:$0xff]
          %v5204 = vld [vmem:[#allocation14 + $0x1e8] sm:$0xff]
          %v5205 = vld [vmem:[#allocation14 + $0x1f0] sm:$0xff]
          %v5206 = vld [vmem:[#allocation14 + $0x1f8] sm:$0xff]
          %v5207 = vld [vmem:[#allocation14 + $0x200] sm:$0xff]
          %v5208 = vld [vmem:[#allocation14 + $0x208] sm:$0xff]
          %v5209 = vld [vmem:[#allocation14 + $0x210] sm:$0xff]
          %v5210 = vld [vmem:[#allocation14 + $0x218] sm:$0xff]
          %v5211 = vld [vmem:[#allocation14 + $0x220] sm:$0xff]
          %v5212 = vld [vmem:[#allocation14 + $0x228] sm:$0xff]
          %v5213 = vld [vmem:[#allocation14 + $0x230] sm:$0xff]
          %v5214 = vld [vmem:[#allocation14 + $0x238] sm:$0xff]
          %v5215 = vld [vmem:[#allocation14 + $0x240] sm:$0xff]
          %v5216 = vld [vmem:[#allocation14 + $0x248] sm:$0xff]
          %v5217 = vld [vmem:[#allocation14 + $0x250] sm:$0xff]
          %v5218 = vld [vmem:[#allocation14 + $0x258] sm:$0xff]
          %v5219 = vld [vmem:[#allocation14 + $0x260] sm:$0xff]
          %v5220 = vld [vmem:[#allocation14 + $0x268] sm:$0xff]
          %v5221 = vld [vmem:[#allocation14 + $0x270] sm:$0xff]
          %v5222 = vld [vmem:[#allocation14 + $0x278] sm:$0xff]
          %v5223 = vld [vmem:[#allocation14 + $0x280] sm:$0xff]
          %v5224 = vld [vmem:[#allocation14 + $0x288] sm:$0xff]
          %v5225 = vld [vmem:[#allocation14 + $0x290] sm:$0xff]
          %v5226 = vld [vmem:[#allocation14 + $0x298] sm:$0xff]
          %v5227 = vld [vmem:[#allocation14 + $0x2a0] sm:$0xff]
          %v5228 = vld [vmem:[#allocation14 + $0x2a8] sm:$0xff]
          %v5229 = vld [vmem:[#allocation14 + $0x2b0] sm:$0xff]
          %v5230 = vld [vmem:[#allocation14 + $0x2b8] sm:$0xff]
          %v5231 = vld [vmem:[#allocation14 + $0x2c0] sm:$0xff]
          %v5232 = vld [vmem:[#allocation14 + $0x2c8] sm:$0xff]
          %v5233 = vld [vmem:[#allocation14 + $0x2d0] sm:$0xff]
          %v5234 = vld [vmem:[#allocation14 + $0x2d8] sm:$0xff]
          %v5235 = vld [vmem:[#allocation14 + $0x2e0] sm:$0xff]
          %v5236 = vld [vmem:[#allocation14 + $0x2e8] sm:$0xff]
          %v5237 = vld [vmem:[#allocation14 + $0x2f0] sm:$0xff]
          %v5238 = vld [vmem:[#allocation14 + $0x2f8] sm:$0xff]
          %v5239 = vld [vmem:[#allocation14 + $0x300] sm:$0xff]
          %v5240 = vld [vmem:[#allocation14 + $0x308] sm:$0xff]
          %v5241 = vld [vmem:[#allocation14 + $0x310] sm:$0xff]
          %v5242 = vld [vmem:[#allocation14 + $0x318] sm:$0xff]
          %v5243 = vld [vmem:[#allocation14 + $0x320] sm:$0xff]
          %v5244 = vld [vmem:[#allocation14 + $0x328] sm:$0xff]
          %v5245 = vld [vmem:[#allocation14 + $0x330] sm:$0xff]
          %v5246 = vld [vmem:[#allocation14 + $0x338] sm:$0xff]
          %v5247 = vld [vmem:[#allocation14 + $0x340] sm:$0xff]
          %v5248 = vld [vmem:[#allocation14 + $0x348] sm:$0xff]
          %v5249 = vld [vmem:[#allocation14 + $0x350] sm:$0xff]
          %v5250 = vld [vmem:[#allocation14 + $0x358] sm:$0xff]
          %v5251 = vld [vmem:[#allocation14 + $0x360] sm:$0xff]
          %v5252 = vld [vmem:[#allocation14 + $0x368] sm:$0xff]
          %v5253 = vld [vmem:[#allocation14 + $0x370] sm:$0xff]
          %v5254 = vld [vmem:[#allocation14 + $0x378] sm:$0xff]
          %v5255 = vld [vmem:[#allocation14 + $0x380] sm:$0xff]
          %v5256 = vld [vmem:[#allocation14 + $0x388] sm:$0xff]
          %v5257 = vld [vmem:[#allocation14 + $0x390] sm:$0xff]
          %v5258 = vld [vmem:[#allocation14 + $0x398] sm:$0xff]
          %v5259 = vld [vmem:[#allocation14 + $0x3a0] sm:$0xff]
          %v5260 = vld [vmem:[#allocation14 + $0x3a8] sm:$0xff]
          %v5261 = vld [vmem:[#allocation14 + $0x3b0] sm:$0xff]
          %v5262 = vld [vmem:[#allocation14 + $0x3b8] sm:$0xff]
          %v5263 = vld [vmem:[#allocation14 + $0x3c0] sm:$0xff]
          %v5264 = vld [vmem:[#allocation14 + $0x3c8] sm:$0xff]
          %v5265 = vld [vmem:[#allocation14 + $0x3d0] sm:$0xff]
          %v5266 = vld [vmem:[#allocation14 + $0x3d8] sm:$0xff]
          %v5267 = vld [vmem:[#allocation14 + $0x3e0] sm:$0xff]
          %v5268 = vld [vmem:[#allocation14 + $0x3e8] sm:$0xff]
          %v5269 = vld [vmem:[#allocation14 + $0x3f0] sm:$0xff]
          %v5270 = vld [vmem:[#allocation14 + $0x3f8] sm:$0xff]
          %v5271 = vld [vmem:[#allocation14 + $0x400] sm:$0xff]
          %v5272 = vld [vmem:[#allocation14 + $0x408] sm:$0xff]
          %v5273 = vld [vmem:[#allocation14 + $0x410] sm:$0xff]
          %v5274 = vld [vmem:[#allocation14 + $0x418] sm:$0xff]
          %v5275 = vld [vmem:[#allocation14 + $0x420] sm:$0xff]
          %v5276 = vld [vmem:[#allocation14 + $0x428] sm:$0xff]
          %v5277 = vld [vmem:[#allocation14 + $0x430] sm:$0xff]
          %v5278 = vld [vmem:[#allocation14 + $0x438] sm:$0xff]
          %v5279 = vld [vmem:[#allocation14 + $0x440] sm:$0xff]
          %v5280 = vld [vmem:[#allocation14 + $0x448] sm:$0xff]
          %v5281 = vld [vmem:[#allocation14 + $0x450] sm:$0xff]
          %v5282 = vld [vmem:[#allocation14 + $0x458] sm:$0xff]
          %v5283 = vld [vmem:[#allocation14 + $0x460] sm:$0xff]
          %v5284 = vld [vmem:[#allocation14 + $0x468] sm:$0xff]
          %v5285 = vld [vmem:[#allocation14 + $0x470] sm:$0xff]
          %v5286 = vld [vmem:[#allocation14 + $0x478] sm:$0xff]
          %v5287 = vld [vmem:[#allocation14 + $0x480] sm:$0xff]
          %v5288 = vld [vmem:[#allocation14 + $0x488] sm:$0xff]
          %v5289 = vld [vmem:[#allocation14 + $0x490] sm:$0xff]
          %v5290 = vld [vmem:[#allocation14 + $0x498] sm:$0xff]
          %v5291 = vld [vmem:[#allocation14 + $0x4a0] sm:$0xff]
          %v5292 = vld [vmem:[#allocation14 + $0x4a8] sm:$0xff]
          %v5293 = vld [vmem:[#allocation14 + $0x4b0] sm:$0xff]
          %v5294 = vld [vmem:[#allocation14 + $0x4b8] sm:$0xff]
          %v5295 = vld [vmem:[#allocation14 + $0x4c0] sm:$0xff]
          %v5296 = vld [vmem:[#allocation14 + $0x4c8] sm:$0xff]
          %v5297 = vld [vmem:[#allocation14 + $0x4d0] sm:$0xff]
          %v5298 = vld [vmem:[#allocation14 + $0x4d8] sm:$0xff]
          %v5299 = vld [vmem:[#allocation14 + $0x4e0] sm:$0xff]
          %v5300 = vld [vmem:[#allocation14 + $0x4e8] sm:$0xff]
          %v5301 = vld [vmem:[#allocation14 + $0x4f0] sm:$0xff]
          %v5302 = vld [vmem:[#allocation14 + $0x4f8] sm:$0xff]
          %v5303 = vld [vmem:[#allocation14 + $0x500] sm:$0xff]
          %v5304 = vld [vmem:[#allocation14 + $0x508] sm:$0xff]
          %v5305 = vld [vmem:[#allocation14 + $0x510] sm:$0xff]
          %v5306 = vld [vmem:[#allocation14 + $0x518] sm:$0xff]
          %v5307 = vld [vmem:[#allocation14 + $0x520] sm:$0xff]
          %v5308 = vld [vmem:[#allocation14 + $0x528] sm:$0xff]
          %v5309 = vld [vmem:[#allocation14 + $0x530] sm:$0xff]
          %v5310 = vld [vmem:[#allocation14 + $0x538] sm:$0xff]
          %v5311 = vld [vmem:[#allocation14 + $0x540] sm:$0xff]
          %v5312 = vld [vmem:[#allocation14 + $0x548] sm:$0xff]
          %v5313 = vld [vmem:[#allocation14 + $0x550] sm:$0xff]
          %v5314 = vld [vmem:[#allocation14 + $0x558] sm:$0xff]
          %v5315 = vld [vmem:[#allocation14 + $0x560] sm:$0xff]
          %v5316 = vld [vmem:[#allocation14 + $0x568] sm:$0xff]
          %v5317 = vld [vmem:[#allocation14 + $0x570] sm:$0xff]
          %v5318 = vld [vmem:[#allocation14 + $0x578] sm:$0xff]
          %v5319 = vld [vmem:[#allocation14 + $0x580] sm:$0xff]
          %v5320 = vld [vmem:[#allocation14 + $0x588] sm:$0xff]
          %v5321 = vld [vmem:[#allocation14 + $0x590] sm:$0xff]
          %v5322 = vld [vmem:[#allocation14 + $0x598] sm:$0xff]
          %v5323 = vld [vmem:[#allocation14 + $0x5a0] sm:$0xff]
          %v5324 = vld [vmem:[#allocation14 + $0x5a8] sm:$0xff]
          %v5325 = vld [vmem:[#allocation14 + $0x5b0] sm:$0xff]
          %v5326 = vld [vmem:[#allocation14 + $0x5b8] sm:$0xff]
          %v5327 = vld [vmem:[#allocation14 + $0x5c0] sm:$0xff]
          %v5328 = vld [vmem:[#allocation14 + $0x5c8] sm:$0xff]
          %v5329 = vld [vmem:[#allocation14 + $0x5d0] sm:$0xff]
          %v5330 = vld [vmem:[#allocation14 + $0x5d8] sm:$0xff]
          %v5331 = vld [vmem:[#allocation14 + $0x5e0] sm:$0xff]
          %v5332 = vld [vmem:[#allocation14 + $0x5e8] sm:$0xff]
          %v5333 = vld [vmem:[#allocation14 + $0x5f0] sm:$0xff]
          %v5334 = vld [vmem:[#allocation14 + $0x5f8] sm:$0xff]
          %v5335 = vld [vmem:[#allocation14 + $0x600] sm:$0xff]
          %v5336 = vld [vmem:[#allocation14 + $0x608] sm:$0xff]
          %v5337 = vld [vmem:[#allocation14 + $0x610] sm:$0xff]
          %v5338 = vld [vmem:[#allocation14 + $0x618] sm:$0xff]
          %v5339 = vld [vmem:[#allocation14 + $0x620] sm:$0xff]
          %v5340 = vld [vmem:[#allocation14 + $0x628] sm:$0xff]
          %v5341 = vld [vmem:[#allocation14 + $0x630] sm:$0xff]
          %v5342 = vld [vmem:[#allocation14 + $0x638] sm:$0xff]
          %v5343 = vld [vmem:[#allocation14 + $0x640] sm:$0xff]
          %v5344 = vld [vmem:[#allocation14 + $0x648] sm:$0xff]
          %v5345 = vld [vmem:[#allocation14 + $0x650] sm:$0xff]
          %v5346 = vld [vmem:[#allocation14 + $0x658] sm:$0xff]
          %v5347 = vld [vmem:[#allocation14 + $0x660] sm:$0xff]
          %v5348 = vld [vmem:[#allocation14 + $0x668] sm:$0xff]
          %v5349 = vld [vmem:[#allocation14 + $0x670] sm:$0xff]
          %v5350 = vld [vmem:[#allocation14 + $0x678] sm:$0xff]
          %v5351 = vld [vmem:[#allocation14 + $0x680] sm:$0xff]
          %v5352 = vld [vmem:[#allocation14 + $0x688] sm:$0xff]
          %v5353 = vld [vmem:[#allocation14 + $0x690] sm:$0xff]
          %v5354 = vld [vmem:[#allocation14 + $0x698] sm:$0xff]
          %v5355 = vld [vmem:[#allocation14 + $0x6a0] sm:$0xff]
          %v5356 = vld [vmem:[#allocation14 + $0x6a8] sm:$0xff]
          %v5357 = vld [vmem:[#allocation14 + $0x6b0] sm:$0xff]
          %v5358 = vld [vmem:[#allocation14 + $0x6b8] sm:$0xff]
          %v5359 = vld [vmem:[#allocation14 + $0x6c0] sm:$0xff]
          %v5360 = vld [vmem:[#allocation14 + $0x6c8] sm:$0xff]
          %v5361 = vld [vmem:[#allocation14 + $0x6d0] sm:$0xff]
          %v5362 = vld [vmem:[#allocation14 + $0x6d8] sm:$0xff]
          %v5363 = vld [vmem:[#allocation14 + $0x6e0] sm:$0xff]
          %v5364 = vld [vmem:[#allocation14 + $0x6e8] sm:$0xff]
          %v5365 = vld [vmem:[#allocation14 + $0x6f0] sm:$0xff]
          %v5366 = vld [vmem:[#allocation14 + $0x6f8] sm:$0xff]
          %v5367 = vld [vmem:[#allocation14 + $0x700] sm:$0xff]
          %v5368 = vld [vmem:[#allocation14 + $0x708] sm:$0xff]
          %v5369 = vld [vmem:[#allocation14 + $0x710] sm:$0xff]
          %v5370 = vld [vmem:[#allocation14 + $0x718] sm:$0xff]
          %v5371 = vld [vmem:[#allocation14 + $0x720] sm:$0xff]
          %v5372 = vld [vmem:[#allocation14 + $0x728] sm:$0xff]
          %v5373 = vld [vmem:[#allocation14 + $0x730] sm:$0xff]
          %v5374 = vld [vmem:[#allocation14 + $0x738] sm:$0xff]
          %v5375 = vld [vmem:[#allocation14 + $0x740] sm:$0xff]
          %v5376 = vld [vmem:[#allocation14 + $0x748] sm:$0xff]
          %v5377 = vld [vmem:[#allocation14 + $0x750] sm:$0xff]
          %v5378 = vld [vmem:[#allocation14 + $0x758] sm:$0xff]
          %v5379 = vld [vmem:[#allocation14 + $0x760] sm:$0xff]
          %v5380 = vld [vmem:[#allocation14 + $0x768] sm:$0xff]
          %v5381 = vld [vmem:[#allocation14 + $0x770] sm:$0xff]
          %v5382 = vld [vmem:[#allocation14 + $0x778] sm:$0xff]
          %v5383 = vld [vmem:[#allocation14 + $0x780] sm:$0xff]
          %v5384 = vld [vmem:[#allocation14 + $0x788] sm:$0xff]
          %v5385 = vld [vmem:[#allocation14 + $0x790] sm:$0xff]
          %v5386 = vld [vmem:[#allocation14 + $0x798] sm:$0xff]
          %v5387 = vld [vmem:[#allocation14 + $0x7a0] sm:$0xff]
          %v5388 = vld [vmem:[#allocation14 + $0x7a8] sm:$0xff]
          %v5389 = vld [vmem:[#allocation14 + $0x7b0] sm:$0xff]
          %v5390 = vld [vmem:[#allocation14 + $0x7b8] sm:$0xff]
          %v5391 = vld [vmem:[#allocation14 + $0x7c0] sm:$0xff]
          %v5392 = vld [vmem:[#allocation14 + $0x7c8] sm:$0xff]
          %v5393 = vld [vmem:[#allocation14 + $0x7d0] sm:$0xff]
          %v5394 = vld [vmem:[#allocation14 + $0x7d8] sm:$0xff]
          %v5395 = vld [vmem:[#allocation14 + $0x7e0] sm:$0xff]
          %v5396 = vld [vmem:[#allocation14 + $0x7e8] sm:$0xff]
          %v5397 = vld [vmem:[#allocation14 + $0x7f0] sm:$0xff]
          %v5398 = vld [vmem:[#allocation14 + $0x7f8] sm:$0xff]
          %v5399 = vld [vmem:[#allocation15] sm:$0xff]
          %v5401 = vlaneseq
          %v5402 = vshrl.u32 %v5401, 7
          %v5403 = vsub.s32 0, %v5402
          %v5404 = vrot.slane %v5399, %v5403
          %v5405 = vlaneseq
          %v5406 = vshrl.u32 %v5405, 7
          %v5407 = vsub.s32 1, %v5406
          %v5408 = vrot.slane %v5399, %v5407
          %v5409 = vlaneseq
          %v5410 = vshrl.u32 %v5409, 7
          %v5411 = vsub.s32 2, %v5410
          %v5412 = vrot.slane %v5399, %v5411
          %v5413 = vlaneseq
          %v5414 = vshrl.u32 %v5413, 7
          %v5415 = vsub.s32 3, %v5414
          %v5416 = vrot.slane %v5399, %v5415
          %v5417 = vlaneseq
          %v5418 = vshrl.u32 %v5417, 7
          %v5419 = vsub.s32 4, %v5418
          %v5420 = vrot.slane %v5399, %v5419
          %v5421 = vlaneseq
          %v5422 = vshrl.u32 %v5421, 7
          %v5423 = vsub.s32 5, %v5422
          %v5424 = vrot.slane %v5399, %v5423
          %v5425 = vlaneseq
          %v5426 = vshrl.u32 %v5425, 7
          %v5427 = vsub.s32 6, %v5426
          %v5428 = vrot.slane %v5399, %v5427
          %v5429 = vlaneseq
          %v5430 = vshrl.u32 %v5429, 7
          %v5431 = vsub.s32 7, %v5430
          %v5432 = vrot.slane %v5399, %v5431
          %5441 = vmatprep.subr.mxu0 %v5144
          %5442 = vmatpush1.msra.mxu0 %v5143
          %5443 = vmatprep.subr.mxu0 %v5152
          %5444 = vmatpush1.msra.mxu0 %v5151
          %5445 = vmatprep.subr.mxu0 %v5160
          %5446 = vmatpush1.msra.mxu0 %v5159
          %5447 = vmatprep.subr.mxu0 %v5168
          %5448 = vmatpush1.msra.mxu0 %v5167
          %5449 = vmatprep.subr.mxu0 %v5176
          %5450 = vmatpush1.msra.mxu0 %v5175
          %5451 = vmatprep.subr.mxu0 %v5184
          %5452 = vmatpush1.msra.mxu0 %v5183
          %5453 = vmatprep.subr.mxu0 %v5192
          %5454 = vmatpush1.msra.mxu0 %v5191
          %5455 = vmatprep.subr.mxu0 %v5200
          %5456 = vmatpush1.msra.mxu0 %v5199
          %5457 = vmatprep.subr.mxu0 %v5208
          %5458 = vmatpush1.msra.mxu0 %v5207
          %5459 = vmatprep.subr.mxu0 %v5216
          %5460 = vmatpush1.msra.mxu0 %v5215
          %5461 = vmatprep.subr.mxu0 %v5224
          %5462 = vmatpush1.msra.mxu0 %v5223
          %5463 = vmatprep.subr.mxu0 %v5232
          %5464 = vmatpush1.msra.mxu0 %v5231
          %5465 = vmatprep.subr.mxu0 %v5240
          %5466 = vmatpush1.msra.mxu0 %v5239
          %5467 = vmatprep.subr.mxu0 %v5248
          %5468 = vmatpush1.msra.mxu0 %v5247
          %5469 = vmatprep.subr.mxu0 %v5256
          %5470 = vmatpush1.msra.mxu0 %v5255
          %5471 = vmatprep.subr.mxu0 %v5264
          %5472 = vmatpush1.msra.mxu0 %v5263
          %5473 = vmatprep.subr.mxu0 %v5272
          %5474 = vmatpush1.msra.mxu0 %v5271
          %5475 = vmatprep.subr.mxu0 %v5280
          %5476 = vmatpush1.msra.mxu0 %v5279
          %5477 = vmatprep.subr.mxu0 %v5288
          %5478 = vmatpush1.msra.mxu0 %v5287
          %5479 = vmatprep.subr.mxu0 %v5296
          %5480 = vmatpush1.msra.mxu0 %v5295
          %5481 = vmatprep.subr.mxu0 %v5304
          %5482 = vmatpush1.msra.mxu0 %v5303
          %5483 = vmatprep.subr.mxu0 %v5312
          %5484 = vmatpush1.msra.mxu0 %v5311
          %5485 = vmatprep.subr.mxu0 %v5320
          %5486 = vmatpush1.msra.mxu0 %v5319
          %5487 = vmatprep.subr.mxu0 %v5328
          %5488 = vmatpush1.msra.mxu0 %v5327
          %5489 = vmatprep.subr.mxu0 %v5336
          %5490 = vmatpush1.msra.mxu0 %v5335
          %5491 = vmatprep.subr.mxu0 %v5344
          %5492 = vmatpush1.msra.mxu0 %v5343
          %5493 = vmatprep.subr.mxu0 %v5352
          %5494 = vmatpush1.msra.mxu0 %v5351
          %5495 = vmatprep.subr.mxu0 %v5360
          %5496 = vmatpush1.msra.mxu0 %v5359
          %5497 = vmatprep.subr.mxu0 %v5368
          %5498 = vmatpush1.msra.mxu0 %v5367
          %5499 = vmatprep.subr.mxu0 %v5376
          %5500 = vmatpush1.msra.mxu0 %v5375
          %5501 = vmatprep.subr.mxu0 %v5384
          %5502 = vmatpush1.msra.mxu0 %v5383
          %5503 = vmatprep.subr.mxu0 %v5392
          %5504 = vmatpush1.msra.mxu0 %v5391
          %5505 = vmatprep.mubr.f32.mxu0 %v5140
          %5506 = vmatmul.mubr.f32.gmra.mrb[0].mxu0 %v5139
          %v5507 = vpop.f32.mrb[0].mxu0
          %v5508 = vadd.f32 %v5404, %v5507
          %v5509 = vpop.f32.mrb[0].mxu0
          %v5510 = vadd.f32 %v5408, %v5509
          %5511 = vmatprep.mubr.f32.mxu0 %v5142
          %5512 = vmatmul.mubr.f32.gmra.mrb[0].mxu0 %v5141
          %v5513 = vpop.f32.mrb[0].mxu0
          %v5514 = vadd.f32 %v5404, %v5513
          %v5515 = vpop.f32.mrb[0].mxu0
          %v5516 = vadd.f32 %v5408, %v5515
          %5517 = vdwg.mxu0
          %5518 = vmatprep.subr.mxu0 %v5146
          %5519 = vmatpush1.msra.mxu0 %v5145
          %5520 = vmatprep.subr.mxu0 %v5154
          %5521 = vmatpush1.msra.mxu0 %v5153
          %5522 = vmatprep.subr.mxu0 %v5162
          %5523 = vmatpush1.msra.mxu0 %v5161
          %5524 = vmatprep.subr.mxu0 %v5170
          %5525 = vmatpush1.msra.mxu0 %v5169
          %5526 = vmatprep.subr.mxu0 %v5178
          %5527 = vmatpush1.msra.mxu0 %v5177
          %5528 = vmatprep.subr.mxu0 %v5186
          %5529 = vmatpush1.msra.mxu0 %v5185
          %5530 = vmatprep.subr.mxu0 %v5194
          %5531 = vmatpush1.msra.mxu0 %v5193
          %5532 = vmatprep.subr.mxu0 %v5202
          %5533 = vmatpush1.msra.mxu0 %v5201
          %5534 = vmatprep.subr.mxu0 %v5210
          %5535 = vmatpush1.msra.mxu0 %v5209
          %5536 = vmatprep.subr.mxu0 %v5218
          %5537 = vmatpush1.msra.mxu0 %v5217
          %5538 = vmatprep.subr.mxu0 %v5226
          %5539 = vmatpush1.msra.mxu0 %v5225
          %5540 = vmatprep.subr.mxu0 %v5234
          %5541 = vmatpush1.msra.mxu0 %v5233
          %5542 = vmatprep.subr.mxu0 %v5242
          %5543 = vmatpush1.msra.mxu0 %v5241
          %5544 = vmatprep.subr.mxu0 %v5250
          %5545 = vmatpush1.msra.mxu0 %v5249
          %5546 = vmatprep.subr.mxu0 %v5258
          %5547 = vmatpush1.msra.mxu0 %v5257
          %5548 = vmatprep.subr.mxu0 %v5266
          %5549 = vmatpush1.msra.mxu0 %v5265
          %5550 = vmatprep.subr.mxu0 %v5274
          %5551 = vmatpush1.msra.mxu0 %v5273
          %5552 = vmatprep.subr.mxu0 %v5282
          %5553 = vmatpush1.msra.mxu0 %v5281
          %5554 = vmatprep.subr.mxu0 %v5290
          %5555 = vmatpush1.msra.mxu0 %v5289
          %5556 = vmatprep.subr.mxu0 %v5298
          %5557 = vmatpush1.msra.mxu0 %v5297
          %5558 = vmatprep.subr.mxu0 %v5306
          %5559 = vmatpush1.msra.mxu0 %v5305
          %5560 = vmatprep.subr.mxu0 %v5314
          %5561 = vmatpush1.msra.mxu0 %v5313
          %5562 = vmatprep.subr.mxu0 %v5322
          %5563 = vmatpush1.msra.mxu0 %v5321
          %5564 = vmatprep.subr.mxu0 %v5330
          %5565 = vmatpush1.msra.mxu0 %v5329
          %5566 = vmatprep.subr.mxu0 %v5338
          %5567 = vmatpush1.msra.mxu0 %v5337
          %5568 = vmatprep.subr.mxu0 %v5346
          %5569 = vmatpush1.msra.mxu0 %v5345
          %5570 = vmatprep.subr.mxu0 %v5354
          %5571 = vmatpush1.msra.mxu0 %v5353
          %5572 = vmatprep.subr.mxu0 %v5362
          %5573 = vmatpush1.msra.mxu0 %v5361
          %5574 = vmatprep.subr.mxu0 %v5370
          %5575 = vmatpush1.msra.mxu0 %v5369
          %5576 = vmatprep.subr.mxu0 %v5378
          %5577 = vmatpush1.msra.mxu0 %v5377
          %5578 = vmatprep.subr.mxu0 %v5386
          %5579 = vmatpush1.msra.mxu0 %v5385
          %5580 = vmatprep.subr.mxu0 %v5394
          %5581 = vmatpush1.msra.mxu0 %v5393
          %5582 = vmatprep.mubr.f32.mxu0 %v5140
          %5583 = vmatmul.mubr.f32.gmra.mrb[0].mxu0 %v5139
          %v5584 = vpop.f32.mrb[0].mxu0
          %v5585 = vadd.f32 %v5412, %v5584
          %v5586 = vpop.f32.mrb[0].mxu0
          %v5587 = vadd.f32 %v5416, %v5586
          %5588 = vmatprep.mubr.f32.mxu0 %v5142
          %5589 = vmatmul.mubr.f32.gmra.mrb[0].mxu0 %v5141
          %v5590 = vpop.f32.mrb[0].mxu0
          %v5591 = vadd.f32 %v5412, %v5590
          %v5592 = vpop.f32.mrb[0].mxu0
          %v5593 = vadd.f32 %v5416, %v5592
          %5594 = vdwg.mxu0
          %5595 = vmatprep.subr.mxu0 %v5148
          %5596 = vmatpush1.msra.mxu0 %v5147
          %5597 = vmatprep.subr.mxu0 %v5156
          %5598 = vmatpush1.msra.mxu0 %v5155
          %5599 = vmatprep.subr.mxu0 %v5164
          %5600 = vmatpush1.msra.mxu0 %v5163
          %5601 = vmatprep.subr.mxu0 %v5172
          %5602 = vmatpush1.msra.mxu0 %v5171
          %5603 = vmatprep.subr.mxu0 %v5180
          %5604 = vmatpush1.msra.mxu0 %v5179
          %5605 = vmatprep.subr.mxu0 %v5188
          %5606 = vmatpush1.msra.mxu0 %v5187
          %5607 = vmatprep.subr.mxu0 %v5196
          %5608 = vmatpush1.msra.mxu0 %v5195
          %5609 = vmatprep.subr.mxu0 %v5204
          %5610 = vmatpush1.msra.mxu0 %v5203
          %5611 = vmatprep.subr.mxu0 %v5212
          %5612 = vmatpush1.msra.mxu0 %v5211
          %5613 = vmatprep.subr.mxu0 %v5220
          %5614 = vmatpush1.msra.mxu0 %v5219
          %5615 = vmatprep.subr.mxu0 %v5228
          %5616 = vmatpush1.msra.mxu0 %v5227
          %5617 = vmatprep.subr.mxu0 %v5236
          %5618 = vmatpush1.msra.mxu0 %v5235
          %5619 = vmatprep.subr.mxu0 %v5244
          %5620 = vmatpush1.msra.mxu0 %v5243
          %5621 = vmatprep.subr.mxu0 %v5252
          %5622 = vmatpush1.msra.mxu0 %v5251
          %5623 = vmatprep.subr.mxu0 %v5260
          %5624 = vmatpush1.msra.mxu0 %v5259
          %5625 = vmatprep.subr.mxu0 %v5268
          %5626 = vmatpush1.msra.mxu0 %v5267
          %5627 = vmatprep.subr.mxu0 %v5276
          %5628 = vmatpush1.msra.mxu0 %v5275
          %5629 = vmatprep.subr.mxu0 %v5284
          %5630 = vmatpush1.msra.mxu0 %v5283
          %5631 = vmatprep.subr.mxu0 %v5292
          %5632 = vmatpush1.msra.mxu0 %v5291
          %5633 = vmatprep.subr.mxu0 %v5300
          %5634 = vmatpush1.msra.mxu0 %v5299
          %5635 = vmatprep.subr.mxu0 %v5308
          %5636 = vmatpush1.msra.mxu0 %v5307
          %5637 = vmatprep.subr.mxu0 %v5316
          %5638 = vmatpush1.msra.mxu0 %v5315
          %5639 = vmatprep.subr.mxu0 %v5324
          %5640 = vmatpush1.msra.mxu0 %v5323
          %5641 = vmatprep.subr.mxu0 %v5332
          %5642 = vmatpush1.msra.mxu0 %v5331
          %5643 = vmatprep.subr.mxu0 %v5340
          %5644 = vmatpush1.msra.mxu0 %v5339
          %5645 = vmatprep.subr.mxu0 %v5348
          %5646 = vmatpush1.msra.mxu0 %v5347
          %5647 = vmatprep.subr.mxu0 %v5356
          %5648 = vmatpush1.msra.mxu0 %v5355
          %5649 = vmatprep.subr.mxu0 %v5364
          %5650 = vmatpush1.msra.mxu0 %v5363
          %5651 = vmatprep.subr.mxu0 %v5372
          %5652 = vmatpush1.msra.mxu0 %v5371
          %5653 = vmatprep.subr.mxu0 %v5380
          %5654 = vmatpush1.msra.mxu0 %v5379
          %5655 = vmatprep.subr.mxu0 %v5388
          %5656 = vmatpush1.msra.mxu0 %v5387
          %5657 = vmatprep.subr.mxu0 %v5396
          %5658 = vmatpush1.msra.mxu0 %v5395
          %5659 = vmatprep.mubr.f32.mxu0 %v5140
          %5660 = vmatmul.mubr.f32.gmra.mrb[0].mxu0 %v5139
          %v5661 = vpop.f32.mrb[0].mxu0
          %v5662 = vadd.f32 %v5420, %v5661
          %v5663 = vpop.f32.mrb[0].mxu0
          %v5664 = vadd.f32 %v5424, %v5663
          %5665 = vmatprep.mubr.f32.mxu0 %v5142
          %5666 = vmatmul.mubr.f32.gmra.mrb[0].mxu0 %v5141
          %v5667 = vpop.f32.mrb[0].mxu0
          %v5668 = vadd.f32 %v5420, %v5667
          %v5669 = vpop.f32.mrb[0].mxu0
          %v5670 = vadd.f32 %v5424, %v5669
          %5671 = vdwg.mxu0
          %5672 = vmatprep.subr.mxu0 %v5150
          %5673 = vmatpush1.msra.mxu0 %v5149
          %5674 = vmatprep.subr.mxu0 %v5158
          %5675 = vmatpush1.msra.mxu0 %v5157
          %5676 = vmatprep.subr.mxu0 %v5166
          %5677 = vmatpush1.msra.mxu0 %v5165
          %5678 = vmatprep.subr.mxu0 %v5174
          %5679 = vmatpush1.msra.mxu0 %v5173
          %5680 = vmatprep.subr.mxu0 %v5182
          %5681 = vmatpush1.msra.mxu0 %v5181
          %5682 = vmatprep.subr.mxu0 %v5190
          %5683 = vmatpush1.msra.mxu0 %v5189
          %5684 = vmatprep.subr.mxu0 %v5198
          %5685 = vmatpush1.msra.mxu0 %v5197
          %5686 = vmatprep.subr.mxu0 %v5206
          %5687 = vmatpush1.msra.mxu0 %v5205
          %5688 = vmatprep.subr.mxu0 %v5214
          %5689 = vmatpush1.msra.mxu0 %v5213
          %5690 = vmatprep.subr.mxu0 %v5222
          %5691 = vmatpush1.msra.mxu0 %v5221
          %5692 = vmatprep.subr.mxu0 %v5230
          %5693 = vmatpush1.msra.mxu0 %v5229
          %5694 = vmatprep.subr.mxu0 %v5238
          %5695 = vmatpush1.msra.mxu0 %v5237
          %5696 = vmatprep.subr.mxu0 %v5246
          %5697 = vmatpush1.msra.mxu0 %v5245
          %5698 = vmatprep.subr.mxu0 %v5254
          %5699 = vmatpush1.msra.mxu0 %v5253
          %5700 = vmatprep.subr.mxu0 %v5262
          %5701 = vmatpush1.msra.mxu0 %v5261
          %5702 = vmatprep.subr.mxu0 %v5270
          %5703 = vmatpush1.msra.mxu0 %v5269
          %5704 = vmatprep.subr.mxu0 %v5278
          %5705 = vmatpush1.msra.mxu0 %v5277
          %5706 = vmatprep.subr.mxu0 %v5286
          %5707 = vmatpush1.msra.mxu0 %v5285
          %5708 = vmatprep.subr.mxu0 %v5294
          %5709 = vmatpush1.msra.mxu0 %v5293
          %5710 = vmatprep.subr.mxu0 %v5302
          %5711 = vmatpush1.msra.mxu0 %v5301
          %5712 = vmatprep.subr.mxu0 %v5310
          %5713 = vmatpush1.msra.mxu0 %v5309
          %5714 = vmatprep.subr.mxu0 %v5318
          %5715 = vmatpush1.msra.mxu0 %v5317
          %5716 = vmatprep.subr.mxu0 %v5326
          %5717 = vmatpush1.msra.mxu0 %v5325
          %5718 = vmatprep.subr.mxu0 %v5334
          %5719 = vmatpush1.msra.mxu0 %v5333
          %5720 = vmatprep.subr.mxu0 %v5342
          %5721 = vmatpush1.msra.mxu0 %v5341
          %5722 = vmatprep.subr.mxu0 %v5350
          %5723 = vmatpush1.msra.mxu0 %v5349
          %5724 = vmatprep.subr.mxu0 %v5358
          %5725 = vmatpush1.msra.mxu0 %v5357
          %5726 = vmatprep.subr.mxu0 %v5366
          %5727 = vmatpush1.msra.mxu0 %v5365
          %5728 = vmatprep.subr.mxu0 %v5374
          %5729 = vmatpush1.msra.mxu0 %v5373
          %5730 = vmatprep.subr.mxu0 %v5382
          %5731 = vmatpush1.msra.mxu0 %v5381
          %5732 = vmatprep.subr.mxu0 %v5390
          %5733 = vmatpush1.msra.mxu0 %v5389
          %5734 = vmatprep.subr.mxu0 %v5398
          %5735 = vmatpush1.msra.mxu0 %v5397
          %5736 = vmatprep.mubr.f32.mxu0 %v5140
          %5737 = vmatmul.mubr.f32.gmra.mrb[0].mxu0 %v5139
          %v5738 = vpop.f32.mrb[0].mxu0
          %v5739 = vadd.f32 %v5428, %v5738
          %v5740 = vpop.f32.mrb[0].mxu0
          %v5741 = vadd.f32 %v5432, %v5740
          %5742 = vmatprep.mubr.f32.mxu0 %v5142
          %5743 = vmatmul.mubr.f32.gmra.mrb[0].mxu0 %v5141
          %v5744 = vpop.f32.mrb[0].mxu0
          %v5745 = vadd.f32 %v5428, %v5744
          %v5746 = vpop.f32.mrb[0].mxu0
          %v5747 = vadd.f32 %v5432, %v5746
          %5748 = vdwg.mxu0
          %v5749 = vmax.f32 %v5508, %v5585
          %v5750 = vmax.f32 %v5510, %v5587
          %v5751 = vmax.f32 %v5749, %v5662
          %v5752 = vmax.f32 %v5750, %v5664
          %v5753 = vmax.f32 %v5751, %v5739
          %v5754 = vmax.f32 %v5752, %v5741
          %v5755 = vmax.f32 %v5753, %v5754
          %5756 = vmax.xlane.f32.xlu0 %v5755
          %v5757 = vpop.xlane.xlu0 %5756
          %v5758 = vmax.f32 %v5514, %v5591
          %v5759 = vmax.f32 %v5516, %v5593
          %v5760 = vmax.f32 %v5758, %v5668
          %v5761 = vmax.f32 %v5759, %v5670
          %v5762 = vmax.f32 %v5760, %v5745
          %v5763 = vmax.f32 %v5761, %v5747
          %v5764 = vmax.f32 %v5762, %v5763
          %5765 = vmax.xlane.f32.xlu0 %v5764
          %v5766 = vpop.xlane.xlu0 %5765
          %v5767 = vsub.f32 %v5508, %v5757
          %v5768 = vsub.f32 %v5510, %v5757
          %v5769 = vsub.f32 %v5585, %v5757
          %v5770 = vsub.f32 %v5587, %v5757
          %v5771 = vsub.f32 %v5662, %v5757
          %v5772 = vsub.f32 %v5664, %v5757
          %v5773 = vsub.f32 %v5739, %v5757
          %v5774 = vsub.f32 %v5741, %v5757
          %v5775 = vsub.f32 %v5514, %v5766
          %v5776 = vsub.f32 %v5516, %v5766
          %v5777 = vsub.f32 %v5591, %v5766
          %v5778 = vsub.f32 %v5593, %v5766
          %v5779 = vsub.f32 %v5668, %v5766
          %v5780 = vsub.f32 %v5670, %v5766
          %v5781 = vsub.f32 %v5745, %v5766
          %v5782 = vsub.f32 %v5747, %v5766
          %v5783 = vmul.f32 %v5767, 1.442695
          %v5784 = vpow.pop %v5783
          %v5785 = vmul.f32 %v5768, 1.442695
          %v5786 = vpow.pop %v5785
          %v5787 = vmul.f32 %v5769, 1.442695
          %v5788 = vpow.pop %v5787
          %v5789 = vmul.f32 %v5770, 1.442695
          %v5790 = vpow.pop %v5789
          %v5791 = vmul.f32 %v5771, 1.442695
          %v5792 = vpow.pop %v5791
          %v5793 = vmul.f32 %v5772, 1.442695
          %v5794 = vpow.pop %v5793
          %v5795 = vmul.f32 %v5773, 1.442695
          %v5796 = vpow.pop %v5795
          %v5797 = vmul.f32 %v5774, 1.442695
          %v5798 = vpow.pop %v5797
          %v5799 = vmul.f32 %v5775, 1.442695
          %v5800 = vpow.pop %v5799
          %v5801 = vmul.f32 %v5776, 1.442695
          %v5802 = vpow.pop %v5801
          %v5803 = vmul.f32 %v5777, 1.442695
          %v5804 = vpow.pop %v5803
          %v5805 = vmul.f32 %v5778, 1.442695
          %v5806 = vpow.pop %v5805
          %v5807 = vmul.f32 %v5779, 1.442695
          %v5808 = vpow.pop %v5807
          %v5809 = vmul.f32 %v5780, 1.442695
          %v5810 = vpow.pop %v5809
          %v5811 = vmul.f32 %v5781, 1.442695
          %v5812 = vpow.pop %v5811
          %v5813 = vmul.f32 %v5782, 1.442695
          %v5814 = vpow.pop %v5813
          %v5815 = vadd.f32 %v5784, %v5786
          %v5816 = vadd.f32 %v5815, %v5788
          %v5817 = vadd.f32 %v5816, %v5790
          %v5818 = vadd.f32 %v5817, %v5792
          %v5819 = vadd.f32 %v5818, %v5794
          %v5820 = vadd.f32 %v5819, %v5796
          %v5821 = vadd.f32 %v5820, %v5798
          %5822 = vadd.xlane.f32.xlu0 %v5821
          %v5823 = vpop.xlane.xlu0 %5822
          %v5824 = vadd.f32 %v5800, %v5802
          %v5825 = vadd.f32 %v5824, %v5804
          %v5826 = vadd.f32 %v5825, %v5806
          %v5827 = vadd.f32 %v5826, %v5808
          %v5828 = vadd.f32 %v5827, %v5810
          %v5829 = vadd.f32 %v5828, %v5812
          %v5830 = vadd.f32 %v5829, %v5814
          %5831 = vadd.xlane.f32.xlu0 %v5830
          %v5832 = vpop.xlane.xlu0 %5831
          %v5833 = vrcp.pop %v5823
          %v5834 = vrcp.pop %v5832
          %v5835 = vmul.f32 %v5784, %v5833
          %v5836 = vmul.f32 %v5786, %v5833
          %v5837 = vmul.f32 %v5788, %v5833
          %v5838 = vmul.f32 %v5790, %v5833
          %v5839 = vmul.f32 %v5792, %v5833
          %v5840 = vmul.f32 %v5794, %v5833
          %v5841 = vmul.f32 %v5796, %v5833
          %v5842 = vmul.f32 %v5798, %v5833
          %v5843 = vmul.f32 %v5800, %v5834
          %v5844 = vmul.f32 %v5802, %v5834
          %v5845 = vmul.f32 %v5804, %v5834
          %v5846 = vmul.f32 %v5806, %v5834
          %v5847 = vmul.f32 %v5808, %v5834
          %v5848 = vmul.f32 %v5810, %v5834
          %v5849 = vmul.f32 %v5812, %v5834
          %v5850 = vmul.f32 %v5814, %v5834
          %5851 = vst [vmem:[#allocation18] sm:$0xff] %v5835
          %5852 = vst [vmem:[#allocation18 + $0x8] sm:$0xff] %v5836
          %5853 = vst [vmem:[#allocation18 + $0x10] sm:$0xff] %v5837
          %5854 = vst [vmem:[#allocation18 + $0x18] sm:$0xff] %v5838
          %5855 = vst [vmem:[#allocation18 + $0x20] sm:$0xff] %v5839
          %5856 = vst [vmem:[#allocation18 + $0x28] sm:$0xff] %v5840
          %5857 = vst [vmem:[#allocation18 + $0x30] sm:$0xff] %v5841
          %5858 = vst [vmem:[#allocation18 + $0x38] sm:$0xff] %v5842
          %5859 = vst [vmem:[#allocation18 + $0x40] sm:$0xff] %v5843
          %5860 = vst [vmem:[#allocation18 + $0x48] sm:$0xff] %v5844
          %5861 = vst [vmem:[#allocation18 + $0x50] sm:$0xff] %v5845
          %5862 = vst [vmem:[#allocation18 + $0x58] sm:$0xff] %v5846
          %5863 = vst [vmem:[#allocation18 + $0x60] sm:$0xff] %v5847
          %5864 = vst [vmem:[#allocation18 + $0x68] sm:$0xff] %v5848
          %5865 = vst [vmem:[#allocation18 + $0x70] sm:$0xff] %v5849
          %5866 = vst [vmem:[#allocation18 + $0x78] sm:$0xff] %v5850
          %v5867 = vlaneseq
          %v5868 = vand.u32 %v5867, 127
          %v5869 = vadd.s32 %v5868, 128
          %v5870 = vadd.s32 %v5868, 256
          %v5871 = vadd.s32 %v5868, 384
          %v5872 = vadd.s32 %v5868, 512
          %v5873 = vadd.s32 %v5868, 640
          %v5874 = vadd.s32 %v5868, 768
          %v5875 = vadd.s32 %v5868, 896
          %vm5876 = vcmp.ge.f32.partialorder %v5508, %v5757
          %vm5877 = vcmp.ge.f32.partialorder %v5510, %v5757
          %vm5878 = vcmp.ge.f32.partialorder %v5585, %v5757
          %vm5879 = vcmp.ge.f32.partialorder %v5587, %v5757
          %vm5880 = vcmp.ge.f32.partialorder %v5662, %v5757
          %vm5881 = vcmp.ge.f32.partialorder %v5664, %v5757
          %vm5882 = vcmp.ge.f32.partialorder %v5739, %v5757
          %vm5883 = vcmp.ge.f32.partialorder %v5741, %v5757
          %vm5884 = vcmp.ge.f32.partialorder %v5514, %v5766
          %vm5885 = vcmp.ge.f32.partialorder %v5516, %v5766
          %vm5886 = vcmp.ge.f32.partialorder %v5591, %v5766
          %vm5887 = vcmp.ge.f32.partialorder %v5593, %v5766
          %vm5888 = vcmp.ge.f32.partialorder %v5668, %v5766
          %vm5889 = vcmp.ge.f32.partialorder %v5670, %v5766
          %vm5890 = vcmp.ge.f32.partialorder %v5745, %v5766
          %vm5891 = vcmp.ge.f32.partialorder %v5747, %v5766
          %v5892 = vsel %vm5876, %v5868, 1024
          %v5893 = vsel %vm5877, %v5869, 1024
          %v5894 = vsel %vm5878, %v5870, 1024
          %v5895 = vsel %vm5879, %v5871, 1024
          %v5896 = vsel %vm5880, %v5872, 1024
          %v5897 = vsel %vm5881, %v5873, 1024
          %v5898 = vsel %vm5882, %v5874, 1024
          %v5899 = vsel %vm5883, %v5875, 1024
          %v5900 = vsel %vm5884, %v5868, 1024
          %v5901 = vsel %vm5885, %v5869, 1024
          %v5902 = vsel %vm5886, %v5870, 1024
          %v5903 = vsel %vm5887, %v5871, 1024
          %v5904 = vsel %vm5888, %v5872, 1024
          %v5905 = vsel %vm5889, %v5873, 1024
          %v5906 = vsel %vm5890, %v5874, 1024
          %v5907 = vsel %vm5891, %v5875, 1024
          %vm5908 = vcmp.lt.s32.totalorder %v5892, %v5894
          %v5909 = vsel %vm5908, %v5892, %v5894
          %vm5910 = vcmp.lt.s32.totalorder %v5893, %v5895
          %v5911 = vsel %vm5910, %v5893, %v5895
          %vm5912 = vcmp.lt.s32.totalorder %v5909, %v5896
          %v5913 = vsel %vm5912, %v5909, %v5896
          %vm5914 = vcmp.lt.s32.totalorder %v5911, %v5897
          %v5915 = vsel %vm5914, %v5911, %v5897
          %vm5916 = vcmp.lt.s32.totalorder %v5913, %v5898
          %v5917 = vsel %vm5916, %v5913, %v5898
          %vm5918 = vcmp.lt.s32.totalorder %v5915, %v5899
          %v5919 = vsel %vm5918, %v5915, %v5899
          %vm5920 = vcmp.lt.s32.totalorder %v5917, %v5919
          %v5921 = vsel %vm5920, %v5917, %v5919
          %v5922 = vand.u32 %v5921, 65535
          %v5923 = vshra.s32 %v5921, 16
          %v5924 = vcvt.s32.f32 %v5922
          %v5925 = vcvt.s32.f32 %v5923
          %5926 = vmin.xlane.f32.xlu0 %v5925
          %v5927 = vpop.xlane.xlu0 %5926
          %vm5928 = vcmp.eq.f32.partialorder %v5925, %v5927
          %v5929 = vsel %vm5928, %v5924, inf
          %5930 = vmin.xlane.f32.xlu0 %v5929
          %v5931 = vpop.xlane.xlu0 %5930
          %v5932 = vcvt.f32.s32 %v5931
          %v5933 = vcvt.f32.s32 %v5927
          %v5934 = vshll.u32 %v5933, 16
          %v5935 = vadd.s32 %v5934, %v5932
          %vm5936 = vcmp.lt.s32.totalorder %v5900, %v5902
          %v5937 = vsel %vm5936, %v5900, %v5902
          %vm5938 = vcmp.lt.s32.totalorder %v5901, %v5903
          %v5939 = vsel %vm5938, %v5901, %v5903
          %vm5940 = vcmp.lt.s32.totalorder %v5937, %v5904
          %v5941 = vsel %vm5940, %v5937, %v5904
          %vm5942 = vcmp.lt.s32.totalorder %v5939, %v5905
          %v5943 = vsel %vm5942, %v5939, %v5905
          %vm5944 = vcmp.lt.s32.totalorder %v5941, %v5906
          %v5945 = vsel %vm5944, %v5941, %v5906
          %vm5946 = vcmp.lt.s32.totalorder %v5943, %v5907
          %v5947 = vsel %vm5946, %v5943, %v5907
          %vm5948 = vcmp.lt.s32.totalorder %v5945, %v5947
          %v5949 = vsel %vm5948, %v5945, %v5947
          %v5950 = vand.u32 %v5949, 65535
          %v5951 = vshra.s32 %v5949, 16
          %v5952 = vcvt.s32.f32 %v5950
          %v5953 = vcvt.s32.f32 %v5951
          %5954 = vmin.xlane.f32.xlu0 %v5953
          %v5955 = vpop.xlane.xlu0 %5954
          %vm5956 = vcmp.eq.f32.partialorder %v5953, %v5955
          %v5957 = vsel %vm5956, %v5952, inf
          %5958 = vmin.xlane.f32.xlu0 %v5957
          %v5959 = vpop.xlane.xlu0 %5958
          %v5960 = vcvt.f32.s32 %v5959
          %v5961 = vcvt.f32.s32 %v5955
          %v5962 = vshll.u32 %v5961, 16
          %v5963 = vadd.s32 %v5962, %v5960
          %vm5964 = vcmask 7168
          %5965 = vst.msk [vmem:[%s599] sm:$0xff] %vm5964, %v5935
          %5966 = vst.msk [vmem:[%s599 + $0x8] sm:$0xff] %vm5964, %v5963
        $region92: #{tpu_custom_call.1} parent=51 // pred_fallthru
          _
        %s5967 = smul.u32 2, %s40
        %p5968 = scmp.lt.s32.totalorder %s5967, 1
        %s5969 = scalar_select %p5968, %s5967, 1
        %s5970 = smul.addr %s5969, 8
        %s5971 = scalar_lea.vmem %s10, %s5970
        // Predicated region
        $region93: #{tpu_custom_call.1} parent=51 // pred_check
          %p5972 = pneg %p251
        $region94: #{tpu_custom_call.1} parent=51 // pred_check_branch
          %5974 = sbr.rel (%p5972) target = $region96
        $region95: #{tpu_custom_call.1} parent=51 // pred_region
          %s5975 = smul.u32 2, %s40
          %s5977 = ssub.s32 1024, 1024
          %5978 = vsyncadd [#allocation5], %s5977
          %s5979 = smul.addr %s5975, 4
          %s5980 = smul.addr %s5979, 128
          %s5981 = scalar_lea.hbm %s8, %s5980
          %s5982 = sshll.u32 [#allocation17], 4
          %s5983 = int_to_ptr.vmem [resolvable:$true] %s5982
          %5988 = dma.vmem_to_hbm [thread:$0]  %s5983, 1024, %s5981, [#allocation5], 512, 512, 32
        $region96: #{tpu_custom_call.1} parent=51 // pred_fallthru
          _
        // Predicated region
        $region97: #{tpu_custom_call.1} parent=51 // pred_check
          %p5989 = pneg %p277
        $region98: #{tpu_custom_call.1} parent=51 // pred_check_branch
          %5991 = sbr.rel (%p5989) target = $region100
        $region99: #{tpu_custom_call.1} parent=51 // pred_region
          %s5992 = smul.u32 2, %s40
          %s5994 = ssub.s32 2048, 2048
          %5995 = vsyncadd [#allocation19], %s5994
          %s5996 = smul.addr %s5992, 8
          %s5997 = smul.addr %s5996, 128
          %s5998 = scalar_lea.hbm %s9, %s5997
          %s5999 = sshll.u32 [#allocation18], 4
          %s6000 = int_to_ptr.vmem [resolvable:$true] %s5999
          %6005 = dma.vmem_to_hbm [thread:$0]  %s6000, 2048, %s5998, [#allocation19], 1024, 1024, 64
        $region100: #{tpu_custom_call.1} parent=51 // pred_fallthru
          _
        // Predicated region
        $region101: #{tpu_custom_call.1} parent=51 // pred_check
          %p6006 = pneg %p303
        $region102: #{tpu_custom_call.1} parent=51 // pred_check_branch
          %6008 = sbr.rel (%p6006) target = $region104
        $region103: #{tpu_custom_call.1} parent=51 // pred_region
          %s6009 = smul.u32 2, %s40
        $region104: #{tpu_custom_call.1} parent=51 // pred_fallthru
          _
        // Predicated region
        $region105: #{tpu_custom_call.1} parent=51 // pred_check
          %p6010 = pneg %p329
        $region106: #{tpu_custom_call.1} parent=51 // pred_check_branch
          %6012 = sbr.rel (%p6010) target = $region108
        $region107: #{tpu_custom_call.1} parent=51 // pred_region
          %s6013 = smul.u32 2, %s40
          %s6015 = ssub.s32 512, 512
          %6016 = vsyncadd [#allocation19], %s6015
          %s6017 = smul.addr %s6013, 2
          %s6018 = smul.addr %s6017, 128
          %s6019 = scalar_lea.hbm %s11, %s6018
          %s6020 = sshll.u32 [#allocation20], 4
          %s6021 = int_to_ptr.vmem [resolvable:$true] %s6020
          %6026 = dma.vmem_to_hbm [thread:$0]  %s6021, 512, %s6019, [#allocation19], 256, 256, 16
        $region108: #{tpu_custom_call.1} parent=51 // pred_fallthru
          _
        // Predicated region
        $region109: #{tpu_custom_call.1} parent=51 // pred_check
          %p6027 = pneg %p355
        $region110: #{tpu_custom_call.1} parent=51 // pred_check_branch
          %6029 = sbr.rel (%p6027) target = $region112
        $region111: #{tpu_custom_call.1} parent=51 // pred_region
          %s6030 = smul.u32 2, %s40
          %s6032 = ssub.s32 512, 512
          %6033 = vsyncadd [#allocation22], %s6032
          %s6034 = smul.addr %s6030, 2
          %s6035 = smul.addr %s6034, 128
          %s6036 = scalar_lea.hbm %s12, %s6035
          %s6037 = sshll.u32 [#allocation21], 4
          %s6038 = int_to_ptr.vmem [resolvable:$true] %s6037
          %6043 = dma.vmem_to_hbm [thread:$0]  %s6038, 512, %s6036, [#allocation22], 256, 256, 16
        $region112: #{tpu_custom_call.1} parent=51 // pred_fallthru
          _
        // Predicated region
        $region113: #{tpu_custom_call.1} parent=51 // pred_check
          %p6044 = pneg %p251
        $region114: #{tpu_custom_call.1} parent=51 // pred_check_branch
          %6046 = sbr.rel (%p6044) target = $region116
        $region115: #{tpu_custom_call.1} parent=51 // pred_region
          %6047 = dma.done [#allocation5], 1024
        $region116: #{tpu_custom_call.1} parent=51 // pred_fallthru
          _
        // Predicated region
        $region117: #{tpu_custom_call.1} parent=51 // pred_check
          %p6048 = pneg %p277
        $region118: #{tpu_custom_call.1} parent=51 // pred_check_branch
          %6050 = sbr.rel (%p6048) target = $region120
        $region119: #{tpu_custom_call.1} parent=51 // pred_region
          %6051 = dma.done [#allocation19], 2048
        $region120: #{tpu_custom_call.1} parent=51 // pred_fallthru
          _
        // Predicated region
        $region121: #{tpu_custom_call.1} parent=51 // pred_check
          %p6052 = pneg %p303
        $region122: #{tpu_custom_call.1} parent=51 // pred_check_branch
          %6054 = sbr.rel (%p6052) target = $region124
        $region123: #{tpu_custom_call.1} parent=51 // pred_region
          %s6055 = smul.u32 2, %s40
          %p6056 = scmp.lt.s32.totalorder %s6055, 1
          %s6057 = scalar_select %p6056, %s6055, 1
          %s6058 = smul.addr %s6057, 8
          %s6059 = scalar_lea.vmem %s10, %s6058
        $region124: #{tpu_custom_call.1} parent=51 // pred_fallthru
          _
        // Predicated region
        $region125: #{tpu_custom_call.1} parent=51 // pred_check
          %p6060 = pneg %p329
        $region126: #{tpu_custom_call.1} parent=51 // pred_check_branch
          %6062 = sbr.rel (%p6060) target = $region128
        $region127: #{tpu_custom_call.1} parent=51 // pred_region
          %6063 = dma.done [#allocation19], 512
        $region128: #{tpu_custom_call.1} parent=51 // pred_fallthru
          _
        // Predicated region
        $region129: #{tpu_custom_call.1} parent=51 // pred_check
          %p6064 = pneg %p355
        $region130: #{tpu_custom_call.1} parent=51 // pred_check_branch
          %6066 = sbr.rel (%p6064) target = $region132
        $region131: #{tpu_custom_call.1} parent=51 // pred_region
          %6067 = dma.done [#allocation22], 512
        $region132: #{tpu_custom_call.1} parent=51 // pred_fallthru
          _
      $region52: #{tpu_custom_call.1} parent=5 // pred_fallthru
        _
      %p6068 = scmp.le.s32.totalorder 2, %s31
      // Predicated region
      $region133: #{tpu_custom_call.1} parent=5 // pred_check
        %p6069 = pneg %p6068
      $region134: #{tpu_custom_call.1} parent=5 // pred_check_branch
        %6071 = sbr.rel (%p6069) target = $region136
      $region135: #{tpu_custom_call.1} parent=5 // pred_region
        %s6072 = ssub.s32 %s31, 2
      $region136: #{tpu_custom_call.1} parent=5 // pred_fallthru
        _
    $region6: #{tpu_custom_call.1} parent=1 // loop_footer
      %s35 = sadd.s32 1, %s31
    $region7: #{tpu_custom_call.1} parent=1 // loop_footer_branch
      %30 = sbr.rel target = $region3
    $region8: #{tpu_custom_call.1} parent=1 // loop_exit
      _
    %6073 = vsyncpa [#allocation4], 1
    %s6074 = scalar_lea.sflag [#allocation4], 1
    %6075 = vsyncpa %s6074, 1
    %6076 = vsyncpa [#allocation7], 1
    %s6077 = scalar_lea.sflag [#allocation7], 1
    %6078 = vsyncpa %s6077, 1
    %6079 = vsyncpa [#allocation10], 1
    %6080 = vsyncpa [#allocation13], 1
    %6081 = vsyncpa [#allocation16], 1
    %6082 = vsyncpa [#allocation5], 1
    %s6083 = scalar_lea.sflag [#allocation5], 1
    %6084 = vsyncpa %s6083, 1
    %6085 = vsyncpa [#allocation19], 1
    %6086 = vsyncpa [#allocation22], 1

</llo_original>
